<compile_context>
chip_gen: v6e
topology: v6e:2x2x1
jax: 0.10.0
libtpu: 0.0.40
codegen_flags: <defaults>
</compile_context>

<pallas_src>
import functools

import jax
import jax.numpy as jnp
from jax.experimental import pallas as pl
from jax.experimental.pallas import tpu as pltpu


def _round_up(v, m):
    return (v + m - 1) // m * m


def _height_schedule(seq_len):
    """Static list of activation heights through the network."""
    h = seq_len - 2                     # conv_region: valid conv, height-3 kernel
    heights = [h]
    while h > 2:
        h = (h - 2) // 2 + 1            # padding2 (bottom zero row) + MaxPool((3,1), s=2)
        heights.append(h)
    return heights


def dpcnn_kernel(x_ref, wr_ref, br_ref, wc_ref, bc_ref, wf_ref, bf_ref, o_ref,
                 a_ref, p_ref, *, tb):
    # x_ref : (S*TB, W)      h-major / batch-minor rows: row = s*TB + b  (mm dtype)
    # wr_ref: (3*W, NF)      conv_region weight, per-tap slabs (rows k*W + w)
    # br_ref: (1, NF)        f32
    # wc_ref: (3*NF, NF)     conv weight, per-tap slabs (rows k*NF + f_in)
    # bc_ref: (1, NF)        f32
    # wf_ref: (NF, NCP)      fc weight (transposed, lane-padded to NCP)
    # bf_ref: (1, NCP)       f32
    # o_ref : (TB, NCP)      f32
    # a_ref : ((H0+2)*TB, NF) scratch — zero-padded relu activations (conv input)
    # p_ref : ((H0+1)*TB, NF) scratch — pre-relu activation + padding2 guard (f32)
    NF = bc_ref.shape[-1]
    W = x_ref.shape[-1]
    S = x_ref.shape[0] // tb
    H0 = S - 2

    def mm(a, w):
        # Cast activations to the weight dtype only at the dot boundary; f32 accumulate.
        return jnp.dot(a.astype(w.dtype), w, preferred_element_type=jnp.float32)

    def rows(i, n=1):
        # Static, tile-aligned row-block slice [i*tb, (i+n)*tb).
        return pl.ds(i * tb, n * tb)

    z_a = jnp.zeros((tb, NF), a_ref.dtype)
    z_p = jnp.zeros((tb, NF), jnp.float32)

    # Hoisted conv-bias broadcast: the repeat block is unrolled at trace time and
    # JAX does not CSE broadcast_in_dim, so broadcast once and slice per level.
    bc_full = jnp.broadcast_to(bc_ref[...], (H0 * tb, NF))

    def conv3(H):
        # Conv2d(NF, NF, (3,1)) over padding1(relu(x)) staged in a_ref:
        # rows [0,tb) and [(H+1)*tb,(H+2)*tb) are zero, interior holds relu(x).
        acc = bc_full[: H * tb]
        for k in range(3):
            acc = acc + mm(a_ref[rows(k, H), :], wc_ref[pl.ds(k * NF, NF), :])
        return acc

    def stage_relu(t, H):
        a_ref[rows(1, H), :] = jnp.maximum(t, 0.0).astype(a_ref.dtype)

    # ---- conv_region: Conv2d(1, NF, (3, W)), height S -> H0 = S - 2 ----
    t = mm(x_ref[rows(0, H0), :], wr_ref[pl.ds(0, W), :])
    t = t + mm(x_ref[rows(1, H0), :], wr_ref[pl.ds(W, W), :])
    t = t + mm(x_ref[rows(2, H0), :], wr_ref[pl.ds(2 * W, W), :])
    t = t + br_ref[...]

    # Zero guard row-blocks for padding1 at height H0 (top guard stays zero forever).
    a_ref[rows(0), :] = z_a
    a_ref[rows(H0 + 1), :] = z_a

    # padding1 -> relu -> conv, twice
    stage_relu(t, H0)
    t = conv3(H0)
    stage_relu(t, H0)
    t = conv3(H0)

    # ---- repeat block while height > 2 (heights are static -> unrolled) ----
    H = H0
    if H > 2:
        p_ref[rows(0, H0), :] = t            # cur (pre-relu)
        p_ref[rows(H0), :] = z_p             # padding2 guard
    while H > 2:
        Hp = (H - 2) // 2 + 1
        # MaxPool2d((3,1), stride=2): pooled block i = max of cur blocks 2i,2i+1,2i+2.
        # Written in place into p_ref (block i is never read after step i) and,
        # relu'd, straight into the conv pad buffer — no concatenates, no temps.
        for i in range(Hp):
            m = jnp.maximum(jnp.maximum(p_ref[rows(2 * i), :],
                                        p_ref[rows(2 * i + 1), :]),
                            p_ref[rows(2 * i + 2), :])
            p_ref[rows(i), :] = m
            a_ref[rows(i + 1), :] = jnp.maximum(m, 0.0).astype(a_ref.dtype)
        a_ref[rows(Hp + 1), :] = z_a         # fresh bottom guard for this height
        t = conv3(Hp)
        stage_relu(t, Hp)
        t = conv3(Hp) + p_ref[rows(0, Hp), :]   # second conv + residual (px)
        if Hp > 2:
            p_ref[rows(0, Hp), :] = t
            p_ref[rows(Hp), :] = z_p         # padding2 guard for the next pool
        H = Hp

    # H == 1 here (checked in the wrapper): lane-dense fc store (NC padded to 128).
    o_ref[...] = mm(t, wf_ref[...]) + bf_ref[...]


def dpcnn_forward(x, W_region, b_region, W_conv, b_conv, W_fc, b_fc,
                  *, batch_tile=None, use_bf16=True):
    """x: (B, S, W); weights in PyTorch Conv2d/Linear layouts."""
    B, S, W = x.shape
    NF = W_region.shape[0]
    NC = W_fc.shape[0]

    heights = _height_schedule(S)
    if heights[-1] != 1:
        # The PyTorch model's squeeze()+fc requires the repeat loop to end at height 1.
        raise ValueError(f"seq_len={S} does not reduce to height 1 (got {heights[-1]})")

    mm_dtype = jnp.bfloat16 if use_bf16 else jnp.float32
    sub = 16 if use_bf16 else 8          # sublane tile rows for the matmul-input dtype

    # --- batch tiling: tiles are a multiple of the sublane tile so every
    #     height-shifted row-block slice in the kernel is aligned. ---
    if batch_tile is None:
        try:
            kind = jax.devices()[0].device_kind.lower()
        except Exception:  # pragma: no cover
            kind = ""
        two_tc = ("v7" in kind) or ("7x" in kind)      # 2 TensorCores per chip
        bq = _round_up(B, sub)
        if two_tc and bq >= 2 * sub:
            batch_tile = min(_round_up(pl.cdiv(bq, 2), sub), 128)   # >= 2 grid steps
        else:
            batch_tile = min(bq, 128)                               # one big tile
    tb = _round_up(max(int(batch_tile), 1), sub)
    nt = pl.cdiv(B, tb)
    Bp = nt * tb

    H0 = S - 2
    NCP = _round_up(max(NC, 1), 128)     # lane-dense fc output

    # Weight layout transforms (done once, outside the kernel): per-tap slabs.
    wr = jnp.transpose(W_region[:, 0], (1, 2, 0)).reshape(3 * W, NF).astype(mm_dtype)
    wc = jnp.transpose(W_conv[:, :, :, 0], (2, 1, 0)).reshape(3 * NF, NF).astype(mm_dtype)
    wf = jnp.pad(W_fc.T.astype(mm_dtype), ((0, 0), (0, NCP - NC)))
    br = b_region.reshape(1, NF).astype(jnp.float32)
    bc = b_conv.reshape(1, NF).astype(jnp.float32)
    bf = jnp.pad(b_fc.reshape(1, NC).astype(jnp.float32), ((0, 0), (0, NCP - NC)))

    # Batch pad + h-major/batch-minor row layout (row = s*tb + b_within_tile).
    # In production this relayout should be fused into the upstream producer to
    # avoid the extra HBM pass; here it is a single XLA pad+transpose.
    xk = x.astype(mm_dtype)
    if Bp != B:
        xk = jnp.pad(xk, ((0, Bp - B), (0, 0), (0, 0)))
    xt = xk.reshape(nt, tb, S, W).transpose(0, 2, 1, 3).reshape(nt, S * tb, W)

    kernel = functools.partial(dpcnn_kernel, tb=tb)

    out = pl.pallas_call(
        kernel,
        out_shape=jax.ShapeDtypeStruct((nt, tb, NCP), jnp.float32),
        grid=(nt,),
        in_specs=[
            pl.BlockSpec((None, S * tb, W), lambda i: (i, 0, 0)),   # per-tile input slab
            pl.BlockSpec((3 * W, NF), lambda i: (0, 0)),            # weights: constant index
            pl.BlockSpec((1, NF), lambda i: (0, 0)),                #   maps -> stay resident
            pl.BlockSpec((3 * NF, NF), lambda i: (0, 0)),
            pl.BlockSpec((1, NF), lambda i: (0, 0)),
            pl.BlockSpec((NF, NCP), lambda i: (0, 0)),
            pl.BlockSpec((1, NCP), lambda i: (0, 0)),
        ],
        out_specs=pl.BlockSpec((None, tb, NCP), lambda i: (i, 0, 0)),
        scratch_shapes=[
            pltpu.VMEM(((H0 + 2) * tb, NF), mm_dtype),     # padded relu activations
            pltpu.VMEM(((H0 + 1) * tb, NF), jnp.float32),  # pre-relu act + padding2 guard
        ],
        compiler_params=pltpu.CompilerParams(dimension_semantics=("parallel",)),
    )(xt, wr, br, wc, bc, wf, bf)

    return out[:, :, :NC].reshape(Bp, NC)[:B]


def ref_forward(x, W_region, b_region, W_conv, b_conv, W_fc, b_fc):
    """Pure-JAX f32 reference mirroring the PyTorch forward semantics."""
    B, S, W = x.shape
    wr = jnp.transpose(W_region[:, 0], (1, 2, 0))        # (3, W, NF)
    wc = jnp.transpose(W_conv[:, :, :, 0], (2, 1, 0))    # (3, NF_in, NF_out)
    H0 = S - 2

    def conv3(t):
        Hc = t.shape[1]
        tp = jnp.pad(t, ((0, 0), (1, 1), (0, 0)))
        return sum(jnp.einsum('bhf,fg->bhg', tp[:, k:k + Hc], wc[k])
                   for k in range(3)) + b_conv

    h = sum(jnp.einsum('bhw,wf->bhf', x[:, k:k + H0], wr[k]) for k in range(3)) + b_region
    t = conv3(jax.nn.relu(h))
    t = conv3(jax.nn.relu(t))
    while t.shape[1] > 2:
        Hc = t.shape[1]
        Hp = (Hc - 2) // 2 + 1
        tp = jnp.pad(t, ((0, 0), (0, 1), (0, 0)))
        px = jnp.stack([jnp.max(tp[:, 2 * i:2 * i + 3], axis=1) for i in range(Hp)], axis=1)
        u = conv3(jax.nn.relu(px))
        u = conv3(jax.nn.relu(u))
        t = u + px
    return t[:, 0, :] @ W_fc.T + b_fc


if __name__ == "__main__":
    # config: width (embedding dim) = 16, num_filters = 32, num_classes = 4,
    # batch = 2, seq_len = 8 (the repeat loop ends at height 1, as the fc requires)
    B, S, W, NF, NC = 2, 8, 16, 32, 4
    key = jax.random.PRNGKey(0)
    ks = jax.random.split(key, 7)

    x = jax.random.normal(ks[0], (B, S, W), dtype=jnp.float32)

    # deterministic synthetic parameters in PyTorch shapes
    W_region = 0.1 * jax.random.normal(ks[1], (NF, 1, 3, W), dtype=jnp.float32)
    b_region = 0.1 * jax.random.normal(ks[2], (NF,), dtype=jnp.float32)
    W_conv = 0.1 * jax.random.normal(ks[3], (NF, NF, 3, 1), dtype=jnp.float32)
    b_conv = 0.1 * jax.random.normal(ks[4], (NF,), dtype=jnp.float32)
    W_fc = 0.1 * jax.random.normal(ks[5], (NC, NF), dtype=jnp.float32)
    b_fc = 0.1 * jax.random.normal(ks[6], (NC,), dtype=jnp.float32)

    out = dpcnn_forward(x, W_region, b_region, W_conv, b_conv, W_fc, b_fc)
    out = jax.block_until_ready(out)

    ref = ref_forward(x, W_region, b_region, W_conv, b_conv, W_fc, b_fc)
    assert out.shape == (B, NC), out.shape
    assert bool(jnp.all(jnp.isfinite(out)))
    # bf16 matmul inputs (native MXU path) -> loosened tolerance vs the f32 reference
    assert bool(jnp.allclose(out, ref, atol=5e-2, rtol=5e-2)), (out, ref)
    print("KERNEL_OK")
</pallas_src>

<mosaic_0001>
module attributes {stable_mosaic.version = 11 : i64} {
  func.func @dpcnn_kernel(%arg0: i32, %arg1: memref<1x128x16xbf16, #tpu.memory_space<vmem>>, %arg2: memref<48x32xbf16, #tpu.memory_space<vmem>>, %arg3: memref<1x32xf32, #tpu.memory_space<vmem>>, %arg4: memref<96x32xbf16, #tpu.memory_space<vmem>>, %arg5: memref<1x32xf32, #tpu.memory_space<vmem>>, %arg6: memref<32x128xbf16, #tpu.memory_space<vmem>>, %arg7: memref<1x128xf32, #tpu.memory_space<vmem>>, %arg8: memref<1x16x128xf32, #tpu.memory_space<vmem>>, %arg9: memref<128x32xbf16, #tpu.memory_space<vmem>>, %arg10: memref<112x32xf32, #tpu.memory_space<vmem>>) attributes {dimension_semantics = [#tpu.dimension_semantics<parallel>], iteration_bounds = array<i64: 1>, scalar_prefetch = 0 : i64, scratch_operands = 2 : i64, tpu.core_type = #tpu.core_type<tc>, window_params = [{transform_indices = @transform_0, window_bounds = array<i64: 1, 128, 16>}, {pipeline_mode = #tpu.pipeline_mode<synchronous>, transform_indices = @transform_1, window_bounds = array<i64: 48, 32>}, {pipeline_mode = #tpu.pipeline_mode<synchronous>, transform_indices = @transform_2, window_bounds = array<i64: 1, 32>}, {pipeline_mode = #tpu.pipeline_mode<synchronous>, transform_indices = @transform_3, window_bounds = array<i64: 96, 32>}, {pipeline_mode = #tpu.pipeline_mode<synchronous>, transform_indices = @transform_4, window_bounds = array<i64: 1, 32>}, {pipeline_mode = #tpu.pipeline_mode<synchronous>, transform_indices = @transform_5, window_bounds = array<i64: 32, 128>}, {pipeline_mode = #tpu.pipeline_mode<synchronous>, transform_indices = @transform_6, window_bounds = array<i64: 1, 128>}, {transform_indices = @transform_7, window_bounds = array<i64: 1, 16, 128>}]} {
    %cst = arith.constant 0.000000e+00 : bf16
    %0 = vector.broadcast %cst : bf16 to vector<16x32xbf16>
    %cst_0 = arith.constant 0.000000e+00 : f32
    %1 = vector.broadcast %cst_0 : f32 to vector<16x32xf32>
    %c0 = arith.constant 0 : index
    %c0_1 = arith.constant 0 : index
    %2 = vector.load %arg5[%c0, %c0_1] : memref<1x32xf32, #tpu.memory_space<vmem>>, vector<1x32xf32>
    %3 = vector.shape_cast %2 : vector<1x32xf32> to vector<1x32xf32>
    %4 = vector.broadcast %3 : vector<1x32xf32> to vector<96x32xf32>
    %c0_2 = arith.constant 0 : index
    %c0_3 = arith.constant 0 : index
    %c0_4 = arith.constant 0 : index
    %5 = vector.load %arg1[%c0_2, %c0_3, %c0_4] : memref<1x128x16xbf16, #tpu.memory_space<vmem>>, vector<1x96x16xbf16>
    %6 = vector.shape_cast %5 : vector<1x96x16xbf16> to vector<96x16xbf16>
    %c0_5 = arith.constant 0 : index
    %c0_6 = arith.constant 0 : index
    %7 = vector.load %arg2[%c0_5, %c0_6] : memref<48x32xbf16, #tpu.memory_space<vmem>>, vector<16x32xbf16>
    %cst_7 = arith.constant dense<0.000000e+00> : vector<96x32xf32>
    %8 = tpu.matmul %6, %7, %cst_7 {dimension_numbers = #tpu.dot_dimension_numbers<[1], [0], [0], [1], [0, 0, 1, 1], [], []>} : vector<96x16xbf16>, vector<16x32xbf16>, vector<96x32xf32> -> vector<96x32xf32>
    %c0_8 = arith.constant 0 : index
    %c16 = arith.constant 16 : index
    %c0_9 = arith.constant 0 : index
    %9 = vector.load %arg1[%c0_8, %c16, %c0_9] : memref<1x128x16xbf16, #tpu.memory_space<vmem>>, vector<1x96x16xbf16>
    %10 = vector.shape_cast %9 : vector<1x96x16xbf16> to vector<96x16xbf16>
    %c16_10 = arith.constant 16 : index
    %c0_11 = arith.constant 0 : index
    %11 = vector.load %arg2[%c16_10, %c0_11] : memref<48x32xbf16, #tpu.memory_space<vmem>>, vector<16x32xbf16>
    %cst_12 = arith.constant dense<0.000000e+00> : vector<96x32xf32>
    %12 = tpu.matmul %10, %11, %cst_12 {dimension_numbers = #tpu.dot_dimension_numbers<[1], [0], [0], [1], [0, 0, 1, 1], [], []>} : vector<96x16xbf16>, vector<16x32xbf16>, vector<96x32xf32> -> vector<96x32xf32>
    %13 = arith.addf %8, %12 : vector<96x32xf32>
    %c0_13 = arith.constant 0 : index
    %c32 = arith.constant 32 : index
    %c0_14 = arith.constant 0 : index
    %14 = vector.load %arg1[%c0_13, %c32, %c0_14] : memref<1x128x16xbf16, #tpu.memory_space<vmem>>, vector<1x96x16xbf16>
    %15 = vector.shape_cast %14 : vector<1x96x16xbf16> to vector<96x16xbf16>
    %c32_15 = arith.constant 32 : index
    %c0_16 = arith.constant 0 : index
    %16 = vector.load %arg2[%c32_15, %c0_16] : memref<48x32xbf16, #tpu.memory_space<vmem>>, vector<16x32xbf16>
    %cst_17 = arith.constant dense<0.000000e+00> : vector<96x32xf32>
    %17 = tpu.matmul %15, %16, %cst_17 {dimension_numbers = #tpu.dot_dimension_numbers<[1], [0], [0], [1], [0, 0, 1, 1], [], []>} : vector<96x16xbf16>, vector<16x32xbf16>, vector<96x32xf32> -> vector<96x32xf32>
    %18 = arith.addf %13, %17 : vector<96x32xf32>
    %c0_18 = arith.constant 0 : index
    %c0_19 = arith.constant 0 : index
    %19 = vector.load %arg3[%c0_18, %c0_19] : memref<1x32xf32, #tpu.memory_space<vmem>>, vector<1x32xf32>
    %20 = vector.broadcast %19 : vector<1x32xf32> to vector<96x32xf32>
    %21 = arith.addf %18, %20 : vector<96x32xf32>
    %c0_20 = arith.constant 0 : index
    %c0_21 = arith.constant 0 : index
    %22 = vector.load %arg9[%c0_20, %c0_21] : memref<128x32xbf16, #tpu.memory_space<vmem>>, vector<16x32xbf16>
    tpu.vector_store %arg9[%c0_20, %c0_21], %0 {strides = array<i32>} : memref<128x32xbf16, #tpu.memory_space<vmem>>, vector<16x32xbf16>,
    %c112 = arith.constant 112 : index
    %c0_22 = arith.constant 0 : index
    %23 = vector.load %arg9[%c112, %c0_22] : memref<128x32xbf16, #tpu.memory_space<vmem>>, vector<16x32xbf16>
    tpu.vector_store %arg9[%c112, %c0_22], %0 {strides = array<i32>} : memref<128x32xbf16, #tpu.memory_space<vmem>>, vector<16x32xbf16>,
    %cst_23 = arith.constant 0.000000e+00 : f32
    %24 = vector.broadcast %cst_23 : f32 to vector<96x32xf32>
    %25 = arith.maximumf %21, %24 : vector<96x32xf32>
    %26 = arith.truncf %25 : vector<96x32xf32> to vector<96x32xbf16>
    %c16_24 = arith.constant 16 : index
    %c0_25 = arith.constant 0 : index
    %27 = vector.load %arg9[%c16_24, %c0_25] : memref<128x32xbf16, #tpu.memory_space<vmem>>, vector<96x32xbf16>
    tpu.vector_store %arg9[%c16_24, %c0_25], %26 {strides = array<i32>} : memref<128x32xbf16, #tpu.memory_space<vmem>>, vector<96x32xbf16>,
    %c0_26 = arith.constant 0 : index
    %c0_27 = arith.constant 0 : index
    %28 = vector.load %arg9[%c0_26, %c0_27] : memref<128x32xbf16, #tpu.memory_space<vmem>>, vector<96x32xbf16>
    %c0_28 = arith.constant 0 : index
    %c0_29 = arith.constant 0 : index
    %29 = vector.load %arg4[%c0_28, %c0_29] : memref<96x32xbf16, #tpu.memory_space<vmem>>, vector<32x32xbf16>
    %cst_30 = arith.constant dense<0.000000e+00> : vector<96x32xf32>
    %30 = tpu.matmul %28, %29, %cst_30 {dimension_numbers = #tpu.dot_dimension_numbers<[1], [0], [0], [1], [0, 0, 1, 1], [], []>} : vector<96x32xbf16>, vector<32x32xbf16>, vector<96x32xf32> -> vector<96x32xf32>
    %31 = arith.addf %4, %30 : vector<96x32xf32>
    %c16_31 = arith.constant 16 : index
    %c0_32 = arith.constant 0 : index
    %32 = vector.load %arg9[%c16_31, %c0_32] : memref<128x32xbf16, #tpu.memory_space<vmem>>, vector<96x32xbf16>
    %c32_33 = arith.constant 32 : index
    %c0_34 = arith.constant 0 : index
    %33 = vector.load %arg4[%c32_33, %c0_34] : memref<96x32xbf16, #tpu.memory_space<vmem>>, vector<32x32xbf16>
    %cst_35 = arith.constant dense<0.000000e+00> : vector<96x32xf32>
    %34 = tpu.matmul %32, %33, %cst_35 {dimension_numbers = #tpu.dot_dimension_numbers<[1], [0], [0], [1], [0, 0, 1, 1], [], []>} : vector<96x32xbf16>, vector<32x32xbf16>, vector<96x32xf32> -> vector<96x32xf32>
    %35 = arith.addf %31, %34 : vector<96x32xf32>
    %c32_36 = arith.constant 32 : index
    %c0_37 = arith.constant 0 : index
    %36 = vector.load %arg9[%c32_36, %c0_37] : memref<128x32xbf16, #tpu.memory_space<vmem>>, vector<96x32xbf16>
    %c64 = arith.constant 64 : index
    %c0_38 = arith.constant 0 : index
    %37 = vector.load %arg4[%c64, %c0_38] : memref<96x32xbf16, #tpu.memory_space<vmem>>, vector<32x32xbf16>
    %cst_39 = arith.constant dense<0.000000e+00> : vector<96x32xf32>
    %38 = tpu.matmul %36, %37, %cst_39 {dimension_numbers = #tpu.dot_dimension_numbers<[1], [0], [0], [1], [0, 0, 1, 1], [], []>} : vector<96x32xbf16>, vector<32x32xbf16>, vector<96x32xf32> -> vector<96x32xf32>
    %39 = arith.addf %35, %38 : vector<96x32xf32>
    %cst_40 = arith.constant 0.000000e+00 : f32
    %40 = vector.broadcast %cst_40 : f32 to vector<96x32xf32>
    %41 = arith.maximumf %39, %40 : vector<96x32xf32>
    %42 = arith.truncf %41 : vector<96x32xf32> to vector<96x32xbf16>
    %c16_41 = arith.constant 16 : index
    %c0_42 = arith.constant 0 : index
    %43 = vector.load %arg9[%c16_41, %c0_42] : memref<128x32xbf16, #tpu.memory_space<vmem>>, vector<96x32xbf16>
    tpu.vector_store %arg9[%c16_41, %c0_42], %42 {strides = array<i32>} : memref<128x32xbf16, #tpu.memory_space<vmem>>, vector<96x32xbf16>,
    %c0_43 = arith.constant 0 : index
    %c0_44 = arith.constant 0 : index
    %44 = vector.load %arg9[%c0_43, %c0_44] : memref<128x32xbf16, #tpu.memory_space<vmem>>, vector<96x32xbf16>
    %c0_45 = arith.constant 0 : index
    %c0_46 = arith.constant 0 : index
    %45 = vector.load %arg4[%c0_45, %c0_46] : memref<96x32xbf16, #tpu.memory_space<vmem>>, vector<32x32xbf16>
    %cst_47 = arith.constant dense<0.000000e+00> : vector<96x32xf32>
    %46 = tpu.matmul %44, %45, %cst_47 {dimension_numbers = #tpu.dot_dimension_numbers<[1], [0], [0], [1], [0, 0, 1, 1], [], []>} : vector<96x32xbf16>, vector<32x32xbf16>, vector<96x32xf32> -> vector<96x32xf32>
    %47 = arith.addf %4, %46 : vector<96x32xf32>
    %c16_48 = arith.constant 16 : index
    %c0_49 = arith.constant 0 : index
    %48 = vector.load %arg9[%c16_48, %c0_49] : memref<128x32xbf16, #tpu.memory_space<vmem>>, vector<96x32xbf16>
    %c32_50 = arith.constant 32 : index
    %c0_51 = arith.constant 0 : index
    %49 = vector.load %arg4[%c32_50, %c0_51] : memref<96x32xbf16, #tpu.memory_space<vmem>>, vector<32x32xbf16>
    %cst_52 = arith.constant dense<0.000000e+00> : vector<96x32xf32>
    %50 = tpu.matmul %48, %49, %cst_52 {dimension_numbers = #tpu.dot_dimension_numbers<[1], [0], [0], [1], [0, 0, 1, 1], [], []>} : vector<96x32xbf16>, vector<32x32xbf16>, vector<96x32xf32> -> vector<96x32xf32>
    %51 = arith.addf %47, %50 : vector<96x32xf32>
    %c32_53 = arith.constant 32 : index
    %c0_54 = arith.constant 0 : index
    %52 = vector.load %arg9[%c32_53, %c0_54] : memref<128x32xbf16, #tpu.memory_space<vmem>>, vector<96x32xbf16>
    %c64_55 = arith.constant 64 : index
    %c0_56 = arith.constant 0 : index
    %53 = vector.load %arg4[%c64_55, %c0_56] : memref<96x32xbf16, #tpu.memory_space<vmem>>, vector<32x32xbf16>
    %cst_57 = arith.constant dense<0.000000e+00> : vector<96x32xf32>
    %54 = tpu.matmul %52, %53, %cst_57 {dimension_numbers = #tpu.dot_dimension_numbers<[1], [0], [0], [1], [0, 0, 1, 1], [], []>} : vector<96x32xbf16>, vector<32x32xbf16>, vector<96x32xf32> -> vector<96x32xf32>
    %55 = arith.addf %51, %54 : vector<96x32xf32>
    %c0_58 = arith.constant 0 : index
    %c0_59 = arith.constant 0 : index
    %56 = vector.load %arg10[%c0_58, %c0_59] : memref<112x32xf32, #tpu.memory_space<vmem>>, vector<96x32xf32>
    tpu.vector_store %arg10[%c0_58, %c0_59], %55 {strides = array<i32>} : memref<112x32xf32, #tpu.memory_space<vmem>>, vector<96x32xf32>,
    %c96 = arith.constant 96 : index
    %c0_60 = arith.constant 0 : index
    %57 = vector.load %arg10[%c96, %c0_60] : memref<112x32xf32, #tpu.memory_space<vmem>>, vector<16x32xf32>
    tpu.vector_store %arg10[%c96, %c0_60], %1 {strides = array<i32>} : memref<112x32xf32, #tpu.memory_space<vmem>>, vector<16x32xf32>,
    %c0_61 = arith.constant 0 : index
    %c0_62 = arith.constant 0 : index
    %58 = vector.load %arg10[%c0_61, %c0_62] : memref<112x32xf32, #tpu.memory_space<vmem>>, vector<16x32xf32>
    %c16_63 = arith.constant 16 : index
    %c0_64 = arith.constant 0 : index
    %59 = vector.load %arg10[%c16_63, %c0_64] : memref<112x32xf32, #tpu.memory_space<vmem>>, vector<16x32xf32>
    %60 = arith.maximumf %58, %59 : vector<16x32xf32>
    %c32_65 = arith.constant 32 : index
    %c0_66 = arith.constant 0 : index
    %61 = vector.load %arg10[%c32_65, %c0_66] : memref<112x32xf32, #tpu.memory_space<vmem>>, vector<16x32xf32>
    %62 = arith.maximumf %60, %61 : vector<16x32xf32>
    %c0_67 = arith.constant 0 : index
    %c0_68 = arith.constant 0 : index
    %63 = vector.load %arg10[%c0_67, %c0_68] : memref<112x32xf32, #tpu.memory_space<vmem>>, vector<16x32xf32>
    tpu.vector_store %arg10[%c0_67, %c0_68], %62 {strides = array<i32>} : memref<112x32xf32, #tpu.memory_space<vmem>>, vector<16x32xf32>,
    %cst_69 = arith.constant 0.000000e+00 : f32
    %64 = vector.broadcast %cst_69 : f32 to vector<16x32xf32>
    %65 = arith.maximumf %62, %64 : vector<16x32xf32>
    %66 = arith.truncf %65 : vector<16x32xf32> to vector<16x32xbf16>
    %c16_70 = arith.constant 16 : index
    %c0_71 = arith.constant 0 : index
    %67 = vector.load %arg9[%c16_70, %c0_71] : memref<128x32xbf16, #tpu.memory_space<vmem>>, vector<16x32xbf16>
    tpu.vector_store %arg9[%c16_70, %c0_71], %66 {strides = array<i32>} : memref<128x32xbf16, #tpu.memory_space<vmem>>, vector<16x32xbf16>,
    %c32_72 = arith.constant 32 : index
    %c0_73 = arith.constant 0 : index
    %68 = vector.load %arg10[%c32_72, %c0_73] : memref<112x32xf32, #tpu.memory_space<vmem>>, vector<16x32xf32>
    %c48 = arith.constant 48 : index
    %c0_74 = arith.constant 0 : index
    %69 = vector.load %arg10[%c48, %c0_74] : memref<112x32xf32, #tpu.memory_space<vmem>>, vector<16x32xf32>
    %70 = arith.maximumf %68, %69 : vector<16x32xf32>
    %c64_75 = arith.constant 64 : index
    %c0_76 = arith.constant 0 : index
    %71 = vector.load %arg10[%c64_75, %c0_76] : memref<112x32xf32, #tpu.memory_space<vmem>>, vector<16x32xf32>
    %72 = arith.maximumf %70, %71 : vector<16x32xf32>
    %c16_77 = arith.constant 16 : index
    %c0_78 = arith.constant 0 : index
    %73 = vector.load %arg10[%c16_77, %c0_78] : memref<112x32xf32, #tpu.memory_space<vmem>>, vector<16x32xf32>
    tpu.vector_store %arg10[%c16_77, %c0_78], %72 {strides = array<i32>} : memref<112x32xf32, #tpu.memory_space<vmem>>, vector<16x32xf32>,
    %cst_79 = arith.constant 0.000000e+00 : f32
    %74 = vector.broadcast %cst_79 : f32 to vector<16x32xf32>
    %75 = arith.maximumf %72, %74 : vector<16x32xf32>
    %76 = arith.truncf %75 : vector<16x32xf32> to vector<16x32xbf16>
    %c32_80 = arith.constant 32 : index
    %c0_81 = arith.constant 0 : index
    %77 = vector.load %arg9[%c32_80, %c0_81] : memref<128x32xbf16, #tpu.memory_space<vmem>>, vector<16x32xbf16>
    tpu.vector_store %arg9[%c32_80, %c0_81], %76 {strides = array<i32>} : memref<128x32xbf16, #tpu.memory_space<vmem>>, vector<16x32xbf16>,
    %c64_82 = arith.constant 64 : index
    %c0_83 = arith.constant 0 : index
    %78 = vector.load %arg10[%c64_82, %c0_83] : memref<112x32xf32, #tpu.memory_space<vmem>>, vector<16x32xf32>
    %c80 = arith.constant 80 : index
    %c0_84 = arith.constant 0 : index
    %79 = vector.load %arg10[%c80, %c0_84] : memref<112x32xf32, #tpu.memory_space<vmem>>, vector<16x32xf32>
    %80 = arith.maximumf %78, %79 : vector<16x32xf32>
    %c96_85 = arith.constant 96 : index
    %c0_86 = arith.constant 0 : index
    %81 = vector.load %arg10[%c96_85, %c0_86] : memref<112x32xf32, #tpu.memory_space<vmem>>, vector<16x32xf32>
    %82 = arith.maximumf %80, %81 : vector<16x32xf32>
    %c32_87 = arith.constant 32 : index
    %c0_88 = arith.constant 0 : index
    %83 = vector.load %arg10[%c32_87, %c0_88] : memref<112x32xf32, #tpu.memory_space<vmem>>, vector<16x32xf32>
    tpu.vector_store %arg10[%c32_87, %c0_88], %82 {strides = array<i32>} : memref<112x32xf32, #tpu.memory_space<vmem>>, vector<16x32xf32>,
    %cst_89 = arith.constant 0.000000e+00 : f32
    %84 = vector.broadcast %cst_89 : f32 to vector<16x32xf32>
    %85 = arith.maximumf %82, %84 : vector<16x32xf32>
    %86 = arith.truncf %85 : vector<16x32xf32> to vector<16x32xbf16>
    %c48_90 = arith.constant 48 : index
    %c0_91 = arith.constant 0 : index
    %87 = vector.load %arg9[%c48_90, %c0_91] : memref<128x32xbf16, #tpu.memory_space<vmem>>, vector<16x32xbf16>
    tpu.vector_store %arg9[%c48_90, %c0_91], %86 {strides = array<i32>} : memref<128x32xbf16, #tpu.memory_space<vmem>>, vector<16x32xbf16>,
    %c64_92 = arith.constant 64 : index
    %c0_93 = arith.constant 0 : index
    %88 = vector.load %arg9[%c64_92, %c0_93] : memref<128x32xbf16, #tpu.memory_space<vmem>>, vector<16x32xbf16>
    tpu.vector_store %arg9[%c64_92, %c0_93], %0 {strides = array<i32>} : memref<128x32xbf16, #tpu.memory_space<vmem>>, vector<16x32xbf16>,
    %89 = vector.extract_strided_slice %4 {offsets = [0, 0], sizes = [48, 32], strides = [1, 1]} : vector<96x32xf32> to vector<48x32xf32>
    %c0_94 = arith.constant 0 : index
    %c0_95 = arith.constant 0 : index
    %90 = vector.load %arg9[%c0_94, %c0_95] : memref<128x32xbf16, #tpu.memory_space<vmem>>, vector<48x32xbf16>
    %c0_96 = arith.constant 0 : index
    %c0_97 = arith.constant 0 : index
    %91 = vector.load %arg4[%c0_96, %c0_97] : memref<96x32xbf16, #tpu.memory_space<vmem>>, vector<32x32xbf16>
    %cst_98 = arith.constant dense<0.000000e+00> : vector<48x32xf32>
    %92 = tpu.matmul %90, %91, %cst_98 {dimension_numbers = #tpu.dot_dimension_numbers<[1], [0], [0], [1], [0, 0, 1, 1], [], []>} : vector<48x32xbf16>, vector<32x32xbf16>, vector<48x32xf32> -> vector<48x32xf32>
    %93 = arith.addf %89, %92 : vector<48x32xf32>
    %c16_99 = arith.constant 16 : index
    %c0_100 = arith.constant 0 : index
    %94 = vector.load %arg9[%c16_99, %c0_100] : memref<128x32xbf16, #tpu.memory_space<vmem>>, vector<48x32xbf16>
    %c32_101 = arith.constant 32 : index
    %c0_102 = arith.constant 0 : index
    %95 = vector.load %arg4[%c32_101, %c0_102] : memref<96x32xbf16, #tpu.memory_space<vmem>>, vector<32x32xbf16>
    %cst_103 = arith.constant dense<0.000000e+00> : vector<48x32xf32>
    %96 = tpu.matmul %94, %95, %cst_103 {dimension_numbers = #tpu.dot_dimension_numbers<[1], [0], [0], [1], [0, 0, 1, 1], [], []>} : vector<48x32xbf16>, vector<32x32xbf16>, vector<48x32xf32> -> vector<48x32xf32>
    %97 = arith.addf %93, %96 : vector<48x32xf32>
    %c32_104 = arith.constant 32 : index
    %c0_105 = arith.constant 0 : index
    %98 = vector.load %arg9[%c32_104, %c0_105] : memref<128x32xbf16, #tpu.memory_space<vmem>>, vector<48x32xbf16>
    %c64_106 = arith.constant 64 : index
    %c0_107 = arith.constant 0 : index
    %99 = vector.load %arg4[%c64_106, %c0_107] : memref<96x32xbf16, #tpu.memory_space<vmem>>, vector<32x32xbf16>
    %cst_108 = arith.constant dense<0.000000e+00> : vector<48x32xf32>
    %100 = tpu.matmul %98, %99, %cst_108 {dimension_numbers = #tpu.dot_dimension_numbers<[1], [0], [0], [1], [0, 0, 1, 1], [], []>} : vector<48x32xbf16>, vector<32x32xbf16>, vector<48x32xf32> -> vector<48x32xf32>
    %101 = arith.addf %97, %100 : vector<48x32xf32>
    %cst_109 = arith.constant 0.000000e+00 : f32
    %102 = vector.broadcast %cst_109 : f32 to vector<48x32xf32>
    %103 = arith.maximumf %101, %102 : vector<48x32xf32>
    %104 = arith.truncf %103 : vector<48x32xf32> to vector<48x32xbf16>
    %c16_110 = arith.constant 16 : index
    %c0_111 = arith.constant 0 : index
    %105 = vector.load %arg9[%c16_110, %c0_111] : memref<128x32xbf16, #tpu.memory_space<vmem>>, vector<48x32xbf16>
    tpu.vector_store %arg9[%c16_110, %c0_111], %104 {strides = array<i32>} : memref<128x32xbf16, #tpu.memory_space<vmem>>, vector<48x32xbf16>,
    %106 = vector.extract_strided_slice %4 {offsets = [0, 0], sizes = [48, 32], strides = [1, 1]} : vector<96x32xf32> to vector<48x32xf32>
    %c0_112 = arith.constant 0 : index
    %c0_113 = arith.constant 0 : index
    %107 = vector.load %arg9[%c0_112, %c0_113] : memref<128x32xbf16, #tpu.memory_space<vmem>>, vector<48x32xbf16>
    %c0_114 = arith.constant 0 : index
    %c0_115 = arith.constant 0 : index
    %108 = vector.load %arg4[%c0_114, %c0_115] : memref<96x32xbf16, #tpu.memory_space<vmem>>, vector<32x32xbf16>
    %cst_116 = arith.constant dense<0.000000e+00> : vector<48x32xf32>
    %109 = tpu.matmul %107, %108, %cst_116 {dimension_numbers = #tpu.dot_dimension_numbers<[1], [0], [0], [1], [0, 0, 1, 1], [], []>} : vector<48x32xbf16>, vector<32x32xbf16>, vector<48x32xf32> -> vector<48x32xf32>
    %110 = arith.addf %106, %109 : vector<48x32xf32>
    %c16_117 = arith.constant 16 : index
    %c0_118 = arith.constant 0 : index
    %111 = vector.load %arg9[%c16_117, %c0_118] : memref<128x32xbf16, #tpu.memory_space<vmem>>, vector<48x32xbf16>
    %c32_119 = arith.constant 32 : index
    %c0_120 = arith.constant 0 : index
    %112 = vector.load %arg4[%c32_119, %c0_120] : memref<96x32xbf16, #tpu.memory_space<vmem>>, vector<32x32xbf16>
    %cst_121 = arith.constant dense<0.000000e+00> : vector<48x32xf32>
    %113 = tpu.matmul %111, %112, %cst_121 {dimension_numbers = #tpu.dot_dimension_numbers<[1], [0], [0], [1], [0, 0, 1, 1], [], []>} : vector<48x32xbf16>, vector<32x32xbf16>, vector<48x32xf32> -> vector<48x32xf32>
    %114 = arith.addf %110, %113 : vector<48x32xf32>
    %c32_122 = arith.constant 32 : index
    %c0_123 = arith.constant 0 : index
    %115 = vector.load %arg9[%c32_122, %c0_123] : memref<128x32xbf16, #tpu.memory_space<vmem>>, vector<48x32xbf16>
    %c64_124 = arith.constant 64 : index
    %c0_125 = arith.constant 0 : index
    %116 = vector.load %arg4[%c64_124, %c0_125] : memref<96x32xbf16, #tpu.memory_space<vmem>>, vector<32x32xbf16>
    %cst_126 = arith.constant dense<0.000000e+00> : vector<48x32xf32>
    %117 = tpu.matmul %115, %116, %cst_126 {dimension_numbers = #tpu.dot_dimension_numbers<[1], [0], [0], [1], [0, 0, 1, 1], [], []>} : vector<48x32xbf16>, vector<32x32xbf16>, vector<48x32xf32> -> vector<48x32xf32>
    %118 = arith.addf %114, %117 : vector<48x32xf32>
    %c0_127 = arith.constant 0 : index
    %c0_128 = arith.constant 0 : index
    %119 = vector.load %arg10[%c0_127, %c0_128] : memref<112x32xf32, #tpu.memory_space<vmem>>, vector<48x32xf32>
    %120 = arith.addf %118, %119 : vector<48x32xf32>
    %c0_129 = arith.constant 0 : index
    %c0_130 = arith.constant 0 : index
    %121 = vector.load %arg10[%c0_129, %c0_130] : memref<112x32xf32, #tpu.memory_space<vmem>>, vector<48x32xf32>
    tpu.vector_store %arg10[%c0_129, %c0_130], %120 {strides = array<i32>} : memref<112x32xf32, #tpu.memory_space<vmem>>, vector<48x32xf32>,
    %c48_131 = arith.constant 48 : index
    %c0_132 = arith.constant 0 : index
    %122 = vector.load %arg10[%c48_131, %c0_132] : memref<112x32xf32, #tpu.memory_space<vmem>>, vector<16x32xf32>
    tpu.vector_store %arg10[%c48_131, %c0_132], %1 {strides = array<i32>} : memref<112x32xf32, #tpu.memory_space<vmem>>, vector<16x32xf32>,
    %c0_133 = arith.constant 0 : index
    %c0_134 = arith.constant 0 : index
    %123 = vector.load %arg10[%c0_133, %c0_134] : memref<112x32xf32, #tpu.memory_space<vmem>>, vector<16x32xf32>
    %c16_135 = arith.constant 16 : index
    %c0_136 = arith.constant 0 : index
    %124 = vector.load %arg10[%c16_135, %c0_136] : memref<112x32xf32, #tpu.memory_space<vmem>>, vector<16x32xf32>
    %125 = arith.maximumf %123, %124 : vector<16x32xf32>
    %c32_137 = arith.constant 32 : index
    %c0_138 = arith.constant 0 : index
    %126 = vector.load %arg10[%c32_137, %c0_138] : memref<112x32xf32, #tpu.memory_space<vmem>>, vector<16x32xf32>
    %127 = arith.maximumf %125, %126 : vector<16x32xf32>
    %c0_139 = arith.constant 0 : index
    %c0_140 = arith.constant 0 : index
    %128 = vector.load %arg10[%c0_139, %c0_140] : memref<112x32xf32, #tpu.memory_space<vmem>>, vector<16x32xf32>
    tpu.vector_store %arg10[%c0_139, %c0_140], %127 {strides = array<i32>} : memref<112x32xf32, #tpu.memory_space<vmem>>, vector<16x32xf32>,
    %cst_141 = arith.constant 0.000000e+00 : f32
    %129 = vector.broadcast %cst_141 : f32 to vector<16x32xf32>
    %130 = arith.maximumf %127, %129 : vector<16x32xf32>
    %131 = arith.truncf %130 : vector<16x32xf32> to vector<16x32xbf16>
    %c16_142 = arith.constant 16 : index
    %c0_143 = arith.constant 0 : index
    %132 = vector.load %arg9[%c16_142, %c0_143] : memref<128x32xbf16, #tpu.memory_space<vmem>>, vector<16x32xbf16>
    tpu.vector_store %arg9[%c16_142, %c0_143], %131 {strides = array<i32>} : memref<128x32xbf16, #tpu.memory_space<vmem>>, vector<16x32xbf16>,
    %c32_144 = arith.constant 32 : index
    %c0_145 = arith.constant 0 : index
    %133 = vector.load %arg9[%c32_144, %c0_145] : memref<128x32xbf16, #tpu.memory_space<vmem>>, vector<16x32xbf16>
    tpu.vector_store %arg9[%c32_144, %c0_145], %0 {strides = array<i32>} : memref<128x32xbf16, #tpu.memory_space<vmem>>, vector<16x32xbf16>,
    %134 = vector.extract_strided_slice %4 {offsets = [0, 0], sizes = [16, 32], strides = [1, 1]} : vector<96x32xf32> to vector<16x32xf32>
    %c0_146 = arith.constant 0 : index
    %c0_147 = arith.constant 0 : index
    %135 = vector.load %arg9[%c0_146, %c0_147] : memref<128x32xbf16, #tpu.memory_space<vmem>>, vector<16x32xbf16>
    %c0_148 = arith.constant 0 : index
    %c0_149 = arith.constant 0 : index
    %136 = vector.load %arg4[%c0_148, %c0_149] : memref<96x32xbf16, #tpu.memory_space<vmem>>, vector<32x32xbf16>
    %cst_150 = arith.constant dense<0.000000e+00> : vector<16x32xf32>
    %137 = tpu.matmul %135, %136, %cst_150 {dimension_numbers = #tpu.dot_dimension_numbers<[1], [0], [0], [1], [0, 0, 1, 1], [], []>} : vector<16x32xbf16>, vector<32x32xbf16>, vector<16x32xf32> -> vector<16x32xf32>
    %138 = arith.addf %134, %137 : vector<16x32xf32>
    %c16_151 = arith.constant 16 : index
    %c0_152 = arith.constant 0 : index
    %139 = vector.load %arg9[%c16_151, %c0_152] : memref<128x32xbf16, #tpu.memory_space<vmem>>, vector<16x32xbf16>
    %c32_153 = arith.constant 32 : index
    %c0_154 = arith.constant 0 : index
    %140 = vector.load %arg4[%c32_153, %c0_154] : memref<96x32xbf16, #tpu.memory_space<vmem>>, vector<32x32xbf16>
    %cst_155 = arith.constant dense<0.000000e+00> : vector<16x32xf32>
    %141 = tpu.matmul %139, %140, %cst_155 {dimension_numbers = #tpu.dot_dimension_numbers<[1], [0], [0], [1], [0, 0, 1, 1], [], []>} : vector<16x32xbf16>, vector<32x32xbf16>, vector<16x32xf32> -> vector<16x32xf32>
    %142 = arith.addf %138, %141 : vector<16x32xf32>
    %c32_156 = arith.constant 32 : index
    %c0_157 = arith.constant 0 : index
    %143 = vector.load %arg9[%c32_156, %c0_157] : memref<128x32xbf16, #tpu.memory_space<vmem>>, vector<16x32xbf16>
    %c64_158 = arith.constant 64 : index
    %c0_159 = arith.constant 0 : index
    %144 = vector.load %arg4[%c64_158, %c0_159] : memref<96x32xbf16, #tpu.memory_space<vmem>>, vector<32x32xbf16>
    %cst_160 = arith.constant dense<0.000000e+00> : vector<16x32xf32>
    %145 = tpu.matmul %143, %144, %cst_160 {dimension_numbers = #tpu.dot_dimension_numbers<[1], [0], [0], [1], [0, 0, 1, 1], [], []>} : vector<16x32xbf16>, vector<32x32xbf16>, vector<16x32xf32> -> vector<16x32xf32>
    %146 = arith.addf %142, %145 : vector<16x32xf32>
    %cst_161 = arith.constant 0.000000e+00 : f32
    %147 = vector.broadcast %cst_161 : f32 to vector<16x32xf32>
    %148 = arith.maximumf %146, %147 : vector<16x32xf32>
    %149 = arith.truncf %148 : vector<16x32xf32> to vector<16x32xbf16>
    %c16_162 = arith.constant 16 : index
    %c0_163 = arith.constant 0 : index
    %150 = vector.load %arg9[%c16_162, %c0_163] : memref<128x32xbf16, #tpu.memory_space<vmem>>, vector<16x32xbf16>
    tpu.vector_store %arg9[%c16_162, %c0_163], %149 {strides = array<i32>} : memref<128x32xbf16, #tpu.memory_space<vmem>>, vector<16x32xbf16>,
    %151 = vector.extract_strided_slice %4 {offsets = [0, 0], sizes = [16, 32], strides = [1, 1]} : vector<96x32xf32> to vector<16x32xf32>
    %c0_164 = arith.constant 0 : index
    %c0_165 = arith.constant 0 : index
    %152 = vector.load %arg9[%c0_164, %c0_165] : memref<128x32xbf16, #tpu.memory_space<vmem>>, vector<16x32xbf16>
    %c0_166 = arith.constant 0 : index
    %c0_167 = arith.constant 0 : index
    %153 = vector.load %arg4[%c0_166, %c0_167] : memref<96x32xbf16, #tpu.memory_space<vmem>>, vector<32x32xbf16>
    %cst_168 = arith.constant dense<0.000000e+00> : vector<16x32xf32>
    %154 = tpu.matmul %152, %153, %cst_168 {dimension_numbers = #tpu.dot_dimension_numbers<[1], [0], [0], [1], [0, 0, 1, 1], [], []>} : vector<16x32xbf16>, vector<32x32xbf16>, vector<16x32xf32> -> vector<16x32xf32>
    %155 = arith.addf %151, %154 : vector<16x32xf32>
    %c16_169 = arith.constant 16 : index
    %c0_170 = arith.constant 0 : index
    %156 = vector.load %arg9[%c16_169, %c0_170] : memref<128x32xbf16, #tpu.memory_space<vmem>>, vector<16x32xbf16>
    %c32_171 = arith.constant 32 : index
    %c0_172 = arith.constant 0 : index
    %157 = vector.load %arg4[%c32_171, %c0_172] : memref<96x32xbf16, #tpu.memory_space<vmem>>, vector<32x32xbf16>
    %cst_173 = arith.constant dense<0.000000e+00> : vector<16x32xf32>
    %158 = tpu.matmul %156, %157, %cst_173 {dimension_numbers = #tpu.dot_dimension_numbers<[1], [0], [0], [1], [0, 0, 1, 1], [], []>} : vector<16x32xbf16>, vector<32x32xbf16>, vector<16x32xf32> -> vector<16x32xf32>
    %159 = arith.addf %155, %158 : vector<16x32xf32>
    %c32_174 = arith.constant 32 : index
    %c0_175 = arith.constant 0 : index
    %160 = vector.load %arg9[%c32_174, %c0_175] : memref<128x32xbf16, #tpu.memory_space<vmem>>, vector<16x32xbf16>
    %c64_176 = arith.constant 64 : index
    %c0_177 = arith.constant 0 : index
    %161 = vector.load %arg4[%c64_176, %c0_177] : memref<96x32xbf16, #tpu.memory_space<vmem>>, vector<32x32xbf16>
    %cst_178 = arith.constant dense<0.000000e+00> : vector<16x32xf32>
    %162 = tpu.matmul %160, %161, %cst_178 {dimension_numbers = #tpu.dot_dimension_numbers<[1], [0], [0], [1], [0, 0, 1, 1], [], []>} : vector<16x32xbf16>, vector<32x32xbf16>, vector<16x32xf32> -> vector<16x32xf32>
    %163 = arith.addf %159, %162 : vector<16x32xf32>
    %c0_179 = arith.constant 0 : index
    %c0_180 = arith.constant 0 : index
    %164 = vector.load %arg10[%c0_179, %c0_180] : memref<112x32xf32, #tpu.memory_space<vmem>>, vector<16x32xf32>
    %165 = arith.addf %163, %164 : vector<16x32xf32>
    %c0_181 = arith.constant 0 : index
    %c0_182 = arith.constant 0 : index
    %166 = vector.load %arg6[%c0_181, %c0_182] : memref<32x128xbf16, #tpu.memory_space<vmem>>, vector<32x128xbf16>
    %167 = arith.truncf %165 : vector<16x32xf32> to vector<16x32xbf16>
    %cst_183 = arith.constant dense<0.000000e+00> : vector<16x128xf32>
    %168 = tpu.matmul %167, %166, %cst_183 {dimension_numbers = #tpu.dot_dimension_numbers<[1], [0], [0], [1], [0, 0, 1, 1], [], []>} : vector<16x32xbf16>, vector<32x128xbf16>, vector<16x128xf32> -> vector<16x128xf32>
    %c0_184 = arith.constant 0 : index
    %c0_185 = arith.constant 0 : index
    %169 = vector.load %arg7[%c0_184, %c0_185] : memref<1x128xf32, #tpu.memory_space<vmem>>, vector<1x128xf32>
    %170 = vector.broadcast %169 : vector<1x128xf32> to vector<16x128xf32>
    %171 = arith.addf %168, %170 : vector<16x128xf32>
    %c0_186 = arith.constant 0 : index
    %c0_187 = arith.constant 0 : index
    %c0_188 = arith.constant 0 : index
    %172 = vector.load %arg8[%c0_186, %c0_187, %c0_188] : memref<1x16x128xf32, #tpu.memory_space<vmem>>, vector<1x16x128xf32>
    %173 = vector.shape_cast %172 : vector<1x16x128xf32> to vector<16x128xf32>
    %174 = vector.shape_cast %171 : vector<16x128xf32> to vector<1x16x128xf32>
    tpu.vector_store %arg8[%c0_186, %c0_187, %c0_188], %174 {strides = array<i32>} : memref<1x16x128xf32, #tpu.memory_space<vmem>>, vector<1x16x128xf32>,
    return
  }
  func.func @transform_0(%arg0: i32) -> (i32, i32, i32) {
    %c0_i32 = arith.constant 0 : i32
    %c0_i32_0 = arith.constant 0 : i32
    %c0_i32_1 = arith.constant 0 : i32
    return %arg0, %c0_i32, %c0_i32_0 : i32, i32, i32
  }
  func.func @transform_1(%arg0: i32) -> (i32, i32) {
    %c0_i32 = arith.constant 0 : i32
    %c0_i32_0 = arith.constant 0 : i32
    %c0_i32_1 = arith.constant 0 : i32
    return %c0_i32, %c0_i32_0 : i32, i32
  }
  func.func @transform_2(%arg0: i32) -> (i32, i32) {
    %c0_i32 = arith.constant 0 : i32
    %c0_i32_0 = arith.constant 0 : i32
    %c0_i32_1 = arith.constant 0 : i32
    return %c0_i32, %c0_i32_0 : i32, i32
  }
  func.func @transform_3(%arg0: i32) -> (i32, i32) {
    %c0_i32 = arith.constant 0 : i32
    %c0_i32_0 = arith.constant 0 : i32
    %c0_i32_1 = arith.constant 0 : i32
    return %c0_i32, %c0_i32_0 : i32, i32
  }
  func.func @transform_4(%arg0: i32) -> (i32, i32) {
    %c0_i32 = arith.constant 0 : i32
    %c0_i32_0 = arith.constant 0 : i32
    %c0_i32_1 = arith.constant 0 : i32
    return %c0_i32, %c0_i32_0 : i32, i32
  }
  func.func @transform_5(%arg0: i32) -> (i32, i32) {
    %c0_i32 = arith.constant 0 : i32
    %c0_i32_0 = arith.constant 0 : i32
    %c0_i32_1 = arith.constant 0 : i32
    return %c0_i32, %c0_i32_0 : i32, i32
  }
  func.func @transform_6(%arg0: i32) -> (i32, i32) {
    %c0_i32 = arith.constant 0 : i32
    %c0_i32_0 = arith.constant 0 : i32
    %c0_i32_1 = arith.constant 0 : i32
    return %c0_i32, %c0_i32_0 : i32, i32
  }
  func.func @transform_7(%arg0: i32) -> (i32, i32, i32) {
    %c0_i32 = arith.constant 0 : i32
    %c0_i32_0 = arith.constant 0 : i32
    %c0_i32_1 = arith.constant 0 : i32
    return %arg0, %c0_i32, %c0_i32_0 : i32, i32, i32
  }
}

</mosaic_0001>

<llo_original>
// kernel: tpu_custom_call.1
$region0: #{tpu_custom_call.1}
  #allocation0 [shape = 'u32[]', space=smem, size = 0x4, offset = 0x4, fixed_abs, tag = 'smem constant byte address 0x4 - core index']
  #allocation1 [shape = 'u32[144,128]{1,0:T(1,128)}', space=vmem, size = 0x12000, scoped, tag = 'internal scratch']
  #allocation2 [shape = 'bf16[128,32]{1,0:T(8,128)(2,1)}', space=vmem, size = 0x8000, scoped, tag = 'scratch operand']
  #allocation3 [shape = 'f32[112,32]{1,0:T(8,128)}', space=vmem, size = 0xe000, scoped, tag = 'scratch operand']
  %s0 = inlined_call_operand.vmem [shape: bf16[1,128,16], index: 0, kind: input, shape index: {}]
  %s1 = inlined_call_operand.vmem [shape: bf16[48,32], index: 1, kind: input, shape index: {}]
  %s2 = inlined_call_operand.vmem [shape: f32[1,32], index: 2, kind: input, shape index: {}]
  %s3 = inlined_call_operand.vmem [shape: bf16[96,32], index: 3, kind: input, shape index: {}]
  %s4 = inlined_call_operand.vmem [shape: f32[1,32], index: 4, kind: input, shape index: {}]
  %s5 = inlined_call_operand.vmem [shape: bf16[32,128], index: 5, kind: input, shape index: {}]
  %s6 = inlined_call_operand.vmem [shape: f32[1,128], index: 6, kind: input, shape index: {}]
  %s7 = inlined_call_operand.hbm [shape: f32[1,16,128], index: 7, kind: output, shape index: {}]
  %s8 = sld [smem:[#allocation0]]
  $region38: #{tpu_custom_call.1} parent=0
    _
  %s10 = ssub.s32 1, %s8
  %s11 = scalar_select 0, %s10, %s8
  $region1: #{tpu_custom_call.1} parent=0
    #allocation4 [shape = 'u8[8192]{0}', space=vmem, size = 0x2000, scoped, tag = 'output window, operand 0, single buffered']
    #allocation5 [shape = 's32[1]{0}', space=sflag, size = 0x4, scoped, tag = 'scoped memory for tpu_custom_call.1']
    %12 = vsyncpa [#allocation5], 0
    // Predicated region
    $region2: #{tpu_custom_call.1} parent=1 // pred_check
      _
    $region3: #{tpu_custom_call.1} parent=1 // pred_check_branch
      %14 = sbr.rel (0) target = $region5
    $region4: #{tpu_custom_call.1} parent=1 // pred_region
      _
    $region5: #{tpu_custom_call.1} parent=1 // pred_fallthru
      _
    // Predicated region
    $region6: #{tpu_custom_call.1} parent=1 // pred_check
      _
    $region7: #{tpu_custom_call.1} parent=1 // pred_check_branch
      %16 = sbr.rel (0) target = $region9
    $region8: #{tpu_custom_call.1} parent=1 // pred_region
      _
    $region9: #{tpu_custom_call.1} parent=1 // pred_fallthru
      _
    // Predicated region
    $region10: #{tpu_custom_call.1} parent=1 // pred_check
      _
    $region11: #{tpu_custom_call.1} parent=1 // pred_check_branch
      %18 = sbr.rel (0) target = $region13
    $region12: #{tpu_custom_call.1} parent=1 // pred_region
      _
    $region13: #{tpu_custom_call.1} parent=1 // pred_fallthru
      _
    // Predicated region
    $region14: #{tpu_custom_call.1} parent=1 // pred_check
      _
    $region15: #{tpu_custom_call.1} parent=1 // pred_check_branch
      %20 = sbr.rel (0) target = $region17
    $region16: #{tpu_custom_call.1} parent=1 // pred_region
      _
    $region17: #{tpu_custom_call.1} parent=1 // pred_fallthru
      _
    // Predicated region
    $region18: #{tpu_custom_call.1} parent=1 // pred_check
      _
    $region19: #{tpu_custom_call.1} parent=1 // pred_check_branch
      %22 = sbr.rel (0) target = $region21
    $region20: #{tpu_custom_call.1} parent=1 // pred_region
      _
    $region21: #{tpu_custom_call.1} parent=1 // pred_fallthru
      _
    // Predicated region
    $region22: #{tpu_custom_call.1} parent=1 // pred_check
      _
    $region23: #{tpu_custom_call.1} parent=1 // pred_check_branch
      %24 = sbr.rel (0) target = $region25
    $region24: #{tpu_custom_call.1} parent=1 // pred_region
      _
    $region25: #{tpu_custom_call.1} parent=1 // pred_fallthru
      _
    // Predicated region
    $region26: #{tpu_custom_call.1} parent=1 // pred_check
      _
    $region27: #{tpu_custom_call.1} parent=1 // pred_check_branch
      %26 = sbr.rel (0) target = $region29
    $region28: #{tpu_custom_call.1} parent=1 // pred_region
      _
    $region29: #{tpu_custom_call.1} parent=1 // pred_fallthru
      _
    %v28 = vld [vmem:[%s4] sm:$0x1]
    %v30 = vlaneseq
    %v31 = vshrl.u32 %v30, 7
    %v32 = vsub.s32 0, %v31
    %v33 = vrot.slane %v28, %v32
    %v35 = vld [vmem:[%s0] sm:$0xf]
    %v36 = vld [vmem:[%s0 + $0x4] sm:$0xf]
    %v37 = vld [vmem:[%s0 + $0x8] sm:$0xf]
    %v38 = vld [vmem:[%s0 + $0xc] sm:$0xf]
    %v39 = vld [vmem:[%s0 + $0x10] sm:$0xf]
    %v40 = vld [vmem:[%s0 + $0x14] sm:$0xf]
    %v41 = vld [vmem:[%s0 + $0x18] sm:$0xf]
    %v42 = vld [vmem:[%s0 + $0x1c] sm:$0xf]
    %v43 = vld [vmem:[%s0 + $0x20] sm:$0xf]
    %v44 = vld [vmem:[%s0 + $0x24] sm:$0xf]
    %v45 = vld [vmem:[%s0 + $0x28] sm:$0xf]
    %v46 = vld [vmem:[%s0 + $0x2c] sm:$0xf]
    %v47 = vld [vmem:[%s1] sm:$0xf]
    %v48 = vld [vmem:[%s1 + $0x4] sm:$0xf]
    %v49 = vld [vmem:[%s0 + $0x30] sm:$0xf]
    %v50 = vld [vmem:[%s0 + $0x34] sm:$0xf]
    %v51 = vld [vmem:[%s1 + $0x8] sm:$0xf]
    %v52 = vld [vmem:[%s1 + $0xc] sm:$0xf]
    %v65 = vunpack.c.l.b16 %v37
    %v66 = vunpack.c.l.b16 %v38
    %v67 = vunpack.c.l.b16 %v39
    %v68 = vunpack.c.l.b16 %v40
    %v69 = vunpack.c.l.b16 %v41
    %v70 = vunpack.c.l.b16 %v42
    %v71 = vunpack.c.l.b16 %v43
    %v72 = vunpack.c.l.b16 %v44
    %v73 = vunpack.c.l.b16 %v45
    %v74 = vunpack.c.l.b16 %v46
    %v75 = vunpack.c.l.b16 %v49
    %v76 = vunpack.c.l.b16 %v50
    %v77 = vpack.c.b16 %v66, %v65
    %v78 = vpack.c.b16 %v68, %v67
    %v79 = vpack.c.b16 %v70, %v69
    %v80 = vpack.c.b16 %v72, %v71
    %v81 = vpack.c.b16 %v74, %v73
    %v82 = vpack.c.b16 %v76, %v75
    %v85 = vunpack.c.l.b16 %v51
    %v86 = vunpack.c.l.b16 %v52
    %v87 = vpack.c.b16 %v86, %v85
    %vm89 = vcmask 130048
    %v91 = vsel %vm89, %v77, 0
    %v94 = vsel %vm89, %v78, 0
    %v97 = vsel %vm89, %v79, 0
    %v100 = vsel %vm89, %v80, 0
    %v103 = vsel %vm89, %v81, 0
    %v106 = vsel %vm89, %v82, 0
    %108 = vmatprep.subr.bf16.mxu0 0
    %109 = vmatpush1.bf16.msra.mxu0 0
    %110 = vmatprep.subr.bf16.mxu0 0
    %111 = vmatpush1.bf16.msra.mxu0 0
    %112 = vmatprep.subr.bf16.mxu0 0
    %113 = vmatpush1.bf16.msra.mxu0 0
    %114 = vmatprep.subr.bf16.mxu0 0
    %115 = vmatpush1.bf16.msra.mxu0 0
    %116 = vmatprep.subr.bf16.mxu0 0
    %117 = vmatpush1.bf16.msra.mxu0 0
    %118 = vmatprep.subr.bf16.mxu0 0
    %119 = vmatpush1.bf16.msra.mxu0 0
    %120 = vmatprep.subr.bf16.mxu0 0
    %121 = vmatpush1.bf16.msra.mxu0 0
    %122 = vmatprep.subr.bf16.mxu0 0
    %123 = vmatpush1.bf16.msra.mxu0 %v87
    %124 = vmatprep.subr.bf16.mxu0 0
    %125 = vmatpush2.bf16.msra.mxu0 0
    %126 = vmatprep.subr.bf16.mxu0 0
    %127 = vmatpush2.bf16.msra.mxu0 0
    %128 = vmatprep.subr.bf16.mxu0 0
    %129 = vmatpush2.bf16.msra.mxu0 0
    %130 = vmatprep.subr.bf16.mxu0 0
    %131 = vmatpush2.bf16.msra.mxu0 0
    %132 = vmatprep.subr.bf16.mxu0 0
    %133 = vmatpush2.bf16.msra.mxu0 0
    %134 = vmatprep.subr.bf16.mxu0 0
    %135 = vmatpush2.bf16.msra.mxu0 0
    %136 = vmatprep.subr.bf16.mxu0 0
    %137 = vmatpush2.bf16.msra.mxu0 0
    %138 = vmatprep.subr.bf16.mxu0 0
    %139 = vmatpush2.bf16.msra.mxu0 0
    %140 = vmatprep.mubr.bf16.mxu0 0
    %141 = vmatmul.mubr.bf16.gmra.mxu0 %v91
    %v142 = vpop.f32.mrf.mxu0
    %v143 = vadd.f32 0.0, %v142
    %v144 = vpop.f32.mrf.mxu0
    %v145 = vpop.f32.mrf.mxu0
    %v146 = vadd.f32 0.0, %v145
    %v147 = vpop.f32.mrf.mxu0
    %148 = vmatprep.mubr.bf16.mxu0 0
    %149 = vmatmul.mubr.bf16.gmra.mxu0 %v94
    %v150 = vpop.f32.mrf.mxu0
    %v151 = vadd.f32 0.0, %v150
    %v152 = vpop.f32.mrf.mxu0
    %v153 = vpop.f32.mrf.mxu0
    %v154 = vadd.f32 0.0, %v153
    %v155 = vpop.f32.mrf.mxu0
    %156 = vmatprep.mubr.bf16.mxu0 0
    %157 = vmatmul.mubr.bf16.gmra.mxu0 %v97
    %v158 = vpop.f32.mrf.mxu0
    %v159 = vadd.f32 0.0, %v158
    %v160 = vpop.f32.mrf.mxu0
    %v161 = vpop.f32.mrf.mxu0
    %v162 = vadd.f32 0.0, %v161
    %v163 = vpop.f32.mrf.mxu0
    %164 = vmatprep.mubr.bf16.mxu0 0
    %165 = vmatmul.mubr.bf16.gmra.mxu0 %v100
    %v166 = vpop.f32.mrf.mxu0
    %v167 = vadd.f32 0.0, %v166
    %v168 = vpop.f32.mrf.mxu0
    %v169 = vpop.f32.mrf.mxu0
    %v170 = vadd.f32 0.0, %v169
    %v171 = vpop.f32.mrf.mxu0
    %172 = vmatprep.mubr.bf16.mxu0 0
    %173 = vmatmul.mubr.bf16.gmra.mxu0 %v103
    %v174 = vpop.f32.mrf.mxu0
    %v175 = vadd.f32 0.0, %v174
    %v176 = vpop.f32.mrf.mxu0
    %v177 = vpop.f32.mrf.mxu0
    %v178 = vadd.f32 0.0, %v177
    %v179 = vpop.f32.mrf.mxu0
    %180 = vmatprep.mubr.bf16.mxu0 0
    %181 = vmatmul.mubr.bf16.gmra.mxu0 %v106
    %v182 = vpop.f32.mrf.mxu0
    %v183 = vadd.f32 0.0, %v182
    %v184 = vpop.f32.mrf.mxu0
    %v185 = vpop.f32.mrf.mxu0
    %v186 = vadd.f32 0.0, %v185
    %v187 = vpop.f32.mrf.mxu0
    %188 = vdwg.mxu0
    %v191 = vunpack.c.l.b16 %v35
    %v192 = vunpack.c.l.b16 %v36
    %v193 = vpack.c.b16 %v192, %v191
    %v196 = vunpack.c.l.b16 %v47
    %v197 = vunpack.c.l.b16 %v48
    %v198 = vpack.c.b16 %v197, %v196
    %v201 = vsel %vm89, %v193, 0
    %203 = vmatprep.subr.bf16.mxu0 0
    %204 = vmatpush1.bf16.msra.mxu0 0
    %205 = vmatprep.subr.bf16.mxu0 0
    %206 = vmatpush1.bf16.msra.mxu0 0
    %207 = vmatprep.subr.bf16.mxu0 0
    %208 = vmatpush1.bf16.msra.mxu0 0
    %209 = vmatprep.subr.bf16.mxu0 0
    %210 = vmatpush1.bf16.msra.mxu0 0
    %211 = vmatprep.subr.bf16.mxu0 0
    %212 = vmatpush1.bf16.msra.mxu0 0
    %213 = vmatprep.subr.bf16.mxu0 0
    %214 = vmatpush1.bf16.msra.mxu0 0
    %215 = vmatprep.subr.bf16.mxu0 0
    %216 = vmatpush1.bf16.msra.mxu0 0
    %217 = vmatprep.subr.bf16.mxu0 0
    %218 = vmatpush1.bf16.msra.mxu0 %v198
    %219 = vmatprep.subr.bf16.mxu0 0
    %220 = vmatpush2.bf16.msra.mxu0 0
    %221 = vmatprep.subr.bf16.mxu0 0
    %222 = vmatpush2.bf16.msra.mxu0 0
    %223 = vmatprep.subr.bf16.mxu0 0
    %224 = vmatpush2.bf16.msra.mxu0 0
    %225 = vmatprep.subr.bf16.mxu0 0
    %226 = vmatpush2.bf16.msra.mxu0 0
    %227 = vmatprep.subr.bf16.mxu0 0
    %228 = vmatpush2.bf16.msra.mxu0 0
    %229 = vmatprep.subr.bf16.mxu0 0
    %230 = vmatpush2.bf16.msra.mxu0 0
    %231 = vmatprep.subr.bf16.mxu0 0
    %232 = vmatpush2.bf16.msra.mxu0 0
    %233 = vmatprep.subr.bf16.mxu0 0
    %234 = vmatpush2.bf16.msra.mxu0 0
    %235 = vmatprep.mubr.bf16.mxu0 0
    %236 = vmatmul.mubr.bf16.gmra.mxu0 %v201
    %v237 = vpop.f32.mrf.mxu0
    %v238 = vadd.f32 %v143, %v237
    %v239 = vpop.f32.mrf.mxu0
    %v240 = vpop.f32.mrf.mxu0
    %v241 = vadd.f32 %v146, %v240
    %v242 = vpop.f32.mrf.mxu0
    %243 = vmatprep.mubr.bf16.mxu0 0
    %244 = vmatmul.mubr.bf16.gmra.mxu0 %v91
    %v245 = vpop.f32.mrf.mxu0
    %v246 = vadd.f32 %v151, %v245
    %v247 = vpop.f32.mrf.mxu0
    %v248 = vpop.f32.mrf.mxu0
    %v249 = vadd.f32 %v154, %v248
    %v250 = vpop.f32.mrf.mxu0
    %251 = vmatprep.mubr.bf16.mxu0 0
    %252 = vmatmul.mubr.bf16.gmra.mxu0 %v94
    %v253 = vpop.f32.mrf.mxu0
    %v254 = vadd.f32 %v159, %v253
    %v255 = vpop.f32.mrf.mxu0
    %v256 = vpop.f32.mrf.mxu0
    %v257 = vadd.f32 %v162, %v256
    %v258 = vpop.f32.mrf.mxu0
    %259 = vmatprep.mubr.bf16.mxu0 0
    %260 = vmatmul.mubr.bf16.gmra.mxu0 %v97
    %v261 = vpop.f32.mrf.mxu0
    %v262 = vadd.f32 %v167, %v261
    %v263 = vpop.f32.mrf.mxu0
    %v264 = vpop.f32.mrf.mxu0
    %v265 = vadd.f32 %v170, %v264
    %v266 = vpop.f32.mrf.mxu0
    %267 = vmatprep.mubr.bf16.mxu0 0
    %268 = vmatmul.mubr.bf16.gmra.mxu0 %v100
    %v269 = vpop.f32.mrf.mxu0
    %v270 = vadd.f32 %v175, %v269
    %v271 = vpop.f32.mrf.mxu0
    %v272 = vpop.f32.mrf.mxu0
    %v273 = vadd.f32 %v178, %v272
    %v274 = vpop.f32.mrf.mxu0
    %275 = vmatprep.mubr.bf16.mxu0 0
    %276 = vmatmul.mubr.bf16.gmra.mxu0 %v103
    %v277 = vpop.f32.mrf.mxu0
    %v278 = vadd.f32 %v183, %v277
    %v279 = vpop.f32.mrf.mxu0
    %v280 = vpop.f32.mrf.mxu0
    %v281 = vadd.f32 %v186, %v280
    %v282 = vpop.f32.mrf.mxu0
    %283 = vdwg.mxu0
    %v284 = vld [vmem:[%s0 + $0x10] sm:$0xf]
    %v285 = vld [vmem:[%s0 + $0x14] sm:$0xf]
    %v286 = vld [vmem:[%s0 + $0x18] sm:$0xf]
    %v287 = vld [vmem:[%s0 + $0x1c] sm:$0xf]
    %v288 = vld [vmem:[%s0 + $0x20] sm:$0xf]
    %v289 = vld [vmem:[%s0 + $0x24] sm:$0xf]
    %v290 = vld [vmem:[%s0 + $0x28] sm:$0xf]
    %v291 = vld [vmem:[%s0 + $0x2c] sm:$0xf]
    %v292 = vld [vmem:[%s0 + $0x30] sm:$0xf]
    %v293 = vld [vmem:[%s0 + $0x34] sm:$0xf]
    %v294 = vld [vmem:[%s0 + $0x38] sm:$0xf]
    %v295 = vld [vmem:[%s0 + $0x3c] sm:$0xf]
    %v296 = vld [vmem:[%s1 + $0x10] sm:$0xf]
    %v297 = vld [vmem:[%s1 + $0x14] sm:$0xf]
    %v310 = vunpack.c.l.b16 %v284
    %v311 = vunpack.c.l.b16 %v285
    %v312 = vunpack.c.l.b16 %v286
    %v313 = vunpack.c.l.b16 %v287
    %v314 = vunpack.c.l.b16 %v288
    %v315 = vunpack.c.l.b16 %v289
    %v316 = vunpack.c.l.b16 %v290
    %v317 = vunpack.c.l.b16 %v291
    %v318 = vunpack.c.l.b16 %v292
    %v319 = vunpack.c.l.b16 %v293
    %v320 = vunpack.c.l.b16 %v294
    %v321 = vunpack.c.l.b16 %v295
    %v322 = vpack.c.b16 %v311, %v310
    %v323 = vpack.c.b16 %v313, %v312
    %v324 = vpack.c.b16 %v315, %v314
    %v325 = vpack.c.b16 %v317, %v316
    %v326 = vpack.c.b16 %v319, %v318
    %v327 = vpack.c.b16 %v321, %v320
    %v330 = vunpack.c.l.b16 %v296
    %v331 = vunpack.c.l.b16 %v297
    %v332 = vpack.c.b16 %v331, %v330
    %v335 = vsel %vm89, %v322, 0
    %v338 = vsel %vm89, %v323, 0
    %v341 = vsel %vm89, %v324, 0
    %v344 = vsel %vm89, %v325, 0
    %v347 = vsel %vm89, %v326, 0
    %v350 = vsel %vm89, %v327, 0
    %352 = vmatprep.subr.bf16.mxu0 0
    %353 = vmatpush1.bf16.msra.mxu0 0
    %354 = vmatprep.subr.bf16.mxu0 0
    %355 = vmatpush1.bf16.msra.mxu0 0
    %356 = vmatprep.subr.bf16.mxu0 0
    %357 = vmatpush1.bf16.msra.mxu0 0
    %358 = vmatprep.subr.bf16.mxu0 0
    %359 = vmatpush1.bf16.msra.mxu0 0
    %360 = vmatprep.subr.bf16.mxu0 0
    %361 = vmatpush1.bf16.msra.mxu0 0
    %362 = vmatprep.subr.bf16.mxu0 0
    %363 = vmatpush1.bf16.msra.mxu0 0
    %364 = vmatprep.subr.bf16.mxu0 0
    %365 = vmatpush1.bf16.msra.mxu0 0
    %366 = vmatprep.subr.bf16.mxu0 0
    %367 = vmatpush1.bf16.msra.mxu0 %v332
    %368 = vmatprep.subr.bf16.mxu0 0
    %369 = vmatpush2.bf16.msra.mxu0 0
    %370 = vmatprep.subr.bf16.mxu0 0
    %371 = vmatpush2.bf16.msra.mxu0 0
    %372 = vmatprep.subr.bf16.mxu0 0
    %373 = vmatpush2.bf16.msra.mxu0 0
    %374 = vmatprep.subr.bf16.mxu0 0
    %375 = vmatpush2.bf16.msra.mxu0 0
    %376 = vmatprep.subr.bf16.mxu0 0
    %377 = vmatpush2.bf16.msra.mxu0 0
    %378 = vmatprep.subr.bf16.mxu0 0
    %379 = vmatpush2.bf16.msra.mxu0 0
    %380 = vmatprep.subr.bf16.mxu0 0
    %381 = vmatpush2.bf16.msra.mxu0 0
    %382 = vmatprep.subr.bf16.mxu0 0
    %383 = vmatpush2.bf16.msra.mxu0 0
    %384 = vmatprep.mubr.bf16.mxu0 0
    %385 = vmatmul.mubr.bf16.gmra.mxu0 %v335
    %v386 = vpop.f32.mrf.mxu0
    %v387 = vadd.f32 0.0, %v386
    %v388 = vpop.f32.mrf.mxu0
    %v389 = vpop.f32.mrf.mxu0
    %v390 = vadd.f32 0.0, %v389
    %v391 = vpop.f32.mrf.mxu0
    %392 = vmatprep.mubr.bf16.mxu0 0
    %393 = vmatmul.mubr.bf16.gmra.mxu0 %v338
    %v394 = vpop.f32.mrf.mxu0
    %v395 = vadd.f32 0.0, %v394
    %v396 = vpop.f32.mrf.mxu0
    %v397 = vpop.f32.mrf.mxu0
    %v398 = vadd.f32 0.0, %v397
    %v399 = vpop.f32.mrf.mxu0
    %400 = vmatprep.mubr.bf16.mxu0 0
    %401 = vmatmul.mubr.bf16.gmra.mxu0 %v341
    %v402 = vpop.f32.mrf.mxu0
    %v403 = vadd.f32 0.0, %v402
    %v404 = vpop.f32.mrf.mxu0
    %v405 = vpop.f32.mrf.mxu0
    %v406 = vadd.f32 0.0, %v405
    %v407 = vpop.f32.mrf.mxu0
    %408 = vmatprep.mubr.bf16.mxu0 0
    %409 = vmatmul.mubr.bf16.gmra.mxu0 %v344
    %v410 = vpop.f32.mrf.mxu0
    %v411 = vadd.f32 0.0, %v410
    %v412 = vpop.f32.mrf.mxu0
    %v413 = vpop.f32.mrf.mxu0
    %v414 = vadd.f32 0.0, %v413
    %v415 = vpop.f32.mrf.mxu0
    %416 = vmatprep.mubr.bf16.mxu0 0
    %417 = vmatmul.mubr.bf16.gmra.mxu0 %v347
    %v418 = vpop.f32.mrf.mxu0
    %v419 = vadd.f32 0.0, %v418
    %v420 = vpop.f32.mrf.mxu0
    %v421 = vpop.f32.mrf.mxu0
    %v422 = vadd.f32 0.0, %v421
    %v423 = vpop.f32.mrf.mxu0
    %424 = vmatprep.mubr.bf16.mxu0 0
    %425 = vmatmul.mubr.bf16.gmra.mxu0 %v350
    %v426 = vpop.f32.mrf.mxu0
    %v427 = vadd.f32 0.0, %v426
    %v428 = vpop.f32.mrf.mxu0
    %v429 = vpop.f32.mrf.mxu0
    %v430 = vadd.f32 0.0, %v429
    %v431 = vpop.f32.mrf.mxu0
    %432 = vdwg.mxu0
    %v433 = vadd.f32 %v238, %v387
    %v434 = vadd.f32 %v241, %v390
    %v435 = vadd.f32 %v246, %v395
    %v436 = vadd.f32 %v249, %v398
    %v437 = vadd.f32 %v254, %v403
    %v438 = vadd.f32 %v257, %v406
    %v439 = vadd.f32 %v262, %v411
    %v440 = vadd.f32 %v265, %v414
    %v441 = vadd.f32 %v270, %v419
    %v442 = vadd.f32 %v273, %v422
    %v443 = vadd.f32 %v278, %v427
    %v444 = vadd.f32 %v281, %v430
    %v445 = vld [vmem:[%s2] sm:$0x1]
    %v447 = vlaneseq
    %v448 = vshrl.u32 %v447, 7
    %v449 = vsub.s32 0, %v448
    %v450 = vrot.slane %v445, %v449
    %v452 = vadd.f32 %v433, %v450
    %v453 = vadd.f32 %v434, %v450
    %v454 = vadd.f32 %v435, %v450
    %v455 = vadd.f32 %v436, %v450
    %v456 = vadd.f32 %v437, %v450
    %v457 = vadd.f32 %v438, %v450
    %v458 = vadd.f32 %v439, %v450
    %v459 = vadd.f32 %v440, %v450
    %v460 = vadd.f32 %v441, %v450
    %v461 = vadd.f32 %v442, %v450
    %v462 = vadd.f32 %v443, %v450
    %v463 = vadd.f32 %v444, %v450
    %vm464 = vcmask 257024
    %465 = vst.msk [vmem:[#allocation2] sm:$0xf] %vm464, 0
    %466 = vst.msk [vmem:[#allocation2 + $0x4] sm:$0xf] %vm464, 0
    %467 = vst.msk [vmem:[#allocation2 + $0x38] sm:$0xf] %vm464, 0
    %468 = vst.msk [vmem:[#allocation2 + $0x3c] sm:$0xf] %vm464, 0
    %v469 = vmax.f32 %v452, 0.0
    %v470 = vmax.f32 %v453, 0.0
    %v471 = vmax.f32 %v454, 0.0
    %v472 = vmax.f32 %v455, 0.0
    %v473 = vmax.f32 %v456, 0.0
    %v474 = vmax.f32 %v457, 0.0
    %v475 = vmax.f32 %v458, 0.0
    %v476 = vmax.f32 %v459, 0.0
    %v477 = vmax.f32 %v460, 0.0
    %v478 = vmax.f32 %v461, 0.0
    %v479 = vmax.f32 %v462, 0.0
    %v480 = vmax.f32 %v463, 0.0
    %v481 = vpack.c.bf16 %v470, %v469
    %v482 = vpack.c.bf16 %v472, %v471
    %v483 = vpack.c.bf16 %v474, %v473
    %v484 = vpack.c.bf16 %v476, %v475
    %v485 = vpack.c.bf16 %v478, %v477
    %v486 = vpack.c.bf16 %v480, %v479
    %v493 = vunpack.c.l.b16 %v481
    %v494 = vunpack.c.h.b16 %v481
    %v495 = vunpack.c.l.b16 %v482
    %v496 = vunpack.c.h.b16 %v482
    %v497 = vunpack.c.l.b16 %v483
    %v498 = vunpack.c.h.b16 %v483
    %v499 = vunpack.c.l.b16 %v484
    %v500 = vunpack.c.h.b16 %v484
    %v501 = vunpack.c.l.b16 %v485
    %v502 = vunpack.c.h.b16 %v485
    %v503 = vunpack.c.l.b16 %v486
    %v504 = vunpack.c.h.b16 %v486
    %v505 = vpack.c.b16 %v493, %v493
    %v506 = vpack.c.b16 %v494, %v494
    %v507 = vpack.c.b16 %v495, %v495
    %v508 = vpack.c.b16 %v496, %v496
    %v509 = vpack.c.b16 %v497, %v497
    %v510 = vpack.c.b16 %v498, %v498
    %v511 = vpack.c.b16 %v499, %v499
    %v512 = vpack.c.b16 %v500, %v500
    %v513 = vpack.c.b16 %v501, %v501
    %v514 = vpack.c.b16 %v502, %v502
    %v515 = vpack.c.b16 %v503, %v503
    %v516 = vpack.c.b16 %v504, %v504
    %529 = vst.msk [vmem:[#allocation2 + $0x8] sm:$0xf] %vm464, %v505
    %530 = vst.msk [vmem:[#allocation2 + $0xc] sm:$0xf] %vm464, %v506
    %531 = vst.msk [vmem:[#allocation2 + $0x10] sm:$0xf] %vm464, %v507
    %532 = vst.msk [vmem:[#allocation2 + $0x14] sm:$0xf] %vm464, %v508
    %533 = vst.msk [vmem:[#allocation2 + $0x18] sm:$0xf] %vm464, %v509
    %534 = vst.msk [vmem:[#allocation2 + $0x1c] sm:$0xf] %vm464, %v510
    %535 = vst.msk [vmem:[#allocation2 + $0x20] sm:$0xf] %vm464, %v511
    %536 = vst.msk [vmem:[#allocation2 + $0x24] sm:$0xf] %vm464, %v512
    %537 = vst.msk [vmem:[#allocation2 + $0x28] sm:$0xf] %vm464, %v513
    %538 = vst.msk [vmem:[#allocation2 + $0x2c] sm:$0xf] %vm464, %v514
    %539 = vst.msk [vmem:[#allocation2 + $0x30] sm:$0xf] %vm464, %v515
    %540 = vst.msk [vmem:[#allocation2 + $0x34] sm:$0xf] %vm464, %v516
    %v541 = vld [vmem:[#allocation2] sm:$0xf]
    %v542 = vld [vmem:[#allocation2 + $0x4] sm:$0xf]
    %v543 = vld [vmem:[#allocation2 + $0x8] sm:$0xf]
    %v544 = vld [vmem:[#allocation2 + $0xc] sm:$0xf]
    %v545 = vld [vmem:[#allocation2 + $0x10] sm:$0xf]
    %v546 = vld [vmem:[#allocation2 + $0x14] sm:$0xf]
    %v547 = vld [vmem:[#allocation2 + $0x18] sm:$0xf]
    %v548 = vld [vmem:[#allocation2 + $0x1c] sm:$0xf]
    %v549 = vld [vmem:[#allocation2 + $0x20] sm:$0xf]
    %v550 = vld [vmem:[#allocation2 + $0x24] sm:$0xf]
    %v551 = vld [vmem:[#allocation2 + $0x28] sm:$0xf]
    %v552 = vld [vmem:[#allocation2 + $0x2c] sm:$0xf]
    %v553 = vld [vmem:[%s3] sm:$0xf]
    %v554 = vld [vmem:[%s3 + $0x4] sm:$0xf]
    %v555 = vld [vmem:[%s3 + $0x8] sm:$0xf]
    %v556 = vld [vmem:[%s3 + $0xc] sm:$0xf]
    %v569 = vunpack.c.l.b16 %v541
    %v570 = vunpack.c.l.b16 %v542
    %v571 = vunpack.c.l.b16 %v543
    %v572 = vunpack.c.l.b16 %v544
    %v573 = vunpack.c.l.b16 %v545
    %v574 = vunpack.c.l.b16 %v546
    %v575 = vunpack.c.l.b16 %v547
    %v576 = vunpack.c.l.b16 %v548
    %v577 = vunpack.c.l.b16 %v549
    %v578 = vunpack.c.l.b16 %v550
    %v579 = vunpack.c.l.b16 %v551
    %v580 = vunpack.c.l.b16 %v552
    %v581 = vpack.c.b16 %v570, %v569
    %v582 = vpack.c.b16 %v572, %v571
    %v583 = vpack.c.b16 %v574, %v573
    %v584 = vpack.c.b16 %v576, %v575
    %v585 = vpack.c.b16 %v578, %v577
    %v586 = vpack.c.b16 %v580, %v579
    %v591 = vunpack.c.l.b16 %v553
    %v592 = vunpack.c.l.b16 %v554
    %v593 = vunpack.c.l.b16 %v555
    %v594 = vunpack.c.l.b16 %v556
    %v595 = vpack.c.b16 %v592, %v591
    %v596 = vpack.c.b16 %v594, %v593
    %vm599 = vcmask 261120
    %v601 = vsel %vm599, %v581, 0
    %v604 = vsel %vm599, %v582, 0
    %v607 = vsel %vm599, %v583, 0
    %v610 = vsel %vm599, %v584, 0
    %v613 = vsel %vm599, %v585, 0
    %v616 = vsel %vm599, %v586, 0
    %618 = vmatprep.subr.bf16.mxu0 0
    %619 = vmatpush1.bf16.msra.mxu0 0
    %620 = vmatprep.subr.bf16.mxu0 0
    %621 = vmatpush1.bf16.msra.mxu0 0
    %622 = vmatprep.subr.bf16.mxu0 0
    %623 = vmatpush1.bf16.msra.mxu0 0
    %624 = vmatprep.subr.bf16.mxu0 0
    %625 = vmatpush1.bf16.msra.mxu0 0
    %626 = vmatprep.subr.bf16.mxu0 0
    %627 = vmatpush1.bf16.msra.mxu0 0
    %628 = vmatprep.subr.bf16.mxu0 0
    %629 = vmatpush1.bf16.msra.mxu0 0
    %630 = vmatprep.subr.bf16.mxu0 0
    %631 = vmatpush1.bf16.msra.mxu0 %v596
    %632 = vmatprep.subr.bf16.mxu0 0
    %633 = vmatpush1.bf16.msra.mxu0 %v595
    %634 = vmatprep.subr.bf16.mxu0 0
    %635 = vmatpush2.bf16.msra.mxu0 0
    %636 = vmatprep.subr.bf16.mxu0 0
    %637 = vmatpush2.bf16.msra.mxu0 0
    %638 = vmatprep.subr.bf16.mxu0 0
    %639 = vmatpush2.bf16.msra.mxu0 0
    %640 = vmatprep.subr.bf16.mxu0 0
    %641 = vmatpush2.bf16.msra.mxu0 0
    %642 = vmatprep.subr.bf16.mxu0 0
    %643 = vmatpush2.bf16.msra.mxu0 0
    %644 = vmatprep.subr.bf16.mxu0 0
    %645 = vmatpush2.bf16.msra.mxu0 0
    %646 = vmatprep.subr.bf16.mxu0 0
    %647 = vmatpush2.bf16.msra.mxu0 0
    %648 = vmatprep.subr.bf16.mxu0 0
    %649 = vmatpush2.bf16.msra.mxu0 0
    %650 = vmatprep.mubr.bf16.mxu0 0
    %651 = vmatmul.mubr.bf16.gmra.mxu0 %v601
    %v652 = vpop.f32.mrf.mxu0
    %v653 = vadd.f32 0.0, %v652
    %v654 = vpop.f32.mrf.mxu0
    %v655 = vpop.f32.mrf.mxu0
    %v656 = vadd.f32 0.0, %v655
    %v657 = vpop.f32.mrf.mxu0
    %658 = vmatprep.mubr.bf16.mxu0 0
    %659 = vmatmul.mubr.bf16.gmra.mxu0 %v604
    %v660 = vpop.f32.mrf.mxu0
    %v661 = vadd.f32 0.0, %v660
    %v662 = vpop.f32.mrf.mxu0
    %v663 = vpop.f32.mrf.mxu0
    %v664 = vadd.f32 0.0, %v663
    %v665 = vpop.f32.mrf.mxu0
    %666 = vmatprep.mubr.bf16.mxu0 0
    %667 = vmatmul.mubr.bf16.gmra.mxu0 %v607
    %v668 = vpop.f32.mrf.mxu0
    %v669 = vadd.f32 0.0, %v668
    %v670 = vpop.f32.mrf.mxu0
    %v671 = vpop.f32.mrf.mxu0
    %v672 = vadd.f32 0.0, %v671
    %v673 = vpop.f32.mrf.mxu0
    %674 = vmatprep.mubr.bf16.mxu0 0
    %675 = vmatmul.mubr.bf16.gmra.mxu0 %v610
    %v676 = vpop.f32.mrf.mxu0
    %v677 = vadd.f32 0.0, %v676
    %v678 = vpop.f32.mrf.mxu0
    %v679 = vpop.f32.mrf.mxu0
    %v680 = vadd.f32 0.0, %v679
    %v681 = vpop.f32.mrf.mxu0
    %682 = vmatprep.mubr.bf16.mxu0 0
    %683 = vmatmul.mubr.bf16.gmra.mxu0 %v613
    %v684 = vpop.f32.mrf.mxu0
    %v685 = vadd.f32 0.0, %v684
    %v686 = vpop.f32.mrf.mxu0
    %v687 = vpop.f32.mrf.mxu0
    %v688 = vadd.f32 0.0, %v687
    %v689 = vpop.f32.mrf.mxu0
    %690 = vmatprep.mubr.bf16.mxu0 0
    %691 = vmatmul.mubr.bf16.gmra.mxu0 %v616
    %v692 = vpop.f32.mrf.mxu0
    %v693 = vadd.f32 0.0, %v692
    %v694 = vpop.f32.mrf.mxu0
    %v695 = vpop.f32.mrf.mxu0
    %v696 = vadd.f32 0.0, %v695
    %v697 = vpop.f32.mrf.mxu0
    %698 = vdwg.mxu0
    %v699 = vadd.f32 %v33, %v653
    %v700 = vadd.f32 %v33, %v656
    %v701 = vadd.f32 %v33, %v661
    %v702 = vadd.f32 %v33, %v664
    %v703 = vadd.f32 %v33, %v669
    %v704 = vadd.f32 %v33, %v672
    %v705 = vadd.f32 %v33, %v677
    %v706 = vadd.f32 %v33, %v680
    %v707 = vadd.f32 %v33, %v685
    %v708 = vadd.f32 %v33, %v688
    %v709 = vadd.f32 %v33, %v693
    %v710 = vadd.f32 %v33, %v696
    %v711 = vld [vmem:[#allocation2 + $0x8] sm:$0xf]
    %v712 = vld [vmem:[#allocation2 + $0xc] sm:$0xf]
    %v713 = vld [vmem:[#allocation2 + $0x10] sm:$0xf]
    %v714 = vld [vmem:[#allocation2 + $0x14] sm:$0xf]
    %v715 = vld [vmem:[#allocation2 + $0x18] sm:$0xf]
    %v716 = vld [vmem:[#allocation2 + $0x1c] sm:$0xf]
    %v717 = vld [vmem:[#allocation2 + $0x20] sm:$0xf]
    %v718 = vld [vmem:[#allocation2 + $0x24] sm:$0xf]
    %v719 = vld [vmem:[#allocation2 + $0x28] sm:$0xf]
    %v720 = vld [vmem:[#allocation2 + $0x2c] sm:$0xf]
    %v721 = vld [vmem:[#allocation2 + $0x30] sm:$0xf]
    %v722 = vld [vmem:[#allocation2 + $0x34] sm:$0xf]
    %v723 = vld [vmem:[%s3 + $0x10] sm:$0xf]
    %v724 = vld [vmem:[%s3 + $0x14] sm:$0xf]
    %v725 = vld [vmem:[%s3 + $0x18] sm:$0xf]
    %v726 = vld [vmem:[%s3 + $0x1c] sm:$0xf]
    %v739 = vunpack.c.l.b16 %v711
    %v740 = vunpack.c.l.b16 %v712
    %v741 = vunpack.c.l.b16 %v713
    %v742 = vunpack.c.l.b16 %v714
    %v743 = vunpack.c.l.b16 %v715
    %v744 = vunpack.c.l.b16 %v716
    %v745 = vunpack.c.l.b16 %v717
    %v746 = vunpack.c.l.b16 %v718
    %v747 = vunpack.c.l.b16 %v719
    %v748 = vunpack.c.l.b16 %v720
    %v749 = vunpack.c.l.b16 %v721
    %v750 = vunpack.c.l.b16 %v722
    %v751 = vpack.c.b16 %v740, %v739
    %v752 = vpack.c.b16 %v742, %v741
    %v753 = vpack.c.b16 %v744, %v743
    %v754 = vpack.c.b16 %v746, %v745
    %v755 = vpack.c.b16 %v748, %v747
    %v756 = vpack.c.b16 %v750, %v749
    %v761 = vunpack.c.l.b16 %v723
    %v762 = vunpack.c.l.b16 %v724
    %v763 = vunpack.c.l.b16 %v725
    %v764 = vunpack.c.l.b16 %v726
    %v765 = vpack.c.b16 %v762, %v761
    %v766 = vpack.c.b16 %v764, %v763
    %v770 = vsel %vm599, %v751, 0
    %v773 = vsel %vm599, %v752, 0
    %v776 = vsel %vm599, %v753, 0
    %v779 = vsel %vm599, %v754, 0
    %v782 = vsel %vm599, %v755, 0
    %v785 = vsel %vm599, %v756, 0
    %787 = vmatprep.subr.bf16.mxu0 0
    %788 = vmatpush1.bf16.msra.mxu0 0
    %789 = vmatprep.subr.bf16.mxu0 0
    %790 = vmatpush1.bf16.msra.mxu0 0
    %791 = vmatprep.subr.bf16.mxu0 0
    %792 = vmatpush1.bf16.msra.mxu0 0
    %793 = vmatprep.subr.bf16.mxu0 0
    %794 = vmatpush1.bf16.msra.mxu0 0
    %795 = vmatprep.subr.bf16.mxu0 0
    %796 = vmatpush1.bf16.msra.mxu0 0
    %797 = vmatprep.subr.bf16.mxu0 0
    %798 = vmatpush1.bf16.msra.mxu0 0
    %799 = vmatprep.subr.bf16.mxu0 0
    %800 = vmatpush1.bf16.msra.mxu0 %v766
    %801 = vmatprep.subr.bf16.mxu0 0
    %802 = vmatpush1.bf16.msra.mxu0 %v765
    %803 = vmatprep.subr.bf16.mxu0 0
    %804 = vmatpush2.bf16.msra.mxu0 0
    %805 = vmatprep.subr.bf16.mxu0 0
    %806 = vmatpush2.bf16.msra.mxu0 0
    %807 = vmatprep.subr.bf16.mxu0 0
    %808 = vmatpush2.bf16.msra.mxu0 0
    %809 = vmatprep.subr.bf16.mxu0 0
    %810 = vmatpush2.bf16.msra.mxu0 0
    %811 = vmatprep.subr.bf16.mxu0 0
    %812 = vmatpush2.bf16.msra.mxu0 0
    %813 = vmatprep.subr.bf16.mxu0 0
    %814 = vmatpush2.bf16.msra.mxu0 0
    %815 = vmatprep.subr.bf16.mxu0 0
    %816 = vmatpush2.bf16.msra.mxu0 0
    %817 = vmatprep.subr.bf16.mxu0 0
    %818 = vmatpush2.bf16.msra.mxu0 0
    %819 = vmatprep.mubr.bf16.mxu0 0
    %820 = vmatmul.mubr.bf16.gmra.mxu0 %v770
    %v821 = vpop.f32.mrf.mxu0
    %v822 = vadd.f32 0.0, %v821
    %v823 = vpop.f32.mrf.mxu0
    %v824 = vpop.f32.mrf.mxu0
    %v825 = vadd.f32 0.0, %v824
    %v826 = vpop.f32.mrf.mxu0
    %827 = vmatprep.mubr.bf16.mxu0 0
    %828 = vmatmul.mubr.bf16.gmra.mxu0 %v773
    %v829 = vpop.f32.mrf.mxu0
    %v830 = vadd.f32 0.0, %v829
    %v831 = vpop.f32.mrf.mxu0
    %v832 = vpop.f32.mrf.mxu0
    %v833 = vadd.f32 0.0, %v832
    %v834 = vpop.f32.mrf.mxu0
    %835 = vmatprep.mubr.bf16.mxu0 0
    %836 = vmatmul.mubr.bf16.gmra.mxu0 %v776
    %v837 = vpop.f32.mrf.mxu0
    %v838 = vadd.f32 0.0, %v837
    %v839 = vpop.f32.mrf.mxu0
    %v840 = vpop.f32.mrf.mxu0
    %v841 = vadd.f32 0.0, %v840
    %v842 = vpop.f32.mrf.mxu0
    %843 = vmatprep.mubr.bf16.mxu0 0
    %844 = vmatmul.mubr.bf16.gmra.mxu0 %v779
    %v845 = vpop.f32.mrf.mxu0
    %v846 = vadd.f32 0.0, %v845
    %v847 = vpop.f32.mrf.mxu0
    %v848 = vpop.f32.mrf.mxu0
    %v849 = vadd.f32 0.0, %v848
    %v850 = vpop.f32.mrf.mxu0
    %851 = vmatprep.mubr.bf16.mxu0 0
    %852 = vmatmul.mubr.bf16.gmra.mxu0 %v782
    %v853 = vpop.f32.mrf.mxu0
    %v854 = vadd.f32 0.0, %v853
    %v855 = vpop.f32.mrf.mxu0
    %v856 = vpop.f32.mrf.mxu0
    %v857 = vadd.f32 0.0, %v856
    %v858 = vpop.f32.mrf.mxu0
    %859 = vmatprep.mubr.bf16.mxu0 0
    %860 = vmatmul.mubr.bf16.gmra.mxu0 %v785
    %v861 = vpop.f32.mrf.mxu0
    %v862 = vadd.f32 0.0, %v861
    %v863 = vpop.f32.mrf.mxu0
    %v864 = vpop.f32.mrf.mxu0
    %v865 = vadd.f32 0.0, %v864
    %v866 = vpop.f32.mrf.mxu0
    %867 = vdwg.mxu0
    %v868 = vadd.f32 %v699, %v822
    %v869 = vadd.f32 %v700, %v825
    %v870 = vadd.f32 %v701, %v830
    %v871 = vadd.f32 %v702, %v833
    %v872 = vadd.f32 %v703, %v838
    %v873 = vadd.f32 %v704, %v841
    %v874 = vadd.f32 %v705, %v846
    %v875 = vadd.f32 %v706, %v849
    %v876 = vadd.f32 %v707, %v854
    %v877 = vadd.f32 %v708, %v857
    %v878 = vadd.f32 %v709, %v862
    %v879 = vadd.f32 %v710, %v865
    %v880 = vld [vmem:[#allocation2 + $0x10] sm:$0xf]
    %v881 = vld [vmem:[#allocation2 + $0x14] sm:$0xf]
    %v882 = vld [vmem:[#allocation2 + $0x18] sm:$0xf]
    %v883 = vld [vmem:[#allocation2 + $0x1c] sm:$0xf]
    %v884 = vld [vmem:[#allocation2 + $0x20] sm:$0xf]
    %v885 = vld [vmem:[#allocation2 + $0x24] sm:$0xf]
    %v886 = vld [vmem:[#allocation2 + $0x28] sm:$0xf]
    %v887 = vld [vmem:[#allocation2 + $0x2c] sm:$0xf]
    %v888 = vld [vmem:[#allocation2 + $0x30] sm:$0xf]
    %v889 = vld [vmem:[#allocation2 + $0x34] sm:$0xf]
    %v890 = vld [vmem:[#allocation2 + $0x38] sm:$0xf]
    %v891 = vld [vmem:[#allocation2 + $0x3c] sm:$0xf]
    %v892 = vld [vmem:[%s3 + $0x20] sm:$0xf]
    %v893 = vld [vmem:[%s3 + $0x24] sm:$0xf]
    %v894 = vld [vmem:[%s3 + $0x28] sm:$0xf]
    %v895 = vld [vmem:[%s3 + $0x2c] sm:$0xf]
    %v908 = vunpack.c.l.b16 %v880
    %v909 = vunpack.c.l.b16 %v881
    %v910 = vunpack.c.l.b16 %v882
    %v911 = vunpack.c.l.b16 %v883
    %v912 = vunpack.c.l.b16 %v884
    %v913 = vunpack.c.l.b16 %v885
    %v914 = vunpack.c.l.b16 %v886
    %v915 = vunpack.c.l.b16 %v887
    %v916 = vunpack.c.l.b16 %v888
    %v917 = vunpack.c.l.b16 %v889
    %v918 = vunpack.c.l.b16 %v890
    %v919 = vunpack.c.l.b16 %v891
    %v920 = vpack.c.b16 %v909, %v908
    %v921 = vpack.c.b16 %v911, %v910
    %v922 = vpack.c.b16 %v913, %v912
    %v923 = vpack.c.b16 %v915, %v914
    %v924 = vpack.c.b16 %v917, %v916
    %v925 = vpack.c.b16 %v919, %v918
    %v930 = vunpack.c.l.b16 %v892
    %v931 = vunpack.c.l.b16 %v893
    %v932 = vunpack.c.l.b16 %v894
    %v933 = vunpack.c.l.b16 %v895
    %v934 = vpack.c.b16 %v931, %v930
    %v935 = vpack.c.b16 %v933, %v932
    %v939 = vsel %vm599, %v920, 0
    %v942 = vsel %vm599, %v921, 0
    %v945 = vsel %vm599, %v922, 0
    %v948 = vsel %vm599, %v923, 0
    %v951 = vsel %vm599, %v924, 0
    %v954 = vsel %vm599, %v925, 0
    %956 = vmatprep.subr.bf16.mxu0 0
    %957 = vmatpush1.bf16.msra.mxu0 0
    %958 = vmatprep.subr.bf16.mxu0 0
    %959 = vmatpush1.bf16.msra.mxu0 0
    %960 = vmatprep.subr.bf16.mxu0 0
    %961 = vmatpush1.bf16.msra.mxu0 0
    %962 = vmatprep.subr.bf16.mxu0 0
    %963 = vmatpush1.bf16.msra.mxu0 0
    %964 = vmatprep.subr.bf16.mxu0 0
    %965 = vmatpush1.bf16.msra.mxu0 0
    %966 = vmatprep.subr.bf16.mxu0 0
    %967 = vmatpush1.bf16.msra.mxu0 0
    %968 = vmatprep.subr.bf16.mxu0 0
    %969 = vmatpush1.bf16.msra.mxu0 %v935
    %970 = vmatprep.subr.bf16.mxu0 0
    %971 = vmatpush1.bf16.msra.mxu0 %v934
    %972 = vmatprep.subr.bf16.mxu0 0
    %973 = vmatpush2.bf16.msra.mxu0 0
    %974 = vmatprep.subr.bf16.mxu0 0
    %975 = vmatpush2.bf16.msra.mxu0 0
    %976 = vmatprep.subr.bf16.mxu0 0
    %977 = vmatpush2.bf16.msra.mxu0 0
    %978 = vmatprep.subr.bf16.mxu0 0
    %979 = vmatpush2.bf16.msra.mxu0 0
    %980 = vmatprep.subr.bf16.mxu0 0
    %981 = vmatpush2.bf16.msra.mxu0 0
    %982 = vmatprep.subr.bf16.mxu0 0
    %983 = vmatpush2.bf16.msra.mxu0 0
    %984 = vmatprep.subr.bf16.mxu0 0
    %985 = vmatpush2.bf16.msra.mxu0 0
    %986 = vmatprep.subr.bf16.mxu0 0
    %987 = vmatpush2.bf16.msra.mxu0 0
    %988 = vmatprep.mubr.bf16.mxu0 0
    %989 = vmatmul.mubr.bf16.gmra.mxu0 %v939
    %v990 = vpop.f32.mrf.mxu0
    %v991 = vadd.f32 0.0, %v990
    %v992 = vpop.f32.mrf.mxu0
    %v993 = vpop.f32.mrf.mxu0
    %v994 = vadd.f32 0.0, %v993
    %v995 = vpop.f32.mrf.mxu0
    %996 = vmatprep.mubr.bf16.mxu0 0
    %997 = vmatmul.mubr.bf16.gmra.mxu0 %v942
    %v998 = vpop.f32.mrf.mxu0
    %v999 = vadd.f32 0.0, %v998
    %v1000 = vpop.f32.mrf.mxu0
    %v1001 = vpop.f32.mrf.mxu0
    %v1002 = vadd.f32 0.0, %v1001
    %v1003 = vpop.f32.mrf.mxu0
    %1004 = vmatprep.mubr.bf16.mxu0 0
    %1005 = vmatmul.mubr.bf16.gmra.mxu0 %v945
    %v1006 = vpop.f32.mrf.mxu0
    %v1007 = vadd.f32 0.0, %v1006
    %v1008 = vpop.f32.mrf.mxu0
    %v1009 = vpop.f32.mrf.mxu0
    %v1010 = vadd.f32 0.0, %v1009
    %v1011 = vpop.f32.mrf.mxu0
    %1012 = vmatprep.mubr.bf16.mxu0 0
    %1013 = vmatmul.mubr.bf16.gmra.mxu0 %v948
    %v1014 = vpop.f32.mrf.mxu0
    %v1015 = vadd.f32 0.0, %v1014
    %v1016 = vpop.f32.mrf.mxu0
    %v1017 = vpop.f32.mrf.mxu0
    %v1018 = vadd.f32 0.0, %v1017
    %v1019 = vpop.f32.mrf.mxu0
    %1020 = vmatprep.mubr.bf16.mxu0 0
    %1021 = vmatmul.mubr.bf16.gmra.mxu0 %v951
    %v1022 = vpop.f32.mrf.mxu0
    %v1023 = vadd.f32 0.0, %v1022
    %v1024 = vpop.f32.mrf.mxu0
    %v1025 = vpop.f32.mrf.mxu0
    %v1026 = vadd.f32 0.0, %v1025
    %v1027 = vpop.f32.mrf.mxu0
    %1028 = vmatprep.mubr.bf16.mxu0 0
    %1029 = vmatmul.mubr.bf16.gmra.mxu0 %v954
    %v1030 = vpop.f32.mrf.mxu0
    %v1031 = vadd.f32 0.0, %v1030
    %v1032 = vpop.f32.mrf.mxu0
    %v1033 = vpop.f32.mrf.mxu0
    %v1034 = vadd.f32 0.0, %v1033
    %v1035 = vpop.f32.mrf.mxu0
    %1036 = vdwg.mxu0
    %v1037 = vadd.f32 %v868, %v991
    %v1038 = vadd.f32 %v869, %v994
    %v1039 = vadd.f32 %v870, %v999
    %v1040 = vadd.f32 %v871, %v1002
    %v1041 = vadd.f32 %v872, %v1007
    %v1042 = vadd.f32 %v873, %v1010
    %v1043 = vadd.f32 %v874, %v1015
    %v1044 = vadd.f32 %v875, %v1018
    %v1045 = vadd.f32 %v876, %v1023
    %v1046 = vadd.f32 %v877, %v1026
    %v1047 = vadd.f32 %v878, %v1031
    %v1048 = vadd.f32 %v879, %v1034
    %v1049 = vmax.f32 %v1037, 0.0
    %v1050 = vmax.f32 %v1038, 0.0
    %v1051 = vmax.f32 %v1039, 0.0
    %v1052 = vmax.f32 %v1040, 0.0
    %v1053 = vmax.f32 %v1041, 0.0
    %v1054 = vmax.f32 %v1042, 0.0
    %v1055 = vmax.f32 %v1043, 0.0
    %v1056 = vmax.f32 %v1044, 0.0
    %v1057 = vmax.f32 %v1045, 0.0
    %v1058 = vmax.f32 %v1046, 0.0
    %v1059 = vmax.f32 %v1047, 0.0
    %v1060 = vmax.f32 %v1048, 0.0
    %v1061 = vpack.c.bf16 %v1050, %v1049
    %v1062 = vpack.c.bf16 %v1052, %v1051
    %v1063 = vpack.c.bf16 %v1054, %v1053
    %v1064 = vpack.c.bf16 %v1056, %v1055
    %v1065 = vpack.c.bf16 %v1058, %v1057
    %v1066 = vpack.c.bf16 %v1060, %v1059
    %v1073 = vunpack.c.l.b16 %v1061
    %v1074 = vunpack.c.h.b16 %v1061
    %v1075 = vunpack.c.l.b16 %v1062
    %v1076 = vunpack.c.h.b16 %v1062
    %v1077 = vunpack.c.l.b16 %v1063
    %v1078 = vunpack.c.h.b16 %v1063
    %v1079 = vunpack.c.l.b16 %v1064
    %v1080 = vunpack.c.h.b16 %v1064
    %v1081 = vunpack.c.l.b16 %v1065
    %v1082 = vunpack.c.h.b16 %v1065
    %v1083 = vunpack.c.l.b16 %v1066
    %v1084 = vunpack.c.h.b16 %v1066
    %v1085 = vpack.c.b16 %v1073, %v1073
    %v1086 = vpack.c.b16 %v1074, %v1074
    %v1087 = vpack.c.b16 %v1075, %v1075
    %v1088 = vpack.c.b16 %v1076, %v1076
    %v1089 = vpack.c.b16 %v1077, %v1077
    %v1090 = vpack.c.b16 %v1078, %v1078
    %v1091 = vpack.c.b16 %v1079, %v1079
    %v1092 = vpack.c.b16 %v1080, %v1080
    %v1093 = vpack.c.b16 %v1081, %v1081
    %v1094 = vpack.c.b16 %v1082, %v1082
    %v1095 = vpack.c.b16 %v1083, %v1083
    %v1096 = vpack.c.b16 %v1084, %v1084
    %1109 = vst.msk [vmem:[#allocation2 + $0x8] sm:$0xf] %vm464, %v1085
    %1110 = vst.msk [vmem:[#allocation2 + $0xc] sm:$0xf] %vm464, %v1086
    %1111 = vst.msk [vmem:[#allocation2 + $0x10] sm:$0xf] %vm464, %v1087
    %1112 = vst.msk [vmem:[#allocation2 + $0x14] sm:$0xf] %vm464, %v1088
    %1113 = vst.msk [vmem:[#allocation2 + $0x18] sm:$0xf] %vm464, %v1089
    %1114 = vst.msk [vmem:[#allocation2 + $0x1c] sm:$0xf] %vm464, %v1090
    %1115 = vst.msk [vmem:[#allocation2 + $0x20] sm:$0xf] %vm464, %v1091
    %1116 = vst.msk [vmem:[#allocation2 + $0x24] sm:$0xf] %vm464, %v1092
    %1117 = vst.msk [vmem:[#allocation2 + $0x28] sm:$0xf] %vm464, %v1093
    %1118 = vst.msk [vmem:[#allocation2 + $0x2c] sm:$0xf] %vm464, %v1094
    %1119 = vst.msk [vmem:[#allocation2 + $0x30] sm:$0xf] %vm464, %v1095
    %1120 = vst.msk [vmem:[#allocation2 + $0x34] sm:$0xf] %vm464, %v1096
    %v1121 = vld [vmem:[#allocation2] sm:$0xf]
    %v1122 = vld [vmem:[#allocation2 + $0x4] sm:$0xf]
    %v1123 = vld [vmem:[#allocation2 + $0x8] sm:$0xf]
    %v1124 = vld [vmem:[#allocation2 + $0xc] sm:$0xf]
    %v1125 = vld [vmem:[#allocation2 + $0x10] sm:$0xf]
    %v1126 = vld [vmem:[#allocation2 + $0x14] sm:$0xf]
    %v1127 = vld [vmem:[#allocation2 + $0x18] sm:$0xf]
    %v1128 = vld [vmem:[#allocation2 + $0x1c] sm:$0xf]
    %v1129 = vld [vmem:[#allocation2 + $0x20] sm:$0xf]
    %v1130 = vld [vmem:[#allocation2 + $0x24] sm:$0xf]
    %v1131 = vld [vmem:[#allocation2 + $0x28] sm:$0xf]
    %v1132 = vld [vmem:[#allocation2 + $0x2c] sm:$0xf]
    %v1133 = vld [vmem:[%s3] sm:$0xf]
    %v1134 = vld [vmem:[%s3 + $0x4] sm:$0xf]
    %v1135 = vld [vmem:[%s3 + $0x8] sm:$0xf]
    %v1136 = vld [vmem:[%s3 + $0xc] sm:$0xf]
    %v1149 = vunpack.c.l.b16 %v1121
    %v1150 = vunpack.c.l.b16 %v1122
    %v1151 = vunpack.c.l.b16 %v1123
    %v1152 = vunpack.c.l.b16 %v1124
    %v1153 = vunpack.c.l.b16 %v1125
    %v1154 = vunpack.c.l.b16 %v1126
    %v1155 = vunpack.c.l.b16 %v1127
    %v1156 = vunpack.c.l.b16 %v1128
    %v1157 = vunpack.c.l.b16 %v1129
    %v1158 = vunpack.c.l.b16 %v1130
    %v1159 = vunpack.c.l.b16 %v1131
    %v1160 = vunpack.c.l.b16 %v1132
    %v1161 = vpack.c.b16 %v1150, %v1149
    %v1162 = vpack.c.b16 %v1152, %v1151
    %v1163 = vpack.c.b16 %v1154, %v1153
    %v1164 = vpack.c.b16 %v1156, %v1155
    %v1165 = vpack.c.b16 %v1158, %v1157
    %v1166 = vpack.c.b16 %v1160, %v1159
    %v1171 = vunpack.c.l.b16 %v1133
    %v1172 = vunpack.c.l.b16 %v1134
    %v1173 = vunpack.c.l.b16 %v1135
    %v1174 = vunpack.c.l.b16 %v1136
    %v1175 = vpack.c.b16 %v1172, %v1171
    %v1176 = vpack.c.b16 %v1174, %v1173
    %v1180 = vsel %vm599, %v1161, 0
    %v1183 = vsel %vm599, %v1162, 0
    %v1186 = vsel %vm599, %v1163, 0
    %v1189 = vsel %vm599, %v1164, 0
    %v1192 = vsel %vm599, %v1165, 0
    %v1195 = vsel %vm599, %v1166, 0
    %1197 = vmatprep.subr.bf16.mxu0 0
    %1198 = vmatpush1.bf16.msra.mxu0 0
    %1199 = vmatprep.subr.bf16.mxu0 0
    %1200 = vmatpush1.bf16.msra.mxu0 0
    %1201 = vmatprep.subr.bf16.mxu0 0
    %1202 = vmatpush1.bf16.msra.mxu0 0
    %1203 = vmatprep.subr.bf16.mxu0 0
    %1204 = vmatpush1.bf16.msra.mxu0 0
    %1205 = vmatprep.subr.bf16.mxu0 0
    %1206 = vmatpush1.bf16.msra.mxu0 0
    %1207 = vmatprep.subr.bf16.mxu0 0
    %1208 = vmatpush1.bf16.msra.mxu0 0
    %1209 = vmatprep.subr.bf16.mxu0 0
    %1210 = vmatpush1.bf16.msra.mxu0 %v1176
    %1211 = vmatprep.subr.bf16.mxu0 0
    %1212 = vmatpush1.bf16.msra.mxu0 %v1175
    %1213 = vmatprep.subr.bf16.mxu0 0
    %1214 = vmatpush2.bf16.msra.mxu0 0
    %1215 = vmatprep.subr.bf16.mxu0 0
    %1216 = vmatpush2.bf16.msra.mxu0 0
    %1217 = vmatprep.subr.bf16.mxu0 0
    %1218 = vmatpush2.bf16.msra.mxu0 0
    %1219 = vmatprep.subr.bf16.mxu0 0
    %1220 = vmatpush2.bf16.msra.mxu0 0
    %1221 = vmatprep.subr.bf16.mxu0 0
    %1222 = vmatpush2.bf16.msra.mxu0 0
    %1223 = vmatprep.subr.bf16.mxu0 0
    %1224 = vmatpush2.bf16.msra.mxu0 0
    %1225 = vmatprep.subr.bf16.mxu0 0
    %1226 = vmatpush2.bf16.msra.mxu0 0
    %1227 = vmatprep.subr.bf16.mxu0 0
    %1228 = vmatpush2.bf16.msra.mxu0 0
    %1229 = vmatprep.mubr.bf16.mxu0 0
    %1230 = vmatmul.mubr.bf16.gmra.mxu0 %v1180
    %v1231 = vpop.f32.mrf.mxu0
    %v1232 = vadd.f32 0.0, %v1231
    %v1233 = vpop.f32.mrf.mxu0
    %v1234 = vpop.f32.mrf.mxu0
    %v1235 = vadd.f32 0.0, %v1234
    %v1236 = vpop.f32.mrf.mxu0
    %1237 = vmatprep.mubr.bf16.mxu0 0
    %1238 = vmatmul.mubr.bf16.gmra.mxu0 %v1183
    %v1239 = vpop.f32.mrf.mxu0
    %v1240 = vadd.f32 0.0, %v1239
    %v1241 = vpop.f32.mrf.mxu0
    %v1242 = vpop.f32.mrf.mxu0
    %v1243 = vadd.f32 0.0, %v1242
    %v1244 = vpop.f32.mrf.mxu0
    %1245 = vmatprep.mubr.bf16.mxu0 0
    %1246 = vmatmul.mubr.bf16.gmra.mxu0 %v1186
    %v1247 = vpop.f32.mrf.mxu0
    %v1248 = vadd.f32 0.0, %v1247
    %v1249 = vpop.f32.mrf.mxu0
    %v1250 = vpop.f32.mrf.mxu0
    %v1251 = vadd.f32 0.0, %v1250
    %v1252 = vpop.f32.mrf.mxu0
    %1253 = vmatprep.mubr.bf16.mxu0 0
    %1254 = vmatmul.mubr.bf16.gmra.mxu0 %v1189
    %v1255 = vpop.f32.mrf.mxu0
    %v1256 = vadd.f32 0.0, %v1255
    %v1257 = vpop.f32.mrf.mxu0
    %v1258 = vpop.f32.mrf.mxu0
    %v1259 = vadd.f32 0.0, %v1258
    %v1260 = vpop.f32.mrf.mxu0
    %1261 = vmatprep.mubr.bf16.mxu0 0
    %1262 = vmatmul.mubr.bf16.gmra.mxu0 %v1192
    %v1263 = vpop.f32.mrf.mxu0
    %v1264 = vadd.f32 0.0, %v1263
    %v1265 = vpop.f32.mrf.mxu0
    %v1266 = vpop.f32.mrf.mxu0
    %v1267 = vadd.f32 0.0, %v1266
    %v1268 = vpop.f32.mrf.mxu0
    %1269 = vmatprep.mubr.bf16.mxu0 0
    %1270 = vmatmul.mubr.bf16.gmra.mxu0 %v1195
    %v1271 = vpop.f32.mrf.mxu0
    %v1272 = vadd.f32 0.0, %v1271
    %v1273 = vpop.f32.mrf.mxu0
    %v1274 = vpop.f32.mrf.mxu0
    %v1275 = vadd.f32 0.0, %v1274
    %v1276 = vpop.f32.mrf.mxu0
    %1277 = vdwg.mxu0
    %v1278 = vadd.f32 %v33, %v1232
    %v1279 = vadd.f32 %v33, %v1235
    %v1280 = vadd.f32 %v33, %v1240
    %v1281 = vadd.f32 %v33, %v1243
    %v1282 = vadd.f32 %v33, %v1248
    %v1283 = vadd.f32 %v33, %v1251
    %v1284 = vadd.f32 %v33, %v1256
    %v1285 = vadd.f32 %v33, %v1259
    %v1286 = vadd.f32 %v33, %v1264
    %v1287 = vadd.f32 %v33, %v1267
    %v1288 = vadd.f32 %v33, %v1272
    %v1289 = vadd.f32 %v33, %v1275
    %v1290 = vld [vmem:[#allocation2 + $0x8] sm:$0xf]
    %v1291 = vld [vmem:[#allocation2 + $0xc] sm:$0xf]
    %v1292 = vld [vmem:[#allocation2 + $0x10] sm:$0xf]
    %v1293 = vld [vmem:[#allocation2 + $0x14] sm:$0xf]
    %v1294 = vld [vmem:[#allocation2 + $0x18] sm:$0xf]
    %v1295 = vld [vmem:[#allocation2 + $0x1c] sm:$0xf]
    %v1296 = vld [vmem:[#allocation2 + $0x20] sm:$0xf]
    %v1297 = vld [vmem:[#allocation2 + $0x24] sm:$0xf]
    %v1298 = vld [vmem:[#allocation2 + $0x28] sm:$0xf]
    %v1299 = vld [vmem:[#allocation2 + $0x2c] sm:$0xf]
    %v1300 = vld [vmem:[#allocation2 + $0x30] sm:$0xf]
    %v1301 = vld [vmem:[#allocation2 + $0x34] sm:$0xf]
    %v1302 = vld [vmem:[%s3 + $0x10] sm:$0xf]
    %v1303 = vld [vmem:[%s3 + $0x14] sm:$0xf]
    %v1304 = vld [vmem:[%s3 + $0x18] sm:$0xf]
    %v1305 = vld [vmem:[%s3 + $0x1c] sm:$0xf]
    %v1318 = vunpack.c.l.b16 %v1290
    %v1319 = vunpack.c.l.b16 %v1291
    %v1320 = vunpack.c.l.b16 %v1292
    %v1321 = vunpack.c.l.b16 %v1293
    %v1322 = vunpack.c.l.b16 %v1294
    %v1323 = vunpack.c.l.b16 %v1295
    %v1324 = vunpack.c.l.b16 %v1296
    %v1325 = vunpack.c.l.b16 %v1297
    %v1326 = vunpack.c.l.b16 %v1298
    %v1327 = vunpack.c.l.b16 %v1299
    %v1328 = vunpack.c.l.b16 %v1300
    %v1329 = vunpack.c.l.b16 %v1301
    %v1330 = vpack.c.b16 %v1319, %v1318
    %v1331 = vpack.c.b16 %v1321, %v1320
    %v1332 = vpack.c.b16 %v1323, %v1322
    %v1333 = vpack.c.b16 %v1325, %v1324
    %v1334 = vpack.c.b16 %v1327, %v1326
    %v1335 = vpack.c.b16 %v1329, %v1328
    %v1340 = vunpack.c.l.b16 %v1302
    %v1341 = vunpack.c.l.b16 %v1303
    %v1342 = vunpack.c.l.b16 %v1304
    %v1343 = vunpack.c.l.b16 %v1305
    %v1344 = vpack.c.b16 %v1341, %v1340
    %v1345 = vpack.c.b16 %v1343, %v1342
    %v1349 = vsel %vm599, %v1330, 0
    %v1352 = vsel %vm599, %v1331, 0
    %v1355 = vsel %vm599, %v1332, 0
    %v1358 = vsel %vm599, %v1333, 0
    %v1361 = vsel %vm599, %v1334, 0
    %v1364 = vsel %vm599, %v1335, 0
    %1366 = vmatprep.subr.bf16.mxu0 0
    %1367 = vmatpush1.bf16.msra.mxu0 0
    %1368 = vmatprep.subr.bf16.mxu0 0
    %1369 = vmatpush1.bf16.msra.mxu0 0
    %1370 = vmatprep.subr.bf16.mxu0 0
    %1371 = vmatpush1.bf16.msra.mxu0 0
    %1372 = vmatprep.subr.bf16.mxu0 0
    %1373 = vmatpush1.bf16.msra.mxu0 0
    %1374 = vmatprep.subr.bf16.mxu0 0
    %1375 = vmatpush1.bf16.msra.mxu0 0
    %1376 = vmatprep.subr.bf16.mxu0 0
    %1377 = vmatpush1.bf16.msra.mxu0 0
    %1378 = vmatprep.subr.bf16.mxu0 0
    %1379 = vmatpush1.bf16.msra.mxu0 %v1345
    %1380 = vmatprep.subr.bf16.mxu0 0
    %1381 = vmatpush1.bf16.msra.mxu0 %v1344
    %1382 = vmatprep.subr.bf16.mxu0 0
    %1383 = vmatpush2.bf16.msra.mxu0 0
    %1384 = vmatprep.subr.bf16.mxu0 0
    %1385 = vmatpush2.bf16.msra.mxu0 0
    %1386 = vmatprep.subr.bf16.mxu0 0
    %1387 = vmatpush2.bf16.msra.mxu0 0
    %1388 = vmatprep.subr.bf16.mxu0 0
    %1389 = vmatpush2.bf16.msra.mxu0 0
    %1390 = vmatprep.subr.bf16.mxu0 0
    %1391 = vmatpush2.bf16.msra.mxu0 0
    %1392 = vmatprep.subr.bf16.mxu0 0
    %1393 = vmatpush2.bf16.msra.mxu0 0
    %1394 = vmatprep.subr.bf16.mxu0 0
    %1395 = vmatpush2.bf16.msra.mxu0 0
    %1396 = vmatprep.subr.bf16.mxu0 0
    %1397 = vmatpush2.bf16.msra.mxu0 0
    %1398 = vmatprep.mubr.bf16.mxu0 0
    %1399 = vmatmul.mubr.bf16.gmra.mxu0 %v1349
    %v1400 = vpop.f32.mrf.mxu0
    %v1401 = vadd.f32 0.0, %v1400
    %v1402 = vpop.f32.mrf.mxu0
    %v1403 = vpop.f32.mrf.mxu0
    %v1404 = vadd.f32 0.0, %v1403
    %v1405 = vpop.f32.mrf.mxu0
    %1406 = vmatprep.mubr.bf16.mxu0 0
    %1407 = vmatmul.mubr.bf16.gmra.mxu0 %v1352
    %v1408 = vpop.f32.mrf.mxu0
    %v1409 = vadd.f32 0.0, %v1408
    %v1410 = vpop.f32.mrf.mxu0
    %v1411 = vpop.f32.mrf.mxu0
    %v1412 = vadd.f32 0.0, %v1411
    %v1413 = vpop.f32.mrf.mxu0
    %1414 = vmatprep.mubr.bf16.mxu0 0
    %1415 = vmatmul.mubr.bf16.gmra.mxu0 %v1355
    %v1416 = vpop.f32.mrf.mxu0
    %v1417 = vadd.f32 0.0, %v1416
    %v1418 = vpop.f32.mrf.mxu0
    %v1419 = vpop.f32.mrf.mxu0
    %v1420 = vadd.f32 0.0, %v1419
    %v1421 = vpop.f32.mrf.mxu0
    %1422 = vmatprep.mubr.bf16.mxu0 0
    %1423 = vmatmul.mubr.bf16.gmra.mxu0 %v1358
    %v1424 = vpop.f32.mrf.mxu0
    %v1425 = vadd.f32 0.0, %v1424
    %v1426 = vpop.f32.mrf.mxu0
    %v1427 = vpop.f32.mrf.mxu0
    %v1428 = vadd.f32 0.0, %v1427
    %v1429 = vpop.f32.mrf.mxu0
    %1430 = vmatprep.mubr.bf16.mxu0 0
    %1431 = vmatmul.mubr.bf16.gmra.mxu0 %v1361
    %v1432 = vpop.f32.mrf.mxu0
    %v1433 = vadd.f32 0.0, %v1432
    %v1434 = vpop.f32.mrf.mxu0
    %v1435 = vpop.f32.mrf.mxu0
    %v1436 = vadd.f32 0.0, %v1435
    %v1437 = vpop.f32.mrf.mxu0
    %1438 = vmatprep.mubr.bf16.mxu0 0
    %1439 = vmatmul.mubr.bf16.gmra.mxu0 %v1364
    %v1440 = vpop.f32.mrf.mxu0
    %v1441 = vadd.f32 0.0, %v1440
    %v1442 = vpop.f32.mrf.mxu0
    %v1443 = vpop.f32.mrf.mxu0
    %v1444 = vadd.f32 0.0, %v1443
    %v1445 = vpop.f32.mrf.mxu0
    %1446 = vdwg.mxu0
    %v1447 = vadd.f32 %v1278, %v1401
    %v1448 = vadd.f32 %v1279, %v1404
    %v1449 = vadd.f32 %v1280, %v1409
    %v1450 = vadd.f32 %v1281, %v1412
    %v1451 = vadd.f32 %v1282, %v1417
    %v1452 = vadd.f32 %v1283, %v1420
    %v1453 = vadd.f32 %v1284, %v1425
    %v1454 = vadd.f32 %v1285, %v1428
    %v1455 = vadd.f32 %v1286, %v1433
    %v1456 = vadd.f32 %v1287, %v1436
    %v1457 = vadd.f32 %v1288, %v1441
    %v1458 = vadd.f32 %v1289, %v1444
    %v1459 = vld [vmem:[#allocation2 + $0x10] sm:$0xf]
    %v1460 = vld [vmem:[#allocation2 + $0x14] sm:$0xf]
    %v1461 = vld [vmem:[#allocation2 + $0x18] sm:$0xf]
    %v1462 = vld [vmem:[#allocation2 + $0x1c] sm:$0xf]
    %v1463 = vld [vmem:[#allocation2 + $0x20] sm:$0xf]
    %v1464 = vld [vmem:[#allocation2 + $0x24] sm:$0xf]
    %v1465 = vld [vmem:[#allocation2 + $0x28] sm:$0xf]
    %v1466 = vld [vmem:[#allocation2 + $0x2c] sm:$0xf]
    %v1467 = vld [vmem:[#allocation2 + $0x30] sm:$0xf]
    %v1468 = vld [vmem:[#allocation2 + $0x34] sm:$0xf]
    %v1469 = vld [vmem:[#allocation2 + $0x38] sm:$0xf]
    %v1470 = vld [vmem:[#allocation2 + $0x3c] sm:$0xf]
    %v1471 = vld [vmem:[%s3 + $0x20] sm:$0xf]
    %v1472 = vld [vmem:[%s3 + $0x24] sm:$0xf]
    %v1473 = vld [vmem:[%s3 + $0x28] sm:$0xf]
    %v1474 = vld [vmem:[%s3 + $0x2c] sm:$0xf]
    %v1487 = vunpack.c.l.b16 %v1459
    %v1488 = vunpack.c.l.b16 %v1460
    %v1489 = vunpack.c.l.b16 %v1461
    %v1490 = vunpack.c.l.b16 %v1462
    %v1491 = vunpack.c.l.b16 %v1463
    %v1492 = vunpack.c.l.b16 %v1464
    %v1493 = vunpack.c.l.b16 %v1465
    %v1494 = vunpack.c.l.b16 %v1466
    %v1495 = vunpack.c.l.b16 %v1467
    %v1496 = vunpack.c.l.b16 %v1468
    %v1497 = vunpack.c.l.b16 %v1469
    %v1498 = vunpack.c.l.b16 %v1470
    %v1499 = vpack.c.b16 %v1488, %v1487
    %v1500 = vpack.c.b16 %v1490, %v1489
    %v1501 = vpack.c.b16 %v1492, %v1491
    %v1502 = vpack.c.b16 %v1494, %v1493
    %v1503 = vpack.c.b16 %v1496, %v1495
    %v1504 = vpack.c.b16 %v1498, %v1497
    %v1509 = vunpack.c.l.b16 %v1471
    %v1510 = vunpack.c.l.b16 %v1472
    %v1511 = vunpack.c.l.b16 %v1473
    %v1512 = vunpack.c.l.b16 %v1474
    %v1513 = vpack.c.b16 %v1510, %v1509
    %v1514 = vpack.c.b16 %v1512, %v1511
    %v1518 = vsel %vm599, %v1499, 0
    %v1521 = vsel %vm599, %v1500, 0
    %v1524 = vsel %vm599, %v1501, 0
    %v1527 = vsel %vm599, %v1502, 0
    %v1530 = vsel %vm599, %v1503, 0
    %v1533 = vsel %vm599, %v1504, 0
    %1535 = vmatprep.subr.bf16.mxu0 0
    %1536 = vmatpush1.bf16.msra.mxu0 0
    %1537 = vmatprep.subr.bf16.mxu0 0
    %1538 = vmatpush1.bf16.msra.mxu0 0
    %1539 = vmatprep.subr.bf16.mxu0 0
    %1540 = vmatpush1.bf16.msra.mxu0 0
    %1541 = vmatprep.subr.bf16.mxu0 0
    %1542 = vmatpush1.bf16.msra.mxu0 0
    %1543 = vmatprep.subr.bf16.mxu0 0
    %1544 = vmatpush1.bf16.msra.mxu0 0
    %1545 = vmatprep.subr.bf16.mxu0 0
    %1546 = vmatpush1.bf16.msra.mxu0 0
    %1547 = vmatprep.subr.bf16.mxu0 0
    %1548 = vmatpush1.bf16.msra.mxu0 %v1514
    %1549 = vmatprep.subr.bf16.mxu0 0
    %1550 = vmatpush1.bf16.msra.mxu0 %v1513
    %1551 = vmatprep.subr.bf16.mxu0 0
    %1552 = vmatpush2.bf16.msra.mxu0 0
    %1553 = vmatprep.subr.bf16.mxu0 0
    %1554 = vmatpush2.bf16.msra.mxu0 0
    %1555 = vmatprep.subr.bf16.mxu0 0
    %1556 = vmatpush2.bf16.msra.mxu0 0
    %1557 = vmatprep.subr.bf16.mxu0 0
    %1558 = vmatpush2.bf16.msra.mxu0 0
    %1559 = vmatprep.subr.bf16.mxu0 0
    %1560 = vmatpush2.bf16.msra.mxu0 0
    %1561 = vmatprep.subr.bf16.mxu0 0
    %1562 = vmatpush2.bf16.msra.mxu0 0
    %1563 = vmatprep.subr.bf16.mxu0 0
    %1564 = vmatpush2.bf16.msra.mxu0 0
    %1565 = vmatprep.subr.bf16.mxu0 0
    %1566 = vmatpush2.bf16.msra.mxu0 0
    %1567 = vmatprep.mubr.bf16.mxu0 0
    %1568 = vmatmul.mubr.bf16.gmra.mxu0 %v1518
    %v1569 = vpop.f32.mrf.mxu0
    %v1570 = vadd.f32 0.0, %v1569
    %v1571 = vpop.f32.mrf.mxu0
    %v1572 = vpop.f32.mrf.mxu0
    %v1573 = vadd.f32 0.0, %v1572
    %v1574 = vpop.f32.mrf.mxu0
    %1575 = vmatprep.mubr.bf16.mxu0 0
    %1576 = vmatmul.mubr.bf16.gmra.mxu0 %v1521
    %v1577 = vpop.f32.mrf.mxu0
    %v1578 = vadd.f32 0.0, %v1577
    %v1579 = vpop.f32.mrf.mxu0
    %v1580 = vpop.f32.mrf.mxu0
    %v1581 = vadd.f32 0.0, %v1580
    %v1582 = vpop.f32.mrf.mxu0
    %1583 = vmatprep.mubr.bf16.mxu0 0
    %1584 = vmatmul.mubr.bf16.gmra.mxu0 %v1524
    %v1585 = vpop.f32.mrf.mxu0
    %v1586 = vadd.f32 0.0, %v1585
    %v1587 = vpop.f32.mrf.mxu0
    %v1588 = vpop.f32.mrf.mxu0
    %v1589 = vadd.f32 0.0, %v1588
    %v1590 = vpop.f32.mrf.mxu0
    %1591 = vmatprep.mubr.bf16.mxu0 0
    %1592 = vmatmul.mubr.bf16.gmra.mxu0 %v1527
    %v1593 = vpop.f32.mrf.mxu0
    %v1594 = vadd.f32 0.0, %v1593
    %v1595 = vpop.f32.mrf.mxu0
    %v1596 = vpop.f32.mrf.mxu0
    %v1597 = vadd.f32 0.0, %v1596
    %v1598 = vpop.f32.mrf.mxu0
    %1599 = vmatprep.mubr.bf16.mxu0 0
    %1600 = vmatmul.mubr.bf16.gmra.mxu0 %v1530
    %v1601 = vpop.f32.mrf.mxu0
    %v1602 = vadd.f32 0.0, %v1601
    %v1603 = vpop.f32.mrf.mxu0
    %v1604 = vpop.f32.mrf.mxu0
    %v1605 = vadd.f32 0.0, %v1604
    %v1606 = vpop.f32.mrf.mxu0
    %1607 = vmatprep.mubr.bf16.mxu0 0
    %1608 = vmatmul.mubr.bf16.gmra.mxu0 %v1533
    %v1609 = vpop.f32.mrf.mxu0
    %v1610 = vadd.f32 0.0, %v1609
    %v1611 = vpop.f32.mrf.mxu0
    %v1612 = vpop.f32.mrf.mxu0
    %v1613 = vadd.f32 0.0, %v1612
    %v1614 = vpop.f32.mrf.mxu0
    %1615 = vdwg.mxu0
    %v1616 = vadd.f32 %v1447, %v1570
    %v1617 = vadd.f32 %v1448, %v1573
    %v1618 = vadd.f32 %v1449, %v1578
    %v1619 = vadd.f32 %v1450, %v1581
    %v1620 = vadd.f32 %v1451, %v1586
    %v1621 = vadd.f32 %v1452, %v1589
    %v1622 = vadd.f32 %v1453, %v1594
    %v1623 = vadd.f32 %v1454, %v1597
    %v1624 = vadd.f32 %v1455, %v1602
    %v1625 = vadd.f32 %v1456, %v1605
    %v1626 = vadd.f32 %v1457, %v1610
    %v1627 = vadd.f32 %v1458, %v1613
    %1628 = vst.msk [vmem:[#allocation3] sm:$0xff] %vm599, %v1616
    %1629 = vst.msk [vmem:[#allocation3 + $0x8] sm:$0xff] %vm599, %v1617
    %1630 = vst.msk [vmem:[#allocation3 + $0x10] sm:$0xff] %vm599, %v1618
    %1631 = vst.msk [vmem:[#allocation3 + $0x18] sm:$0xff] %vm599, %v1619
    %1632 = vst.msk [vmem:[#allocation3 + $0x20] sm:$0xff] %vm599, %v1620
    %1633 = vst.msk [vmem:[#allocation3 + $0x28] sm:$0xff] %vm599, %v1621
    %1634 = vst.msk [vmem:[#allocation3 + $0x30] sm:$0xff] %vm599, %v1622
    %1635 = vst.msk [vmem:[#allocation3 + $0x38] sm:$0xff] %vm599, %v1623
    %1636 = vst.msk [vmem:[#allocation3 + $0x40] sm:$0xff] %vm599, %v1624
    %1637 = vst.msk [vmem:[#allocation3 + $0x48] sm:$0xff] %vm599, %v1625
    %1638 = vst.msk [vmem:[#allocation3 + $0x50] sm:$0xff] %vm599, %v1626
    %1639 = vst.msk [vmem:[#allocation3 + $0x58] sm:$0xff] %vm599, %v1627
    %1640 = vst.msk [vmem:[#allocation3 + $0x60] sm:$0xff] %vm599, 0.0
    %1641 = vst.msk [vmem:[#allocation3 + $0x68] sm:$0xff] %vm599, 0.0
    %v1642 = vld [vmem:[#allocation3] sm:$0xff]
    %v1643 = vld [vmem:[#allocation3 + $0x8] sm:$0xff]
    %v1644 = vld [vmem:[#allocation3 + $0x10] sm:$0xff]
    %v1645 = vld [vmem:[#allocation3 + $0x18] sm:$0xff]
    %v1646 = vmax.f32 %v1642, %v1644
    %v1647 = vmax.f32 %v1643, %v1645
    %v1648 = vld [vmem:[#allocation3 + $0x20] sm:$0xff]
    %v1649 = vld [vmem:[#allocation3 + $0x28] sm:$0xff]
    %v1650 = vmax.f32 %v1646, %v1648
    %v1651 = vmax.f32 %v1647, %v1649
    %1652 = vst.msk [vmem:[#allocation3] sm:$0xff] %vm599, %v1650
    %1653 = vst.msk [vmem:[#allocation3 + $0x8] sm:$0xff] %vm599, %v1651
    %v1654 = vmax.f32 %v1650, 0.0
    %v1655 = vmax.f32 %v1651, 0.0
    %v1656 = vpack.c.bf16 %v1655, %v1654
    %v1658 = vunpack.c.l.b16 %v1656
    %v1659 = vunpack.c.h.b16 %v1656
    %v1660 = vpack.c.b16 %v1658, %v1658
    %v1661 = vpack.c.b16 %v1659, %v1659
    %1664 = vst.msk [vmem:[#allocation2 + $0x8] sm:$0xf] %vm464, %v1660
    %1665 = vst.msk [vmem:[#allocation2 + $0xc] sm:$0xf] %vm464, %v1661
    %v1666 = vld [vmem:[#allocation3 + $0x20] sm:$0xff]
    %v1667 = vld [vmem:[#allocation3 + $0x28] sm:$0xff]
    %v1668 = vld [vmem:[#allocation3 + $0x30] sm:$0xff]
    %v1669 = vld [vmem:[#allocation3 + $0x38] sm:$0xff]
    %v1670 = vmax.f32 %v1666, %v1668
    %v1671 = vmax.f32 %v1667, %v1669
    %v1672 = vld [vmem:[#allocation3 + $0x40] sm:$0xff]
    %v1673 = vld [vmem:[#allocation3 + $0x48] sm:$0xff]
    %v1674 = vmax.f32 %v1670, %v1672
    %v1675 = vmax.f32 %v1671, %v1673
    %1676 = vst.msk [vmem:[#allocation3 + $0x10] sm:$0xff] %vm599, %v1674
    %1677 = vst.msk [vmem:[#allocation3 + $0x18] sm:$0xff] %vm599, %v1675
    %v1678 = vmax.f32 %v1674, 0.0
    %v1679 = vmax.f32 %v1675, 0.0
    %v1680 = vpack.c.bf16 %v1679, %v1678
    %v1682 = vunpack.c.l.b16 %v1680
    %v1683 = vunpack.c.h.b16 %v1680
    %v1684 = vpack.c.b16 %v1682, %v1682
    %v1685 = vpack.c.b16 %v1683, %v1683
    %1688 = vst.msk [vmem:[#allocation2 + $0x10] sm:$0xf] %vm464, %v1684
    %1689 = vst.msk [vmem:[#allocation2 + $0x14] sm:$0xf] %vm464, %v1685
    %v1690 = vld [vmem:[#allocation3 + $0x40] sm:$0xff]
    %v1691 = vld [vmem:[#allocation3 + $0x48] sm:$0xff]
    %v1692 = vld [vmem:[#allocation3 + $0x50] sm:$0xff]
    %v1693 = vld [vmem:[#allocation3 + $0x58] sm:$0xff]
    %v1694 = vmax.f32 %v1690, %v1692
    %v1695 = vmax.f32 %v1691, %v1693
    %v1696 = vld [vmem:[#allocation3 + $0x60] sm:$0xff]
    %v1697 = vld [vmem:[#allocation3 + $0x68] sm:$0xff]
    %v1698 = vmax.f32 %v1694, %v1696
    %v1699 = vmax.f32 %v1695, %v1697
    %1700 = vst.msk [vmem:[#allocation3 + $0x20] sm:$0xff] %vm599, %v1698
    %1701 = vst.msk [vmem:[#allocation3 + $0x28] sm:$0xff] %vm599, %v1699
    %v1702 = vmax.f32 %v1698, 0.0
    %v1703 = vmax.f32 %v1699, 0.0
    %v1704 = vpack.c.bf16 %v1703, %v1702
    %v1706 = vunpack.c.l.b16 %v1704
    %v1707 = vunpack.c.h.b16 %v1704
    %v1708 = vpack.c.b16 %v1706, %v1706
    %v1709 = vpack.c.b16 %v1707, %v1707
    %1712 = vst.msk [vmem:[#allocation2 + $0x18] sm:$0xf] %vm464, %v1708
    %1713 = vst.msk [vmem:[#allocation2 + $0x1c] sm:$0xf] %vm464, %v1709
    %1714 = vst.msk [vmem:[#allocation2 + $0x20] sm:$0xf] %vm464, 0
    %1715 = vst.msk [vmem:[#allocation2 + $0x24] sm:$0xf] %vm464, 0
    %v1716 = vld [vmem:[#allocation2] sm:$0xf]
    %v1717 = vld [vmem:[#allocation2 + $0x4] sm:$0xf]
    %v1718 = vld [vmem:[#allocation2 + $0x8] sm:$0xf]
    %v1719 = vld [vmem:[#allocation2 + $0xc] sm:$0xf]
    %v1720 = vld [vmem:[#allocation2 + $0x10] sm:$0xf]
    %v1721 = vld [vmem:[#allocation2 + $0x14] sm:$0xf]
    %v1722 = vld [vmem:[%s3] sm:$0xf]
    %v1723 = vld [vmem:[%s3 + $0x4] sm:$0xf]
    %v1724 = vld [vmem:[%s3 + $0x8] sm:$0xf]
    %v1725 = vld [vmem:[%s3 + $0xc] sm:$0xf]
    %v1732 = vunpack.c.l.b16 %v1716
    %v1733 = vunpack.c.l.b16 %v1717
    %v1734 = vunpack.c.l.b16 %v1718
    %v1735 = vunpack.c.l.b16 %v1719
    %v1736 = vunpack.c.l.b16 %v1720
    %v1737 = vunpack.c.l.b16 %v1721
    %v1738 = vpack.c.b16 %v1733, %v1732
    %v1739 = vpack.c.b16 %v1735, %v1734
    %v1740 = vpack.c.b16 %v1737, %v1736
    %v1745 = vunpack.c.l.b16 %v1722
    %v1746 = vunpack.c.l.b16 %v1723
    %v1747 = vunpack.c.l.b16 %v1724
    %v1748 = vunpack.c.l.b16 %v1725
    %v1749 = vpack.c.b16 %v1746, %v1745
    %v1750 = vpack.c.b16 %v1748, %v1747
    %v1754 = vsel %vm599, %v1738, 0
    %v1757 = vsel %vm599, %v1739, 0
    %v1760 = vsel %vm599, %v1740, 0
    %1762 = vmatprep.subr.bf16.mxu0 0
    %1763 = vmatpush1.bf16.msra.mxu0 0
    %1764 = vmatprep.subr.bf16.mxu0 0
    %1765 = vmatpush1.bf16.msra.mxu0 0
    %1766 = vmatprep.subr.bf16.mxu0 0
    %1767 = vmatpush1.bf16.msra.mxu0 0
    %1768 = vmatprep.subr.bf16.mxu0 0
    %1769 = vmatpush1.bf16.msra.mxu0 0
    %1770 = vmatprep.subr.bf16.mxu0 0
    %1771 = vmatpush1.bf16.msra.mxu0 0
    %1772 = vmatprep.subr.bf16.mxu0 0
    %1773 = vmatpush1.bf16.msra.mxu0 0
    %1774 = vmatprep.subr.bf16.mxu0 0
    %1775 = vmatpush1.bf16.msra.mxu0 %v1750
    %1776 = vmatprep.subr.bf16.mxu0 0
    %1777 = vmatpush1.bf16.msra.mxu0 %v1749
    %1778 = vmatprep.subr.bf16.mxu0 0
    %1779 = vmatpush2.bf16.msra.mxu0 0
    %1780 = vmatprep.subr.bf16.mxu0 0
    %1781 = vmatpush2.bf16.msra.mxu0 0
    %1782 = vmatprep.subr.bf16.mxu0 0
    %1783 = vmatpush2.bf16.msra.mxu0 0
    %1784 = vmatprep.subr.bf16.mxu0 0
    %1785 = vmatpush2.bf16.msra.mxu0 0
    %1786 = vmatprep.subr.bf16.mxu0 0
    %1787 = vmatpush2.bf16.msra.mxu0 0
    %1788 = vmatprep.subr.bf16.mxu0 0
    %1789 = vmatpush2.bf16.msra.mxu0 0
    %1790 = vmatprep.subr.bf16.mxu0 0
    %1791 = vmatpush2.bf16.msra.mxu0 0
    %1792 = vmatprep.subr.bf16.mxu0 0
    %1793 = vmatpush2.bf16.msra.mxu0 0
    %1794 = vmatprep.mubr.bf16.mxu0 0
    %1795 = vmatmul.mubr.bf16.gmra.mxu0 %v1754
    %v1796 = vpop.f32.mrf.mxu0
    %v1797 = vadd.f32 0.0, %v1796
    %v1798 = vpop.f32.mrf.mxu0
    %v1799 = vpop.f32.mrf.mxu0
    %v1800 = vadd.f32 0.0, %v1799
    %v1801 = vpop.f32.mrf.mxu0
    %1802 = vmatprep.mubr.bf16.mxu0 0
    %1803 = vmatmul.mubr.bf16.gmra.mxu0 %v1757
    %v1804 = vpop.f32.mrf.mxu0
    %v1805 = vadd.f32 0.0, %v1804
    %v1806 = vpop.f32.mrf.mxu0
    %v1807 = vpop.f32.mrf.mxu0
    %v1808 = vadd.f32 0.0, %v1807
    %v1809 = vpop.f32.mrf.mxu0
    %1810 = vmatprep.mubr.bf16.mxu0 0
    %1811 = vmatmul.mubr.bf16.gmra.mxu0 %v1760
    %v1812 = vpop.f32.mrf.mxu0
    %v1813 = vadd.f32 0.0, %v1812
    %v1814 = vpop.f32.mrf.mxu0
    %v1815 = vpop.f32.mrf.mxu0
    %v1816 = vadd.f32 0.0, %v1815
    %v1817 = vpop.f32.mrf.mxu0
    %1818 = vdwg.mxu0
    %v1819 = vadd.f32 %v33, %v1797
    %v1820 = vadd.f32 %v33, %v1800
    %v1821 = vadd.f32 %v33, %v1805
    %v1822 = vadd.f32 %v33, %v1808
    %v1823 = vadd.f32 %v33, %v1813
    %v1824 = vadd.f32 %v33, %v1816
    %v1825 = vld [vmem:[#allocation2 + $0x8] sm:$0xf]
    %v1826 = vld [vmem:[#allocation2 + $0xc] sm:$0xf]
    %v1827 = vld [vmem:[#allocation2 + $0x10] sm:$0xf]
    %v1828 = vld [vmem:[#allocation2 + $0x14] sm:$0xf]
    %v1829 = vld [vmem:[#allocation2 + $0x18] sm:$0xf]
    %v1830 = vld [vmem:[#allocation2 + $0x1c] sm:$0xf]
    %v1831 = vld [vmem:[%s3 + $0x10] sm:$0xf]
    %v1832 = vld [vmem:[%s3 + $0x14] sm:$0xf]
    %v1833 = vld [vmem:[%s3 + $0x18] sm:$0xf]
    %v1834 = vld [vmem:[%s3 + $0x1c] sm:$0xf]
    %v1841 = vunpack.c.l.b16 %v1825
    %v1842 = vunpack.c.l.b16 %v1826
    %v1843 = vunpack.c.l.b16 %v1827
    %v1844 = vunpack.c.l.b16 %v1828
    %v1845 = vunpack.c.l.b16 %v1829
    %v1846 = vunpack.c.l.b16 %v1830
    %v1847 = vpack.c.b16 %v1842, %v1841
    %v1848 = vpack.c.b16 %v1844, %v1843
    %v1849 = vpack.c.b16 %v1846, %v1845
    %v1854 = vunpack.c.l.b16 %v1831
    %v1855 = vunpack.c.l.b16 %v1832
    %v1856 = vunpack.c.l.b16 %v1833
    %v1857 = vunpack.c.l.b16 %v1834
    %v1858 = vpack.c.b16 %v1855, %v1854
    %v1859 = vpack.c.b16 %v1857, %v1856
    %v1863 = vsel %vm599, %v1847, 0
    %v1866 = vsel %vm599, %v1848, 0
    %v1869 = vsel %vm599, %v1849, 0
    %1871 = vmatprep.subr.bf16.mxu0 0
    %1872 = vmatpush1.bf16.msra.mxu0 0
    %1873 = vmatprep.subr.bf16.mxu0 0
    %1874 = vmatpush1.bf16.msra.mxu0 0
    %1875 = vmatprep.subr.bf16.mxu0 0
    %1876 = vmatpush1.bf16.msra.mxu0 0
    %1877 = vmatprep.subr.bf16.mxu0 0
    %1878 = vmatpush1.bf16.msra.mxu0 0
    %1879 = vmatprep.subr.bf16.mxu0 0
    %1880 = vmatpush1.bf16.msra.mxu0 0
    %1881 = vmatprep.subr.bf16.mxu0 0
    %1882 = vmatpush1.bf16.msra.mxu0 0
    %1883 = vmatprep.subr.bf16.mxu0 0
    %1884 = vmatpush1.bf16.msra.mxu0 %v1859
    %1885 = vmatprep.subr.bf16.mxu0 0
    %1886 = vmatpush1.bf16.msra.mxu0 %v1858
    %1887 = vmatprep.subr.bf16.mxu0 0
    %1888 = vmatpush2.bf16.msra.mxu0 0
    %1889 = vmatprep.subr.bf16.mxu0 0
    %1890 = vmatpush2.bf16.msra.mxu0 0
    %1891 = vmatprep.subr.bf16.mxu0 0
    %1892 = vmatpush2.bf16.msra.mxu0 0
    %1893 = vmatprep.subr.bf16.mxu0 0
    %1894 = vmatpush2.bf16.msra.mxu0 0
    %1895 = vmatprep.subr.bf16.mxu0 0
    %1896 = vmatpush2.bf16.msra.mxu0 0
    %1897 = vmatprep.subr.bf16.mxu0 0
    %1898 = vmatpush2.bf16.msra.mxu0 0
    %1899 = vmatprep.subr.bf16.mxu0 0
    %1900 = vmatpush2.bf16.msra.mxu0 0
    %1901 = vmatprep.subr.bf16.mxu0 0
    %1902 = vmatpush2.bf16.msra.mxu0 0
    %1903 = vmatprep.mubr.bf16.mxu0 0
    %1904 = vmatmul.mubr.bf16.gmra.mxu0 %v1863
    %v1905 = vpop.f32.mrf.mxu0
    %v1906 = vadd.f32 0.0, %v1905
    %v1907 = vpop.f32.mrf.mxu0
    %v1908 = vpop.f32.mrf.mxu0
    %v1909 = vadd.f32 0.0, %v1908
    %v1910 = vpop.f32.mrf.mxu0
    %1911 = vmatprep.mubr.bf16.mxu0 0
    %1912 = vmatmul.mubr.bf16.gmra.mxu0 %v1866
    %v1913 = vpop.f32.mrf.mxu0
    %v1914 = vadd.f32 0.0, %v1913
    %v1915 = vpop.f32.mrf.mxu0
    %v1916 = vpop.f32.mrf.mxu0
    %v1917 = vadd.f32 0.0, %v1916
    %v1918 = vpop.f32.mrf.mxu0
    %1919 = vmatprep.mubr.bf16.mxu0 0
    %1920 = vmatmul.mubr.bf16.gmra.mxu0 %v1869
    %v1921 = vpop.f32.mrf.mxu0
    %v1922 = vadd.f32 0.0, %v1921
    %v1923 = vpop.f32.mrf.mxu0
    %v1924 = vpop.f32.mrf.mxu0
    %v1925 = vadd.f32 0.0, %v1924
    %v1926 = vpop.f32.mrf.mxu0
    %1927 = vdwg.mxu0
    %v1928 = vadd.f32 %v1819, %v1906
    %v1929 = vadd.f32 %v1820, %v1909
    %v1930 = vadd.f32 %v1821, %v1914
    %v1931 = vadd.f32 %v1822, %v1917
    %v1932 = vadd.f32 %v1823, %v1922
    %v1933 = vadd.f32 %v1824, %v1925
    %v1934 = vld [vmem:[#allocation2 + $0x10] sm:$0xf]
    %v1935 = vld [vmem:[#allocation2 + $0x14] sm:$0xf]
    %v1936 = vld [vmem:[#allocation2 + $0x18] sm:$0xf]
    %v1937 = vld [vmem:[#allocation2 + $0x1c] sm:$0xf]
    %v1938 = vld [vmem:[#allocation2 + $0x20] sm:$0xf]
    %v1939 = vld [vmem:[#allocation2 + $0x24] sm:$0xf]
    %v1940 = vld [vmem:[%s3 + $0x20] sm:$0xf]
    %v1941 = vld [vmem:[%s3 + $0x24] sm:$0xf]
    %v1942 = vld [vmem:[%s3 + $0x28] sm:$0xf]
    %v1943 = vld [vmem:[%s3 + $0x2c] sm:$0xf]
    %v1950 = vunpack.c.l.b16 %v1934
    %v1951 = vunpack.c.l.b16 %v1935
    %v1952 = vunpack.c.l.b16 %v1936
    %v1953 = vunpack.c.l.b16 %v1937
    %v1954 = vunpack.c.l.b16 %v1938
    %v1955 = vunpack.c.l.b16 %v1939
    %v1956 = vpack.c.b16 %v1951, %v1950
    %v1957 = vpack.c.b16 %v1953, %v1952
    %v1958 = vpack.c.b16 %v1955, %v1954
    %v1963 = vunpack.c.l.b16 %v1940
    %v1964 = vunpack.c.l.b16 %v1941
    %v1965 = vunpack.c.l.b16 %v1942
    %v1966 = vunpack.c.l.b16 %v1943
    %v1967 = vpack.c.b16 %v1964, %v1963
    %v1968 = vpack.c.b16 %v1966, %v1965
    %v1972 = vsel %vm599, %v1956, 0
    %v1975 = vsel %vm599, %v1957, 0
    %v1978 = vsel %vm599, %v1958, 0
    %1980 = vmatprep.subr.bf16.mxu0 0
    %1981 = vmatpush1.bf16.msra.mxu0 0
    %1982 = vmatprep.subr.bf16.mxu0 0
    %1983 = vmatpush1.bf16.msra.mxu0 0
    %1984 = vmatprep.subr.bf16.mxu0 0
    %1985 = vmatpush1.bf16.msra.mxu0 0
    %1986 = vmatprep.subr.bf16.mxu0 0
    %1987 = vmatpush1.bf16.msra.mxu0 0
    %1988 = vmatprep.subr.bf16.mxu0 0
    %1989 = vmatpush1.bf16.msra.mxu0 0
    %1990 = vmatprep.subr.bf16.mxu0 0
    %1991 = vmatpush1.bf16.msra.mxu0 0
    %1992 = vmatprep.subr.bf16.mxu0 0
    %1993 = vmatpush1.bf16.msra.mxu0 %v1968
    %1994 = vmatprep.subr.bf16.mxu0 0
    %1995 = vmatpush1.bf16.msra.mxu0 %v1967
    %1996 = vmatprep.subr.bf16.mxu0 0
    %1997 = vmatpush2.bf16.msra.mxu0 0
    %1998 = vmatprep.subr.bf16.mxu0 0
    %1999 = vmatpush2.bf16.msra.mxu0 0
    %2000 = vmatprep.subr.bf16.mxu0 0
    %2001 = vmatpush2.bf16.msra.mxu0 0
    %2002 = vmatprep.subr.bf16.mxu0 0
    %2003 = vmatpush2.bf16.msra.mxu0 0
    %2004 = vmatprep.subr.bf16.mxu0 0
    %2005 = vmatpush2.bf16.msra.mxu0 0
    %2006 = vmatprep.subr.bf16.mxu0 0
    %2007 = vmatpush2.bf16.msra.mxu0 0
    %2008 = vmatprep.subr.bf16.mxu0 0
    %2009 = vmatpush2.bf16.msra.mxu0 0
    %2010 = vmatprep.subr.bf16.mxu0 0
    %2011 = vmatpush2.bf16.msra.mxu0 0
    %2012 = vmatprep.mubr.bf16.mxu0 0
    %2013 = vmatmul.mubr.bf16.gmra.mxu0 %v1972
    %v2014 = vpop.f32.mrf.mxu0
    %v2015 = vadd.f32 0.0, %v2014
    %v2016 = vpop.f32.mrf.mxu0
    %v2017 = vpop.f32.mrf.mxu0
    %v2018 = vadd.f32 0.0, %v2017
    %v2019 = vpop.f32.mrf.mxu0
    %2020 = vmatprep.mubr.bf16.mxu0 0
    %2021 = vmatmul.mubr.bf16.gmra.mxu0 %v1975
    %v2022 = vpop.f32.mrf.mxu0
    %v2023 = vadd.f32 0.0, %v2022
    %v2024 = vpop.f32.mrf.mxu0
    %v2025 = vpop.f32.mrf.mxu0
    %v2026 = vadd.f32 0.0, %v2025
    %v2027 = vpop.f32.mrf.mxu0
    %2028 = vmatprep.mubr.bf16.mxu0 0
    %2029 = vmatmul.mubr.bf16.gmra.mxu0 %v1978
    %v2030 = vpop.f32.mrf.mxu0
    %v2031 = vadd.f32 0.0, %v2030
    %v2032 = vpop.f32.mrf.mxu0
    %v2033 = vpop.f32.mrf.mxu0
    %v2034 = vadd.f32 0.0, %v2033
    %v2035 = vpop.f32.mrf.mxu0
    %2036 = vdwg.mxu0
    %v2037 = vadd.f32 %v1928, %v2015
    %v2038 = vadd.f32 %v1929, %v2018
    %v2039 = vadd.f32 %v1930, %v2023
    %v2040 = vadd.f32 %v1931, %v2026
    %v2041 = vadd.f32 %v1932, %v2031
    %v2042 = vadd.f32 %v1933, %v2034
    %v2043 = vmax.f32 %v2037, 0.0
    %v2044 = vmax.f32 %v2038, 0.0
    %v2045 = vmax.f32 %v2039, 0.0
    %v2046 = vmax.f32 %v2040, 0.0
    %v2047 = vmax.f32 %v2041, 0.0
    %v2048 = vmax.f32 %v2042, 0.0
    %v2049 = vpack.c.bf16 %v2044, %v2043
    %v2050 = vpack.c.bf16 %v2046, %v2045
    %v2051 = vpack.c.bf16 %v2048, %v2047
    %v2055 = vunpack.c.l.b16 %v2049
    %v2056 = vunpack.c.h.b16 %v2049
    %v2057 = vunpack.c.l.b16 %v2050
    %v2058 = vunpack.c.h.b16 %v2050
    %v2059 = vunpack.c.l.b16 %v2051
    %v2060 = vunpack.c.h.b16 %v2051
    %v2061 = vpack.c.b16 %v2055, %v2055
    %v2062 = vpack.c.b16 %v2056, %v2056
    %v2063 = vpack.c.b16 %v2057, %v2057
    %v2064 = vpack.c.b16 %v2058, %v2058
    %v2065 = vpack.c.b16 %v2059, %v2059
    %v2066 = vpack.c.b16 %v2060, %v2060
    %2073 = vst.msk [vmem:[#allocation2 + $0x8] sm:$0xf] %vm464, %v2061
    %2074 = vst.msk [vmem:[#allocation2 + $0xc] sm:$0xf] %vm464, %v2062
    %2075 = vst.msk [vmem:[#allocation2 + $0x10] sm:$0xf] %vm464, %v2063
    %2076 = vst.msk [vmem:[#allocation2 + $0x14] sm:$0xf] %vm464, %v2064
    %2077 = vst.msk [vmem:[#allocation2 + $0x18] sm:$0xf] %vm464, %v2065
    %2078 = vst.msk [vmem:[#allocation2 + $0x1c] sm:$0xf] %vm464, %v2066
    %v2079 = vld [vmem:[#allocation2] sm:$0xf]
    %v2080 = vld [vmem:[#allocation2 + $0x4] sm:$0xf]
    %v2081 = vld [vmem:[#allocation2 + $0x8] sm:$0xf]
    %v2082 = vld [vmem:[#allocation2 + $0xc] sm:$0xf]
    %v2083 = vld [vmem:[#allocation2 + $0x10] sm:$0xf]
    %v2084 = vld [vmem:[#allocation2 + $0x14] sm:$0xf]
    %v2085 = vld [vmem:[%s3] sm:$0xf]
    %v2086 = vld [vmem:[%s3 + $0x4] sm:$0xf]
    %v2087 = vld [vmem:[%s3 + $0x8] sm:$0xf]
    %v2088 = vld [vmem:[%s3 + $0xc] sm:$0xf]
    %v2095 = vunpack.c.l.b16 %v2079
    %v2096 = vunpack.c.l.b16 %v2080
    %v2097 = vunpack.c.l.b16 %v2081
    %v2098 = vunpack.c.l.b16 %v2082
    %v2099 = vunpack.c.l.b16 %v2083
    %v2100 = vunpack.c.l.b16 %v2084
    %v2101 = vpack.c.b16 %v2096, %v2095
    %v2102 = vpack.c.b16 %v2098, %v2097
    %v2103 = vpack.c.b16 %v2100, %v2099
    %v2108 = vunpack.c.l.b16 %v2085
    %v2109 = vunpack.c.l.b16 %v2086
    %v2110 = vunpack.c.l.b16 %v2087
    %v2111 = vunpack.c.l.b16 %v2088
    %v2112 = vpack.c.b16 %v2109, %v2108
    %v2113 = vpack.c.b16 %v2111, %v2110
    %v2117 = vsel %vm599, %v2101, 0
    %v2120 = vsel %vm599, %v2102, 0
    %v2123 = vsel %vm599, %v2103, 0
    %2125 = vmatprep.subr.bf16.mxu0 0
    %2126 = vmatpush1.bf16.msra.mxu0 0
    %2127 = vmatprep.subr.bf16.mxu0 0
    %2128 = vmatpush1.bf16.msra.mxu0 0
    %2129 = vmatprep.subr.bf16.mxu0 0
    %2130 = vmatpush1.bf16.msra.mxu0 0
    %2131 = vmatprep.subr.bf16.mxu0 0
    %2132 = vmatpush1.bf16.msra.mxu0 0
    %2133 = vmatprep.subr.bf16.mxu0 0
    %2134 = vmatpush1.bf16.msra.mxu0 0
    %2135 = vmatprep.subr.bf16.mxu0 0
    %2136 = vmatpush1.bf16.msra.mxu0 0
    %2137 = vmatprep.subr.bf16.mxu0 0
    %2138 = vmatpush1.bf16.msra.mxu0 %v2113
    %2139 = vmatprep.subr.bf16.mxu0 0
    %2140 = vmatpush1.bf16.msra.mxu0 %v2112
    %2141 = vmatprep.subr.bf16.mxu0 0
    %2142 = vmatpush2.bf16.msra.mxu0 0
    %2143 = vmatprep.subr.bf16.mxu0 0
    %2144 = vmatpush2.bf16.msra.mxu0 0
    %2145 = vmatprep.subr.bf16.mxu0 0
    %2146 = vmatpush2.bf16.msra.mxu0 0
    %2147 = vmatprep.subr.bf16.mxu0 0
    %2148 = vmatpush2.bf16.msra.mxu0 0
    %2149 = vmatprep.subr.bf16.mxu0 0
    %2150 = vmatpush2.bf16.msra.mxu0 0
    %2151 = vmatprep.subr.bf16.mxu0 0
    %2152 = vmatpush2.bf16.msra.mxu0 0
    %2153 = vmatprep.subr.bf16.mxu0 0
    %2154 = vmatpush2.bf16.msra.mxu0 0
    %2155 = vmatprep.subr.bf16.mxu0 0
    %2156 = vmatpush2.bf16.msra.mxu0 0
    %2157 = vmatprep.mubr.bf16.mxu0 0
    %2158 = vmatmul.mubr.bf16.gmra.mxu0 %v2117
    %v2159 = vpop.f32.mrf.mxu0
    %v2160 = vadd.f32 0.0, %v2159
    %v2161 = vpop.f32.mrf.mxu0
    %v2162 = vpop.f32.mrf.mxu0
    %v2163 = vadd.f32 0.0, %v2162
    %v2164 = vpop.f32.mrf.mxu0
    %2165 = vmatprep.mubr.bf16.mxu0 0
    %2166 = vmatmul.mubr.bf16.gmra.mxu0 %v2120
    %v2167 = vpop.f32.mrf.mxu0
    %v2168 = vadd.f32 0.0, %v2167
    %v2169 = vpop.f32.mrf.mxu0
    %v2170 = vpop.f32.mrf.mxu0
    %v2171 = vadd.f32 0.0, %v2170
    %v2172 = vpop.f32.mrf.mxu0
    %2173 = vmatprep.mubr.bf16.mxu0 0
    %2174 = vmatmul.mubr.bf16.gmra.mxu0 %v2123
    %v2175 = vpop.f32.mrf.mxu0
    %v2176 = vadd.f32 0.0, %v2175
    %v2177 = vpop.f32.mrf.mxu0
    %v2178 = vpop.f32.mrf.mxu0
    %v2179 = vadd.f32 0.0, %v2178
    %v2180 = vpop.f32.mrf.mxu0
    %2181 = vdwg.mxu0
    %v2182 = vadd.f32 %v33, %v2160
    %v2183 = vadd.f32 %v33, %v2163
    %v2184 = vadd.f32 %v33, %v2168
    %v2185 = vadd.f32 %v33, %v2171
    %v2186 = vadd.f32 %v33, %v2176
    %v2187 = vadd.f32 %v33, %v2179
    %v2188 = vld [vmem:[#allocation2 + $0x8] sm:$0xf]
    %v2189 = vld [vmem:[#allocation2 + $0xc] sm:$0xf]
    %v2190 = vld [vmem:[#allocation2 + $0x10] sm:$0xf]
    %v2191 = vld [vmem:[#allocation2 + $0x14] sm:$0xf]
    %v2192 = vld [vmem:[#allocation2 + $0x18] sm:$0xf]
    %v2193 = vld [vmem:[#allocation2 + $0x1c] sm:$0xf]
    %v2194 = vld [vmem:[%s3 + $0x10] sm:$0xf]
    %v2195 = vld [vmem:[%s3 + $0x14] sm:$0xf]
    %v2196 = vld [vmem:[%s3 + $0x18] sm:$0xf]
    %v2197 = vld [vmem:[%s3 + $0x1c] sm:$0xf]
    %v2204 = vunpack.c.l.b16 %v2188
    %v2205 = vunpack.c.l.b16 %v2189
    %v2206 = vunpack.c.l.b16 %v2190
    %v2207 = vunpack.c.l.b16 %v2191
    %v2208 = vunpack.c.l.b16 %v2192
    %v2209 = vunpack.c.l.b16 %v2193
    %v2210 = vpack.c.b16 %v2205, %v2204
    %v2211 = vpack.c.b16 %v2207, %v2206
    %v2212 = vpack.c.b16 %v2209, %v2208
    %v2217 = vunpack.c.l.b16 %v2194
    %v2218 = vunpack.c.l.b16 %v2195
    %v2219 = vunpack.c.l.b16 %v2196
    %v2220 = vunpack.c.l.b16 %v2197
    %v2221 = vpack.c.b16 %v2218, %v2217
    %v2222 = vpack.c.b16 %v2220, %v2219
    %v2226 = vsel %vm599, %v2210, 0
    %v2229 = vsel %vm599, %v2211, 0
    %v2232 = vsel %vm599, %v2212, 0
    %2234 = vmatprep.subr.bf16.mxu0 0
    %2235 = vmatpush1.bf16.msra.mxu0 0
    %2236 = vmatprep.subr.bf16.mxu0 0
    %2237 = vmatpush1.bf16.msra.mxu0 0
    %2238 = vmatprep.subr.bf16.mxu0 0
    %2239 = vmatpush1.bf16.msra.mxu0 0
    %2240 = vmatprep.subr.bf16.mxu0 0
    %2241 = vmatpush1.bf16.msra.mxu0 0
    %2242 = vmatprep.subr.bf16.mxu0 0
    %2243 = vmatpush1.bf16.msra.mxu0 0
    %2244 = vmatprep.subr.bf16.mxu0 0
    %2245 = vmatpush1.bf16.msra.mxu0 0
    %2246 = vmatprep.subr.bf16.mxu0 0
    %2247 = vmatpush1.bf16.msra.mxu0 %v2222
    %2248 = vmatprep.subr.bf16.mxu0 0
    %2249 = vmatpush1.bf16.msra.mxu0 %v2221
    %2250 = vmatprep.subr.bf16.mxu0 0
    %2251 = vmatpush2.bf16.msra.mxu0 0
    %2252 = vmatprep.subr.bf16.mxu0 0
    %2253 = vmatpush2.bf16.msra.mxu0 0
    %2254 = vmatprep.subr.bf16.mxu0 0
    %2255 = vmatpush2.bf16.msra.mxu0 0
    %2256 = vmatprep.subr.bf16.mxu0 0
    %2257 = vmatpush2.bf16.msra.mxu0 0
    %2258 = vmatprep.subr.bf16.mxu0 0
    %2259 = vmatpush2.bf16.msra.mxu0 0
    %2260 = vmatprep.subr.bf16.mxu0 0
    %2261 = vmatpush2.bf16.msra.mxu0 0
    %2262 = vmatprep.subr.bf16.mxu0 0
    %2263 = vmatpush2.bf16.msra.mxu0 0
    %2264 = vmatprep.subr.bf16.mxu0 0
    %2265 = vmatpush2.bf16.msra.mxu0 0
    %2266 = vmatprep.mubr.bf16.mxu0 0
    %2267 = vmatmul.mubr.bf16.gmra.mxu0 %v2226
    %v2268 = vpop.f32.mrf.mxu0
    %v2269 = vadd.f32 0.0, %v2268
    %v2270 = vpop.f32.mrf.mxu0
    %v2271 = vpop.f32.mrf.mxu0
    %v2272 = vadd.f32 0.0, %v2271
    %v2273 = vpop.f32.mrf.mxu0
    %2274 = vmatprep.mubr.bf16.mxu0 0
    %2275 = vmatmul.mubr.bf16.gmra.mxu0 %v2229
    %v2276 = vpop.f32.mrf.mxu0
    %v2277 = vadd.f32 0.0, %v2276
    %v2278 = vpop.f32.mrf.mxu0
    %v2279 = vpop.f32.mrf.mxu0
    %v2280 = vadd.f32 0.0, %v2279
    %v2281 = vpop.f32.mrf.mxu0
    %2282 = vmatprep.mubr.bf16.mxu0 0
    %2283 = vmatmul.mubr.bf16.gmra.mxu0 %v2232
    %v2284 = vpop.f32.mrf.mxu0
    %v2285 = vadd.f32 0.0, %v2284
    %v2286 = vpop.f32.mrf.mxu0
    %v2287 = vpop.f32.mrf.mxu0
    %v2288 = vadd.f32 0.0, %v2287
    %v2289 = vpop.f32.mrf.mxu0
    %2290 = vdwg.mxu0
    %v2291 = vadd.f32 %v2182, %v2269
    %v2292 = vadd.f32 %v2183, %v2272
    %v2293 = vadd.f32 %v2184, %v2277
    %v2294 = vadd.f32 %v2185, %v2280
    %v2295 = vadd.f32 %v2186, %v2285
    %v2296 = vadd.f32 %v2187, %v2288
    %v2297 = vld [vmem:[#allocation2 + $0x10] sm:$0xf]
    %v2298 = vld [vmem:[#allocation2 + $0x14] sm:$0xf]
    %v2299 = vld [vmem:[#allocation2 + $0x18] sm:$0xf]
    %v2300 = vld [vmem:[#allocation2 + $0x1c] sm:$0xf]
    %v2301 = vld [vmem:[#allocation2 + $0x20] sm:$0xf]
    %v2302 = vld [vmem:[#allocation2 + $0x24] sm:$0xf]
    %v2303 = vld [vmem:[%s3 + $0x20] sm:$0xf]
    %v2304 = vld [vmem:[%s3 + $0x24] sm:$0xf]
    %v2305 = vld [vmem:[%s3 + $0x28] sm:$0xf]
    %v2306 = vld [vmem:[%s3 + $0x2c] sm:$0xf]
    %v2313 = vunpack.c.l.b16 %v2297
    %v2314 = vunpack.c.l.b16 %v2298
    %v2315 = vunpack.c.l.b16 %v2299
    %v2316 = vunpack.c.l.b16 %v2300
    %v2317 = vunpack.c.l.b16 %v2301
    %v2318 = vunpack.c.l.b16 %v2302
    %v2319 = vpack.c.b16 %v2314, %v2313
    %v2320 = vpack.c.b16 %v2316, %v2315
    %v2321 = vpack.c.b16 %v2318, %v2317
    %v2326 = vunpack.c.l.b16 %v2303
    %v2327 = vunpack.c.l.b16 %v2304
    %v2328 = vunpack.c.l.b16 %v2305
    %v2329 = vunpack.c.l.b16 %v2306
    %v2330 = vpack.c.b16 %v2327, %v2326
    %v2331 = vpack.c.b16 %v2329, %v2328
    %v2335 = vsel %vm599, %v2319, 0
    %v2338 = vsel %vm599, %v2320, 0
    %v2341 = vsel %vm599, %v2321, 0
    %2343 = vmatprep.subr.bf16.mxu0 0
    %2344 = vmatpush1.bf16.msra.mxu0 0
    %2345 = vmatprep.subr.bf16.mxu0 0
    %2346 = vmatpush1.bf16.msra.mxu0 0
    %2347 = vmatprep.subr.bf16.mxu0 0
    %2348 = vmatpush1.bf16.msra.mxu0 0
    %2349 = vmatprep.subr.bf16.mxu0 0
    %2350 = vmatpush1.bf16.msra.mxu0 0
    %2351 = vmatprep.subr.bf16.mxu0 0
    %2352 = vmatpush1.bf16.msra.mxu0 0
    %2353 = vmatprep.subr.bf16.mxu0 0
    %2354 = vmatpush1.bf16.msra.mxu0 0
    %2355 = vmatprep.subr.bf16.mxu0 0
    %2356 = vmatpush1.bf16.msra.mxu0 %v2331
    %2357 = vmatprep.subr.bf16.mxu0 0
    %2358 = vmatpush1.bf16.msra.mxu0 %v2330
    %2359 = vmatprep.subr.bf16.mxu0 0
    %2360 = vmatpush2.bf16.msra.mxu0 0
    %2361 = vmatprep.subr.bf16.mxu0 0
    %2362 = vmatpush2.bf16.msra.mxu0 0
    %2363 = vmatprep.subr.bf16.mxu0 0
    %2364 = vmatpush2.bf16.msra.mxu0 0
    %2365 = vmatprep.subr.bf16.mxu0 0
    %2366 = vmatpush2.bf16.msra.mxu0 0
    %2367 = vmatprep.subr.bf16.mxu0 0
    %2368 = vmatpush2.bf16.msra.mxu0 0
    %2369 = vmatprep.subr.bf16.mxu0 0
    %2370 = vmatpush2.bf16.msra.mxu0 0
    %2371 = vmatprep.subr.bf16.mxu0 0
    %2372 = vmatpush2.bf16.msra.mxu0 0
    %2373 = vmatprep.subr.bf16.mxu0 0
    %2374 = vmatpush2.bf16.msra.mxu0 0
    %2375 = vmatprep.mubr.bf16.mxu0 0
    %2376 = vmatmul.mubr.bf16.gmra.mxu0 %v2335
    %v2377 = vpop.f32.mrf.mxu0
    %v2378 = vadd.f32 0.0, %v2377
    %v2379 = vpop.f32.mrf.mxu0
    %v2380 = vpop.f32.mrf.mxu0
    %v2381 = vadd.f32 0.0, %v2380
    %v2382 = vpop.f32.mrf.mxu0
    %2383 = vmatprep.mubr.bf16.mxu0 0
    %2384 = vmatmul.mubr.bf16.gmra.mxu0 %v2338
    %v2385 = vpop.f32.mrf.mxu0
    %v2386 = vadd.f32 0.0, %v2385
    %v2387 = vpop.f32.mrf.mxu0
    %v2388 = vpop.f32.mrf.mxu0
    %v2389 = vadd.f32 0.0, %v2388
    %v2390 = vpop.f32.mrf.mxu0
    %2391 = vmatprep.mubr.bf16.mxu0 0
    %2392 = vmatmul.mubr.bf16.gmra.mxu0 %v2341
    %v2393 = vpop.f32.mrf.mxu0
    %v2394 = vadd.f32 0.0, %v2393
    %v2395 = vpop.f32.mrf.mxu0
    %v2396 = vpop.f32.mrf.mxu0
    %v2397 = vadd.f32 0.0, %v2396
    %v2398 = vpop.f32.mrf.mxu0
    %2399 = vdwg.mxu0
    %v2400 = vadd.f32 %v2291, %v2378
    %v2401 = vadd.f32 %v2292, %v2381
    %v2402 = vadd.f32 %v2293, %v2386
    %v2403 = vadd.f32 %v2294, %v2389
    %v2404 = vadd.f32 %v2295, %v2394
    %v2405 = vadd.f32 %v2296, %v2397
    %v2406 = vld [vmem:[#allocation3] sm:$0xff]
    %v2407 = vld [vmem:[#allocation3 + $0x8] sm:$0xff]
    %v2408 = vld [vmem:[#allocation3 + $0x10] sm:$0xff]
    %v2409 = vld [vmem:[#allocation3 + $0x18] sm:$0xff]
    %v2410 = vld [vmem:[#allocation3 + $0x20] sm:$0xff]
    %v2411 = vld [vmem:[#allocation3 + $0x28] sm:$0xff]
    %v2412 = vadd.f32 %v2400, %v2406
    %v2413 = vadd.f32 %v2401, %v2407
    %v2414 = vadd.f32 %v2402, %v2408
    %v2415 = vadd.f32 %v2403, %v2409
    %v2416 = vadd.f32 %v2404, %v2410
    %v2417 = vadd.f32 %v2405, %v2411
    %2418 = vst.msk [vmem:[#allocation3] sm:$0xff] %vm599, %v2412
    %2419 = vst.msk [vmem:[#allocation3 + $0x8] sm:$0xff] %vm599, %v2413
    %2420 = vst.msk [vmem:[#allocation3 + $0x10] sm:$0xff] %vm599, %v2414
    %2421 = vst.msk [vmem:[#allocation3 + $0x18] sm:$0xff] %vm599, %v2415
    %2422 = vst.msk [vmem:[#allocation3 + $0x20] sm:$0xff] %vm599, %v2416
    %2423 = vst.msk [vmem:[#allocation3 + $0x28] sm:$0xff] %vm599, %v2417
    %2424 = vst.msk [vmem:[#allocation3 + $0x30] sm:$0xff] %vm599, 0.0
    %2425 = vst.msk [vmem:[#allocation3 + $0x38] sm:$0xff] %vm599, 0.0
    %v2426 = vld [vmem:[#allocation3] sm:$0xff]
    %v2427 = vld [vmem:[#allocation3 + $0x8] sm:$0xff]
    %v2428 = vld [vmem:[#allocation3 + $0x10] sm:$0xff]
    %v2429 = vld [vmem:[#allocation3 + $0x18] sm:$0xff]
    %v2430 = vmax.f32 %v2426, %v2428
    %v2431 = vmax.f32 %v2427, %v2429
    %v2432 = vld [vmem:[#allocation3 + $0x20] sm:$0xff]
    %v2433 = vld [vmem:[#allocation3 + $0x28] sm:$0xff]
    %v2434 = vmax.f32 %v2430, %v2432
    %v2435 = vmax.f32 %v2431, %v2433
    %2436 = vst.msk [vmem:[#allocation3] sm:$0xff] %vm599, %v2434
    %2437 = vst.msk [vmem:[#allocation3 + $0x8] sm:$0xff] %vm599, %v2435
    %v2438 = vmax.f32 %v2434, 0.0
    %v2439 = vmax.f32 %v2435, 0.0
    %v2440 = vpack.c.bf16 %v2439, %v2438
    %v2442 = vunpack.c.l.b16 %v2440
    %v2443 = vunpack.c.h.b16 %v2440
    %v2444 = vpack.c.b16 %v2442, %v2442
    %v2445 = vpack.c.b16 %v2443, %v2443
    %2448 = vst.msk [vmem:[#allocation2 + $0x8] sm:$0xf] %vm464, %v2444
    %2449 = vst.msk [vmem:[#allocation2 + $0xc] sm:$0xf] %vm464, %v2445
    %2450 = vst.msk [vmem:[#allocation2 + $0x10] sm:$0xf] %vm464, 0
    %2451 = vst.msk [vmem:[#allocation2 + $0x14] sm:$0xf] %vm464, 0
    %v2452 = vld [vmem:[#allocation2] sm:$0xf]
    %v2453 = vld [vmem:[#allocation2 + $0x4] sm:$0xf]
    %v2454 = vld [vmem:[%s3] sm:$0xf]
    %v2455 = vld [vmem:[%s3 + $0x4] sm:$0xf]
    %v2456 = vld [vmem:[%s3 + $0x8] sm:$0xf]
    %v2457 = vld [vmem:[%s3 + $0xc] sm:$0xf]
    %v2460 = vunpack.c.l.b16 %v2452
    %v2461 = vunpack.c.l.b16 %v2453
    %v2462 = vpack.c.b16 %v2461, %v2460
    %v2467 = vunpack.c.l.b16 %v2454
    %v2468 = vunpack.c.l.b16 %v2455
    %v2469 = vunpack.c.l.b16 %v2456
    %v2470 = vunpack.c.l.b16 %v2457
    %v2471 = vpack.c.b16 %v2468, %v2467
    %v2472 = vpack.c.b16 %v2470, %v2469
    %v2476 = vsel %vm599, %v2462, 0
    %2478 = vmatprep.subr.bf16.mxu0 0
    %2479 = vmatpush1.bf16.msra.mxu0 0
    %2480 = vmatprep.subr.bf16.mxu0 0
    %2481 = vmatpush1.bf16.msra.mxu0 0
    %2482 = vmatprep.subr.bf16.mxu0 0
    %2483 = vmatpush1.bf16.msra.mxu0 0
    %2484 = vmatprep.subr.bf16.mxu0 0
    %2485 = vmatpush1.bf16.msra.mxu0 0
    %2486 = vmatprep.subr.bf16.mxu0 0
    %2487 = vmatpush1.bf16.msra.mxu0 0
    %2488 = vmatprep.subr.bf16.mxu0 0
    %2489 = vmatpush1.bf16.msra.mxu0 0
    %2490 = vmatprep.subr.bf16.mxu0 0
    %2491 = vmatpush1.bf16.msra.mxu0 %v2472
    %2492 = vmatprep.subr.bf16.mxu0 0
    %2493 = vmatpush1.bf16.msra.mxu0 %v2471
    %2494 = vmatprep.subr.bf16.mxu0 0
    %2495 = vmatpush2.bf16.msra.mxu0 0
    %2496 = vmatprep.subr.bf16.mxu0 0
    %2497 = vmatpush2.bf16.msra.mxu0 0
    %2498 = vmatprep.subr.bf16.mxu0 0
    %2499 = vmatpush2.bf16.msra.mxu0 0
    %2500 = vmatprep.subr.bf16.mxu0 0
    %2501 = vmatpush2.bf16.msra.mxu0 0
    %2502 = vmatprep.subr.bf16.mxu0 0
    %2503 = vmatpush2.bf16.msra.mxu0 0
    %2504 = vmatprep.subr.bf16.mxu0 0
    %2505 = vmatpush2.bf16.msra.mxu0 0
    %2506 = vmatprep.subr.bf16.mxu0 0
    %2507 = vmatpush2.bf16.msra.mxu0 0
    %2508 = vmatprep.subr.bf16.mxu0 0
    %2509 = vmatpush2.bf16.msra.mxu0 0
    %2510 = vmatprep.mubr.bf16.mxu0 0
    %2511 = vmatmul.mubr.bf16.gmra.mxu0 %v2476
    %v2512 = vpop.f32.mrf.mxu0
    %v2513 = vadd.f32 0.0, %v2512
    %v2514 = vpop.f32.mrf.mxu0
    %v2515 = vpop.f32.mrf.mxu0
    %v2516 = vadd.f32 0.0, %v2515
    %v2517 = vpop.f32.mrf.mxu0
    %2518 = vdwg.mxu0
    %v2519 = vadd.f32 %v33, %v2513
    %v2520 = vadd.f32 %v33, %v2516
    %v2521 = vld [vmem:[#allocation2 + $0x8] sm:$0xf]
    %v2522 = vld [vmem:[#allocation2 + $0xc] sm:$0xf]
    %v2523 = vld [vmem:[%s3 + $0x10] sm:$0xf]
    %v2524 = vld [vmem:[%s3 + $0x14] sm:$0xf]
    %v2525 = vld [vmem:[%s3 + $0x18] sm:$0xf]
    %v2526 = vld [vmem:[%s3 + $0x1c] sm:$0xf]
    %v2529 = vunpack.c.l.b16 %v2521
    %v2530 = vunpack.c.l.b16 %v2522
    %v2531 = vpack.c.b16 %v2530, %v2529
    %v2536 = vunpack.c.l.b16 %v2523
    %v2537 = vunpack.c.l.b16 %v2524
    %v2538 = vunpack.c.l.b16 %v2525
    %v2539 = vunpack.c.l.b16 %v2526
    %v2540 = vpack.c.b16 %v2537, %v2536
    %v2541 = vpack.c.b16 %v2539, %v2538
    %v2545 = vsel %vm599, %v2531, 0
    %2547 = vmatprep.subr.bf16.mxu0 0
    %2548 = vmatpush1.bf16.msra.mxu0 0
    %2549 = vmatprep.subr.bf16.mxu0 0
    %2550 = vmatpush1.bf16.msra.mxu0 0
    %2551 = vmatprep.subr.bf16.mxu0 0
    %2552 = vmatpush1.bf16.msra.mxu0 0
    %2553 = vmatprep.subr.bf16.mxu0 0
    %2554 = vmatpush1.bf16.msra.mxu0 0
    %2555 = vmatprep.subr.bf16.mxu0 0
    %2556 = vmatpush1.bf16.msra.mxu0 0
    %2557 = vmatprep.subr.bf16.mxu0 0
    %2558 = vmatpush1.bf16.msra.mxu0 0
    %2559 = vmatprep.subr.bf16.mxu0 0
    %2560 = vmatpush1.bf16.msra.mxu0 %v2541
    %2561 = vmatprep.subr.bf16.mxu0 0
    %2562 = vmatpush1.bf16.msra.mxu0 %v2540
    %2563 = vmatprep.subr.bf16.mxu0 0
    %2564 = vmatpush2.bf16.msra.mxu0 0
    %2565 = vmatprep.subr.bf16.mxu0 0
    %2566 = vmatpush2.bf16.msra.mxu0 0
    %2567 = vmatprep.subr.bf16.mxu0 0
    %2568 = vmatpush2.bf16.msra.mxu0 0
    %2569 = vmatprep.subr.bf16.mxu0 0
    %2570 = vmatpush2.bf16.msra.mxu0 0
    %2571 = vmatprep.subr.bf16.mxu0 0
    %2572 = vmatpush2.bf16.msra.mxu0 0
    %2573 = vmatprep.subr.bf16.mxu0 0
    %2574 = vmatpush2.bf16.msra.mxu0 0
    %2575 = vmatprep.subr.bf16.mxu0 0
    %2576 = vmatpush2.bf16.msra.mxu0 0
    %2577 = vmatprep.subr.bf16.mxu0 0
    %2578 = vmatpush2.bf16.msra.mxu0 0
    %2579 = vmatprep.mubr.bf16.mxu0 0
    %2580 = vmatmul.mubr.bf16.gmra.mxu0 %v2545
    %v2581 = vpop.f32.mrf.mxu0
    %v2582 = vadd.f32 0.0, %v2581
    %v2583 = vpop.f32.mrf.mxu0
    %v2584 = vpop.f32.mrf.mxu0
    %v2585 = vadd.f32 0.0, %v2584
    %v2586 = vpop.f32.mrf.mxu0
    %2587 = vdwg.mxu0
    %v2588 = vadd.f32 %v2519, %v2582
    %v2589 = vadd.f32 %v2520, %v2585
    %v2590 = vld [vmem:[#allocation2 + $0x10] sm:$0xf]
    %v2591 = vld [vmem:[#allocation2 + $0x14] sm:$0xf]
    %v2592 = vld [vmem:[%s3 + $0x20] sm:$0xf]
    %v2593 = vld [vmem:[%s3 + $0x24] sm:$0xf]
    %v2594 = vld [vmem:[%s3 + $0x28] sm:$0xf]
    %v2595 = vld [vmem:[%s3 + $0x2c] sm:$0xf]
    %v2598 = vunpack.c.l.b16 %v2590
    %v2599 = vunpack.c.l.b16 %v2591
    %v2600 = vpack.c.b16 %v2599, %v2598
    %v2605 = vunpack.c.l.b16 %v2592
    %v2606 = vunpack.c.l.b16 %v2593
    %v2607 = vunpack.c.l.b16 %v2594
    %v2608 = vunpack.c.l.b16 %v2595
    %v2609 = vpack.c.b16 %v2606, %v2605
    %v2610 = vpack.c.b16 %v2608, %v2607
    %v2614 = vsel %vm599, %v2600, 0
    %2616 = vmatprep.subr.bf16.mxu0 0
    %2617 = vmatpush1.bf16.msra.mxu0 0
    %2618 = vmatprep.subr.bf16.mxu0 0
    %2619 = vmatpush1.bf16.msra.mxu0 0
    %2620 = vmatprep.subr.bf16.mxu0 0
    %2621 = vmatpush1.bf16.msra.mxu0 0
    %2622 = vmatprep.subr.bf16.mxu0 0
    %2623 = vmatpush1.bf16.msra.mxu0 0
    %2624 = vmatprep.subr.bf16.mxu0 0
    %2625 = vmatpush1.bf16.msra.mxu0 0
    %2626 = vmatprep.subr.bf16.mxu0 0
    %2627 = vmatpush1.bf16.msra.mxu0 0
    %2628 = vmatprep.subr.bf16.mxu0 0
    %2629 = vmatpush1.bf16.msra.mxu0 %v2610
    %2630 = vmatprep.subr.bf16.mxu0 0
    %2631 = vmatpush1.bf16.msra.mxu0 %v2609
    %2632 = vmatprep.subr.bf16.mxu0 0
    %2633 = vmatpush2.bf16.msra.mxu0 0
    %2634 = vmatprep.subr.bf16.mxu0 0
    %2635 = vmatpush2.bf16.msra.mxu0 0
    %2636 = vmatprep.subr.bf16.mxu0 0
    %2637 = vmatpush2.bf16.msra.mxu0 0
    %2638 = vmatprep.subr.bf16.mxu0 0
    %2639 = vmatpush2.bf16.msra.mxu0 0
    %2640 = vmatprep.subr.bf16.mxu0 0
    %2641 = vmatpush2.bf16.msra.mxu0 0
    %2642 = vmatprep.subr.bf16.mxu0 0
    %2643 = vmatpush2.bf16.msra.mxu0 0
    %2644 = vmatprep.subr.bf16.mxu0 0
    %2645 = vmatpush2.bf16.msra.mxu0 0
    %2646 = vmatprep.subr.bf16.mxu0 0
    %2647 = vmatpush2.bf16.msra.mxu0 0
    %2648 = vmatprep.mubr.bf16.mxu0 0
    %2649 = vmatmul.mubr.bf16.gmra.mxu0 %v2614
    %v2650 = vpop.f32.mrf.mxu0
    %v2651 = vadd.f32 0.0, %v2650
    %v2652 = vpop.f32.mrf.mxu0
    %v2653 = vpop.f32.mrf.mxu0
    %v2654 = vadd.f32 0.0, %v2653
    %v2655 = vpop.f32.mrf.mxu0
    %2656 = vdwg.mxu0
    %v2657 = vadd.f32 %v2588, %v2651
    %v2658 = vadd.f32 %v2589, %v2654
    %v2659 = vmax.f32 %v2657, 0.0
    %v2660 = vmax.f32 %v2658, 0.0
    %v2661 = vpack.c.bf16 %v2660, %v2659
    %v2663 = vunpack.c.l.b16 %v2661
    %v2664 = vunpack.c.h.b16 %v2661
    %v2665 = vpack.c.b16 %v2663, %v2663
    %v2666 = vpack.c.b16 %v2664, %v2664
    %2669 = vst.msk [vmem:[#allocation2 + $0x8] sm:$0xf] %vm464, %v2665
    %2670 = vst.msk [vmem:[#allocation2 + $0xc] sm:$0xf] %vm464, %v2666
    %v2671 = vld [vmem:[#allocation2] sm:$0xf]
    %v2672 = vld [vmem:[#allocation2 + $0x4] sm:$0xf]
    %v2673 = vld [vmem:[%s3] sm:$0xf]
    %v2674 = vld [vmem:[%s3 + $0x4] sm:$0xf]
    %v2675 = vld [vmem:[%s3 + $0x8] sm:$0xf]
    %v2676 = vld [vmem:[%s3 + $0xc] sm:$0xf]
    %v2679 = vunpack.c.l.b16 %v2671
    %v2680 = vunpack.c.l.b16 %v2672
    %v2681 = vpack.c.b16 %v2680, %v2679
    %v2686 = vunpack.c.l.b16 %v2673
    %v2687 = vunpack.c.l.b16 %v2674
    %v2688 = vunpack.c.l.b16 %v2675
    %v2689 = vunpack.c.l.b16 %v2676
    %v2690 = vpack.c.b16 %v2687, %v2686
    %v2691 = vpack.c.b16 %v2689, %v2688
    %v2695 = vsel %vm599, %v2681, 0
    %2697 = vmatprep.subr.bf16.mxu0 0
    %2698 = vmatpush1.bf16.msra.mxu0 0
    %2699 = vmatprep.subr.bf16.mxu0 0
    %2700 = vmatpush1.bf16.msra.mxu0 0
    %2701 = vmatprep.subr.bf16.mxu0 0
    %2702 = vmatpush1.bf16.msra.mxu0 0
    %2703 = vmatprep.subr.bf16.mxu0 0
    %2704 = vmatpush1.bf16.msra.mxu0 0
    %2705 = vmatprep.subr.bf16.mxu0 0
    %2706 = vmatpush1.bf16.msra.mxu0 0
    %2707 = vmatprep.subr.bf16.mxu0 0
    %2708 = vmatpush1.bf16.msra.mxu0 0
    %2709 = vmatprep.subr.bf16.mxu0 0
    %2710 = vmatpush1.bf16.msra.mxu0 %v2691
    %2711 = vmatprep.subr.bf16.mxu0 0
    %2712 = vmatpush1.bf16.msra.mxu0 %v2690
    %2713 = vmatprep.subr.bf16.mxu0 0
    %2714 = vmatpush2.bf16.msra.mxu0 0
    %2715 = vmatprep.subr.bf16.mxu0 0
    %2716 = vmatpush2.bf16.msra.mxu0 0
    %2717 = vmatprep.subr.bf16.mxu0 0
    %2718 = vmatpush2.bf16.msra.mxu0 0
    %2719 = vmatprep.subr.bf16.mxu0 0
    %2720 = vmatpush2.bf16.msra.mxu0 0
    %2721 = vmatprep.subr.bf16.mxu0 0
    %2722 = vmatpush2.bf16.msra.mxu0 0
    %2723 = vmatprep.subr.bf16.mxu0 0
    %2724 = vmatpush2.bf16.msra.mxu0 0
    %2725 = vmatprep.subr.bf16.mxu0 0
    %2726 = vmatpush2.bf16.msra.mxu0 0
    %2727 = vmatprep.subr.bf16.mxu0 0
    %2728 = vmatpush2.bf16.msra.mxu0 0
    %2729 = vmatprep.mubr.bf16.mxu0 0
    %2730 = vmatmul.mubr.bf16.gmra.mxu0 %v2695
    %v2731 = vpop.f32.mrf.mxu0
    %v2732 = vadd.f32 0.0, %v2731
    %v2733 = vpop.f32.mrf.mxu0
    %v2734 = vpop.f32.mrf.mxu0
    %v2735 = vadd.f32 0.0, %v2734
    %v2736 = vpop.f32.mrf.mxu0
    %2737 = vdwg.mxu0
    %v2738 = vadd.f32 %v33, %v2732
    %v2739 = vadd.f32 %v33, %v2735
    %v2740 = vld [vmem:[#allocation2 + $0x8] sm:$0xf]
    %v2741 = vld [vmem:[#allocation2 + $0xc] sm:$0xf]
    %v2742 = vld [vmem:[%s3 + $0x10] sm:$0xf]
    %v2743 = vld [vmem:[%s3 + $0x14] sm:$0xf]
    %v2744 = vld [vmem:[%s3 + $0x18] sm:$0xf]
    %v2745 = vld [vmem:[%s3 + $0x1c] sm:$0xf]
    %v2748 = vunpack.c.l.b16 %v2740
    %v2749 = vunpack.c.l.b16 %v2741
    %v2750 = vpack.c.b16 %v2749, %v2748
    %v2755 = vunpack.c.l.b16 %v2742
    %v2756 = vunpack.c.l.b16 %v2743
    %v2757 = vunpack.c.l.b16 %v2744
    %v2758 = vunpack.c.l.b16 %v2745
    %v2759 = vpack.c.b16 %v2756, %v2755
    %v2760 = vpack.c.b16 %v2758, %v2757
    %v2764 = vsel %vm599, %v2750, 0
    %2766 = vmatprep.subr.bf16.mxu0 0
    %2767 = vmatpush1.bf16.msra.mxu0 0
    %2768 = vmatprep.subr.bf16.mxu0 0
    %2769 = vmatpush1.bf16.msra.mxu0 0
    %2770 = vmatprep.subr.bf16.mxu0 0
    %2771 = vmatpush1.bf16.msra.mxu0 0
    %2772 = vmatprep.subr.bf16.mxu0 0
    %2773 = vmatpush1.bf16.msra.mxu0 0
    %2774 = vmatprep.subr.bf16.mxu0 0
    %2775 = vmatpush1.bf16.msra.mxu0 0
    %2776 = vmatprep.subr.bf16.mxu0 0
    %2777 = vmatpush1.bf16.msra.mxu0 0
    %2778 = vmatprep.subr.bf16.mxu0 0
    %2779 = vmatpush1.bf16.msra.mxu0 %v2760
    %2780 = vmatprep.subr.bf16.mxu0 0
    %2781 = vmatpush1.bf16.msra.mxu0 %v2759
    %2782 = vmatprep.subr.bf16.mxu0 0
    %2783 = vmatpush2.bf16.msra.mxu0 0
    %2784 = vmatprep.subr.bf16.mxu0 0
    %2785 = vmatpush2.bf16.msra.mxu0 0
    %2786 = vmatprep.subr.bf16.mxu0 0
    %2787 = vmatpush2.bf16.msra.mxu0 0
    %2788 = vmatprep.subr.bf16.mxu0 0
    %2789 = vmatpush2.bf16.msra.mxu0 0
    %2790 = vmatprep.subr.bf16.mxu0 0
    %2791 = vmatpush2.bf16.msra.mxu0 0
    %2792 = vmatprep.subr.bf16.mxu0 0
    %2793 = vmatpush2.bf16.msra.mxu0 0
    %2794 = vmatprep.subr.bf16.mxu0 0
    %2795 = vmatpush2.bf16.msra.mxu0 0
    %2796 = vmatprep.subr.bf16.mxu0 0
    %2797 = vmatpush2.bf16.msra.mxu0 0
    %2798 = vmatprep.mubr.bf16.mxu0 0
    %2799 = vmatmul.mubr.bf16.gmra.mxu0 %v2764
    %v2800 = vpop.f32.mrf.mxu0
    %v2801 = vadd.f32 0.0, %v2800
    %v2802 = vpop.f32.mrf.mxu0
    %v2803 = vpop.f32.mrf.mxu0
    %v2804 = vadd.f32 0.0, %v2803
    %v2805 = vpop.f32.mrf.mxu0
    %2806 = vdwg.mxu0
    %v2807 = vadd.f32 %v2738, %v2801
    %v2808 = vadd.f32 %v2739, %v2804
    %v2809 = vld [vmem:[#allocation2 + $0x10] sm:$0xf]
    %v2810 = vld [vmem:[#allocation2 + $0x14] sm:$0xf]
    %v2811 = vld [vmem:[%s3 + $0x20] sm:$0xf]
    %v2812 = vld [vmem:[%s3 + $0x24] sm:$0xf]
    %v2813 = vld [vmem:[%s3 + $0x28] sm:$0xf]
    %v2814 = vld [vmem:[%s3 + $0x2c] sm:$0xf]
    %v2817 = vunpack.c.l.b16 %v2809
    %v2818 = vunpack.c.l.b16 %v2810
    %v2819 = vpack.c.b16 %v2818, %v2817
    %v2824 = vunpack.c.l.b16 %v2811
    %v2825 = vunpack.c.l.b16 %v2812
    %v2826 = vunpack.c.l.b16 %v2813
    %v2827 = vunpack.c.l.b16 %v2814
    %v2828 = vpack.c.b16 %v2825, %v2824
    %v2829 = vpack.c.b16 %v2827, %v2826
    %v2833 = vsel %vm599, %v2819, 0
    %2835 = vmatprep.subr.bf16.mxu0 0
    %2836 = vmatpush1.bf16.msra.mxu0 0
    %2837 = vmatprep.subr.bf16.mxu0 0
    %2838 = vmatpush1.bf16.msra.mxu0 0
    %2839 = vmatprep.subr.bf16.mxu0 0
    %2840 = vmatpush1.bf16.msra.mxu0 0
    %2841 = vmatprep.subr.bf16.mxu0 0
    %2842 = vmatpush1.bf16.msra.mxu0 0
    %2843 = vmatprep.subr.bf16.mxu0 0
    %2844 = vmatpush1.bf16.msra.mxu0 0
    %2845 = vmatprep.subr.bf16.mxu0 0
    %2846 = vmatpush1.bf16.msra.mxu0 0
    %2847 = vmatprep.subr.bf16.mxu0 0
    %2848 = vmatpush1.bf16.msra.mxu0 %v2829
    %2849 = vmatprep.subr.bf16.mxu0 0
    %2850 = vmatpush1.bf16.msra.mxu0 %v2828
    %2851 = vmatprep.subr.bf16.mxu0 0
    %2852 = vmatpush2.bf16.msra.mxu0 0
    %2853 = vmatprep.subr.bf16.mxu0 0
    %2854 = vmatpush2.bf16.msra.mxu0 0
    %2855 = vmatprep.subr.bf16.mxu0 0
    %2856 = vmatpush2.bf16.msra.mxu0 0
    %2857 = vmatprep.subr.bf16.mxu0 0
    %2858 = vmatpush2.bf16.msra.mxu0 0
    %2859 = vmatprep.subr.bf16.mxu0 0
    %2860 = vmatpush2.bf16.msra.mxu0 0
    %2861 = vmatprep.subr.bf16.mxu0 0
    %2862 = vmatpush2.bf16.msra.mxu0 0
    %2863 = vmatprep.subr.bf16.mxu0 0
    %2864 = vmatpush2.bf16.msra.mxu0 0
    %2865 = vmatprep.subr.bf16.mxu0 0
    %2866 = vmatpush2.bf16.msra.mxu0 0
    %2867 = vmatprep.mubr.bf16.mxu0 0
    %2868 = vmatmul.mubr.bf16.gmra.mxu0 %v2833
    %v2869 = vpop.f32.mrf.mxu0
    %v2870 = vadd.f32 0.0, %v2869
    %v2871 = vpop.f32.mrf.mxu0
    %v2872 = vpop.f32.mrf.mxu0
    %v2873 = vadd.f32 0.0, %v2872
    %v2874 = vpop.f32.mrf.mxu0
    %2875 = vdwg.mxu0
    %v2876 = vadd.f32 %v2807, %v2870
    %v2877 = vadd.f32 %v2808, %v2873
    %v2878 = vld [vmem:[#allocation3] sm:$0xff]
    %v2879 = vld [vmem:[#allocation3 + $0x8] sm:$0xff]
    %v2880 = vadd.f32 %v2876, %v2878
    %v2881 = vadd.f32 %v2877, %v2879
    %v2882 = vld [vmem:[%s5] sm:$0xf]
    %v2883 = vld [vmem:[%s5 + $0x4] sm:$0xf]
    %v2884 = vld [vmem:[%s5 + $0x8] sm:$0xf]
    %v2885 = vld [vmem:[%s5 + $0xc] sm:$0xf]
    %v2886 = vpack.c.bf16 %v2881, %v2880
    %v2887 = vld [vmem:[%s6] sm:$0x1]
    %v2889 = vlaneseq
    %v2890 = vshrl.u32 %v2889, 7
    %v2891 = vsub.s32 0, %v2890
    %v2892 = vrot.slane %v2887, %v2891
    %v2898 = vunpack.c.l.b16 %v2882
    %v2899 = vunpack.c.l.b16 %v2883
    %v2900 = vunpack.c.l.b16 %v2884
    %v2901 = vunpack.c.l.b16 %v2885
    %v2902 = vpack.c.b16 %v2899, %v2898
    %v2903 = vpack.c.b16 %v2901, %v2900
    %v2907 = vsel %vm599, %v2886, 0
    %2909 = vmatprep.subr.bf16.mxu0 0
    %2910 = vmatpush1.bf16.msra.mxu0 0
    %2911 = vmatprep.subr.bf16.mxu0 0
    %2912 = vmatpush1.bf16.msra.mxu0 0
    %2913 = vmatprep.subr.bf16.mxu0 0
    %2914 = vmatpush1.bf16.msra.mxu0 0
    %2915 = vmatprep.subr.bf16.mxu0 0
    %2916 = vmatpush1.bf16.msra.mxu0 0
    %2917 = vmatprep.subr.bf16.mxu0 0
    %2918 = vmatpush1.bf16.msra.mxu0 0
    %2919 = vmatprep.subr.bf16.mxu0 0
    %2920 = vmatpush1.bf16.msra.mxu0 0
    %2921 = vmatprep.subr.bf16.mxu0 0
    %2922 = vmatpush1.bf16.msra.mxu0 %v2903
    %2923 = vmatprep.subr.bf16.mxu0 0
    %2924 = vmatpush1.bf16.msra.mxu0 %v2902
    %2925 = vmatprep.subr.bf16.mxu0 0
    %2926 = vmatpush2.bf16.msra.mxu0 0
    %2927 = vmatprep.subr.bf16.mxu0 0
    %2928 = vmatpush2.bf16.msra.mxu0 0
    %2929 = vmatprep.subr.bf16.mxu0 0
    %2930 = vmatpush2.bf16.msra.mxu0 0
    %2931 = vmatprep.subr.bf16.mxu0 0
    %2932 = vmatpush2.bf16.msra.mxu0 0
    %2933 = vmatprep.subr.bf16.mxu0 0
    %2934 = vmatpush2.bf16.msra.mxu0 0
    %2935 = vmatprep.subr.bf16.mxu0 0
    %2936 = vmatpush2.bf16.msra.mxu0 0
    %2937 = vmatprep.subr.bf16.mxu0 0
    %2938 = vmatpush2.bf16.msra.mxu0 0
    %2939 = vmatprep.subr.bf16.mxu0 0
    %2940 = vmatpush2.bf16.msra.mxu0 0
    %2941 = vmatprep.mubr.bf16.mxu0 0
    %2942 = vmatmul.mubr.bf16.gmra.mxu0 %v2907
    %v2943 = vpop.f32.mrf.mxu0
    %v2944 = vadd.f32 %v2892, %v2943
    %v2945 = vpop.f32.mrf.mxu0
    %v2946 = vpop.f32.mrf.mxu0
    %v2947 = vadd.f32 %v2892, %v2946
    %v2948 = vpop.f32.mrf.mxu0
    %2949 = vdwg.mxu0
    %2950 = vst [vmem:[#allocation4] sm:$0xff] %v2944
    %2951 = vst [vmem:[#allocation4 + $0x8] sm:$0xff] %v2947
    // Predicated region
    $region30: #{tpu_custom_call.1} parent=1 // pred_check
      _
    $region31: #{tpu_custom_call.1} parent=1 // pred_check_branch
      %2953 = sbr.rel (0) target = $region33
    $region32: #{tpu_custom_call.1} parent=1 // pred_region
      %s2955 = ssub.s32 256, 256
      %2956 = vsyncadd [#allocation5], %s2955
      %s2957 = sshll.u32 [#allocation4], 4
      %s2958 = int_to_ptr.vmem [resolvable:$true] %s2957
      %2963 = dma.vmem_to_hbm [thread:$0]  %s2958, 256, %s7, [#allocation5], 128, 128, 8
    $region33: #{tpu_custom_call.1} parent=1 // pred_fallthru
      _
    // Predicated region
    $region34: #{tpu_custom_call.1} parent=1 // pred_check
      _
    $region35: #{tpu_custom_call.1} parent=1 // pred_check_branch
      %2965 = sbr.rel (0) target = $region37
    $region36: #{tpu_custom_call.1} parent=1 // pred_region
      %2966 = dma.done [#allocation5], 256
    $region37: #{tpu_custom_call.1} parent=1 // pred_fallthru
      _
    %2967 = vsyncpa [#allocation5], 1

</llo_original>
